<compile_context>
chip_gen: v7x
topology: tpu7x:2x2x1
jax: 0.10.0
libtpu: 0.0.40
codegen_flags: <defaults>
</compile_context>

<pallas_src>
import jax
import jax.numpy as jnp
import numpy as np
from jax.experimental import pallas as pl
from jax.experimental.pallas import tpu as pltpu

MIN_VALUE = 0.5
MAX_VALUE = 10.9

# Static dims implied by the PyTorch module.
CI = 3       # ConvTranspose2d in_channels
CO = 4       # ConvTranspose2d out_channels
WO = 2       # cropped width == Linear in_features
K = 28       # Linear out_features

TILE_M = 512  # lane-axis tile (multiple of 128); double-buffered VMEM ~0.5 MiB total


def model_kernel(x_ref, w1_ref, b1_ref, w2_ref, b2_ref, out_ref):
    # x_ref  : VMEM (WO*CI, TILE_M)   row j = w*CI + ci, lane m = n*Ho + h
    # w1_ref : VMEM (WO*CO, WO*CI)    block-diag over w:  W1[w*CO+c, w*CI+ci] = wct[ci, c]
    # b1_ref : VMEM (WO*CO, 1)        b1[w*CO+c] = bct[c]
    # w2_ref : VMEM (CO*K, WO*CO)     block-diag over c:  W2[c*K+k, w*CO+c] = wl[k, w]
    # b2_ref : VMEM (CO*K, 1)         b2[c*K+k] = bl[k]
    # out_ref: VMEM (CO*K, TILE_M)    row r = c*K + k

    # Stage 1: 1x1 conv-transpose channel mix on the MXU, then clamp + sigmoid on the
    # full (8, TILE_M) tile (full sublane occupancy on VALU/EUP).
    z = jnp.dot(w1_ref[...], x_ref[...],
                preferred_element_type=jnp.float32,
                precision=jax.lax.Precision.HIGHEST) + b1_ref[...]
    z = jnp.minimum(jnp.maximum(z, MIN_VALUE), MAX_VALUE)
    e = jnp.exp(-z)                                   # EUP
    v = pl.reciprocal(1.0 + e, approx=True)          # EUP approx vrcp -> sigmoid

    # Stage 2: Linear(WO -> K) for all CO channels as one block-diag MXU matmul;
    # dense (8,128)-tiled stores of the whole (CO*K, TILE_M) output tile.
    out_ref[...] = jnp.dot(w2_ref[...], v,
                           preferred_element_type=jnp.float32,
                           precision=jax.lax.Precision.HIGHEST) + b2_ref[...]


def model_forward(x, wct, bct, wl, bl):
    # x  : (N, CI, H, W) float32 NCHW
    # wct: (CI, CO)  ConvTranspose2d weight (CI, CO, 1, 1) squeezed
    # bct: (CO,)
    # wl : (K, WO)   Linear weight in PyTorch (out, in) layout
    # bl : (K,)
    N, Ci, H, W = x.shape
    Ho, Wo = H - 2, W - 2                       # k=1, s=1, p=1 -> crop 1px border
    assert Ci == CI and Wo == WO and wct.shape == (CI, CO) and wl.shape == (K, WO)

    M = N * Ho                                  # lane axis; no wrapper-side padding

    # Crop + lay out as (WO*CI, M): (w, ci) on sublanes, m = n*Ho + h on lanes.
    xc = x[:, :, 1:H - 1, 1:W - 1]                              # (N, CI, Ho, WO)
    xT = jnp.transpose(xc, (3, 1, 0, 2)).reshape(WO * CI, M)    # (6, M)

    # Block-diagonal MXU weights / bias columns (tiny, built once per call).
    w1 = jnp.kron(jnp.eye(WO, dtype=jnp.float32), wct.T)        # (8, 6)
    b1 = jnp.tile(bct, WO).reshape(WO * CO, 1)                  # (8, 1)
    w2 = jnp.einsum('kw,cd->ckwd', wl,
                    jnp.eye(CO, dtype=jnp.float32)).reshape(CO * K, WO * CO)   # (112, 8)
    b2 = jnp.tile(bl, CO).reshape(CO * K, 1)                    # (112, 1)

    out = pl.pallas_call(
        model_kernel,
        out_shape=jax.ShapeDtypeStruct((CO * K, M), jnp.float32),
        grid=(pl.cdiv(M, TILE_M),),
        in_specs=[
            pl.BlockSpec((WO * CI, TILE_M), lambda i: (0, i)),   # x tile (lane-tiled)
            pl.BlockSpec((WO * CO, WO * CI), lambda i: (0, 0)),  # W1 (resident)
            pl.BlockSpec((WO * CO, 1), lambda i: (0, 0)),        # b1
            pl.BlockSpec((CO * K, WO * CO), lambda i: (0, 0)),   # W2
            pl.BlockSpec((CO * K, 1), lambda i: (0, 0)),         # b2
        ],
        out_specs=pl.BlockSpec((CO * K, TILE_M), lambda i: (0, i)),
        compiler_params=pltpu.CompilerParams(
            dimension_semantics=("parallel",),     # shards lane tiles across v7x's 2 TCs
            vmem_limit_bytes=32 * 1024 * 1024,     # explicit, with large headroom
        ),
    )(xT, w1, b1, w2, b2)

    # Rearrange to the exact PyTorch output layout.  At scale this transpose (not the
    # kernel) dominates HBM traffic; skip it if the consumer accepts (CO*K, N*Ho).
    out = out.reshape(CO, K, N, Ho)
    out = jnp.transpose(out, (2, 0, 3, 1))      # (N, CO, Ho, K)
    return out.reshape(N, CO, Ho, K, 1, 1)      # matches v5.view(v5.size() + (1, 1))


def reference_forward(x, wct, bct, wl, bl):
    # Pure-JAX reference of the PyTorch forward.
    xc = x[:, :, 1:-1, 1:-1]
    v1 = jnp.einsum('nchw,cd->ndhw', xc, wct,
                    precision=jax.lax.Precision.HIGHEST) + bct[None, :, None, None]
    v3 = jnp.minimum(jnp.maximum(v1, MIN_VALUE), MAX_VALUE)
    v4 = jax.nn.sigmoid(v3)
    v5 = jnp.einsum('ndhw,kw->ndhk', v4, wl,
                    precision=jax.lax.Precision.HIGHEST) + bl
    return v5[..., None, None]


if __name__ == "__main__":
    key = jax.random.PRNGKey(0)
    k1, k2, k3, k4, k5 = jax.random.split(key, 5)

    # Parameters (deterministic, in-script), matching the PyTorch module layouts:
    #   ConvTranspose2d(3, 4, 1): weight (3, 4, 1, 1) -> kept as (3, 4); bias (4,)
    #   Linear(2, 28):            weight (28, 2); bias (28,)
    wct = jax.random.uniform(k1, (CI, CO), jnp.float32, -0.5, 0.5)
    bct = jax.random.uniform(k2, (CO,), jnp.float32, -0.5, 0.5)
    wl = jax.random.uniform(k3, (K, WO), jnp.float32, -0.5, 0.5)
    bl = jax.random.uniform(k4, (K,), jnp.float32, -0.5, 0.5)

    # Input: W must be 4 so the cropped width equals Linear's in_features (=2).
    x = jax.random.normal(k5, (2, CI, 16, 4), jnp.float32)

    fwd = jax.jit(model_forward)
    out = jax.block_until_ready(fwd(x, wct, bct, wl, bl))

    ref = reference_forward(x, wct, bct, wl, bl)
    # Tolerance covers the EUP approx-reciprocal sigmoid; real layout bugs show as O(1).
    np.testing.assert_allclose(np.asarray(out), np.asarray(ref), rtol=5e-3, atol=5e-3)
    assert out.shape == (2, CO, 14, K, 1, 1)

    print("KERNEL_OK")
</pallas_src>

<mosaic_0001>
module attributes {stable_mosaic.version = 11 : i64} {
  func.func @model_kernel(%arg0: i32, %arg1: memref<6x512xf32, #tpu.memory_space<vmem>>, %arg2: memref<8x6xf32, #tpu.memory_space<vmem>>, %arg3: memref<8x1xf32, #tpu.memory_space<vmem>>, %arg4: memref<112x8xf32, #tpu.memory_space<vmem>>, %arg5: memref<112x1xf32, #tpu.memory_space<vmem>>, %arg6: memref<112x512xf32, #tpu.memory_space<vmem>>) attributes {dimension_semantics = [#tpu.dimension_semantics<parallel>], iteration_bounds = array<i64: 1>, scalar_prefetch = 0 : i64, scratch_operands = 0 : i64, tpu.core_type = #tpu.core_type<tc>, window_params = [{transform_indices = @transform_0, window_bounds = array<i64: 6, 512>}, {pipeline_mode = #tpu.pipeline_mode<synchronous>, transform_indices = @transform_1, window_bounds = array<i64: 8, 6>}, {pipeline_mode = #tpu.pipeline_mode<synchronous>, transform_indices = @transform_2, window_bounds = array<i64: 8, 1>}, {pipeline_mode = #tpu.pipeline_mode<synchronous>, transform_indices = @transform_3, window_bounds = array<i64: 112, 8>}, {pipeline_mode = #tpu.pipeline_mode<synchronous>, transform_indices = @transform_4, window_bounds = array<i64: 112, 1>}, {transform_indices = @transform_5, window_bounds = array<i64: 112, 512>}]} {
    %c0 = arith.constant 0 : index
    %c0_0 = arith.constant 0 : index
    %0 = vector.load %arg2[%c0, %c0_0] : memref<8x6xf32, #tpu.memory_space<vmem>>, vector<8x6xf32>
    %c0_1 = arith.constant 0 : index
    %c0_2 = arith.constant 0 : index
    %1 = vector.load %arg1[%c0_1, %c0_2] : memref<6x512xf32, #tpu.memory_space<vmem>>, vector<6x512xf32>
    %cst = arith.constant dense<0.000000e+00> : vector<8x512xf32>
    %2 = tpu.matmul %0, %1, %cst {dimension_numbers = #tpu.dot_dimension_numbers<[1], [0], [0], [1], [0, 0, 1, 1], [], []>, precision = #tpu.contract_precision<fp32>} : vector<8x6xf32>, vector<6x512xf32>, vector<8x512xf32> -> vector<8x512xf32>
    %c0_3 = arith.constant 0 : index
    %c0_4 = arith.constant 0 : index
    %3 = vector.load %arg3[%c0_3, %c0_4] : memref<8x1xf32, #tpu.memory_space<vmem>>, vector<8x1xf32>
    %4 = vector.broadcast %3 : vector<8x1xf32> to vector<8x512xf32>
    %5 = arith.addf %2, %4 : vector<8x512xf32>
    %cst_5 = arith.constant 5.000000e-01 : f32
    %6 = vector.broadcast %cst_5 : f32 to vector<8x512xf32>
    %7 = arith.maximumf %5, %6 : vector<8x512xf32>
    %cst_6 = arith.constant 1.090000e+01 : f32
    %8 = vector.broadcast %cst_6 : f32 to vector<8x512xf32>
    %9 = arith.minimumf %7, %8 : vector<8x512xf32>
    %cst_7 = arith.constant 0.000000e+00 : f32
    %10 = vector.broadcast %cst_7 : f32 to vector<8x512xf32>
    %11 = arith.subf %10, %9 : vector<8x512xf32>
    %12 = math.exp %11 : vector<8x512xf32>
    %cst_8 = arith.constant 1.000000e+00 : f32
    %13 = vector.broadcast %cst_8 : f32 to vector<8x512xf32>
    %14 = arith.addf %13, %12 : vector<8x512xf32>
    %15 = tpu.reciprocal %14 {approx = true} : vector<8x512xf32> -> vector<8x512xf32>
    %c0_9 = arith.constant 0 : index
    %c0_10 = arith.constant 0 : index
    %16 = vector.load %arg4[%c0_9, %c0_10] : memref<112x8xf32, #tpu.memory_space<vmem>>, vector<112x8xf32>
    %cst_11 = arith.constant dense<0.000000e+00> : vector<112x512xf32>
    %17 = tpu.matmul %16, %15, %cst_11 {dimension_numbers = #tpu.dot_dimension_numbers<[1], [0], [0], [1], [0, 0, 1, 1], [], []>, precision = #tpu.contract_precision<fp32>} : vector<112x8xf32>, vector<8x512xf32>, vector<112x512xf32> -> vector<112x512xf32>
    %c0_12 = arith.constant 0 : index
    %c0_13 = arith.constant 0 : index
    %18 = vector.load %arg5[%c0_12, %c0_13] : memref<112x1xf32, #tpu.memory_space<vmem>>, vector<112x1xf32>
    %19 = vector.broadcast %18 : vector<112x1xf32> to vector<112x512xf32>
    %20 = arith.addf %17, %19 : vector<112x512xf32>
    %c0_14 = arith.constant 0 : index
    %c0_15 = arith.constant 0 : index
    %21 = vector.load %arg6[%c0_14, %c0_15] : memref<112x512xf32, #tpu.memory_space<vmem>>, vector<112x512xf32>
    tpu.vector_store %arg6[%c0_14, %c0_15], %20 {strides = array<i32>} : memref<112x512xf32, #tpu.memory_space<vmem>>, vector<112x512xf32>,
    return
  }
  func.func @transform_0(%arg0: i32) -> (i32, i32) {
    %c0_i32 = arith.constant 0 : i32
    %c0_i32_0 = arith.constant 0 : i32
    return %c0_i32, %arg0 : i32, i32
  }
  func.func @transform_1(%arg0: i32) -> (i32, i32) {
    %c0_i32 = arith.constant 0 : i32
    %c0_i32_0 = arith.constant 0 : i32
    %c0_i32_1 = arith.constant 0 : i32
    return %c0_i32, %c0_i32_0 : i32, i32
  }
  func.func @transform_2(%arg0: i32) -> (i32, i32) {
    %c0_i32 = arith.constant 0 : i32
    %c0_i32_0 = arith.constant 0 : i32
    %c0_i32_1 = arith.constant 0 : i32
    return %c0_i32, %c0_i32_0 : i32, i32
  }
  func.func @transform_3(%arg0: i32) -> (i32, i32) {
    %c0_i32 = arith.constant 0 : i32
    %c0_i32_0 = arith.constant 0 : i32
    %c0_i32_1 = arith.constant 0 : i32
    return %c0_i32, %c0_i32_0 : i32, i32
  }
  func.func @transform_4(%arg0: i32) -> (i32, i32) {
    %c0_i32 = arith.constant 0 : i32
    %c0_i32_0 = arith.constant 0 : i32
    %c0_i32_1 = arith.constant 0 : i32
    return %c0_i32, %c0_i32_0 : i32, i32
  }
  func.func @transform_5(%arg0: i32) -> (i32, i32) {
    %c0_i32 = arith.constant 0 : i32
    %c0_i32_0 = arith.constant 0 : i32
    return %c0_i32, %arg0 : i32, i32
  }
}

</mosaic_0001>

<llo_original>
// kernel: tile.18
$region0: #{tile.18}
  #allocation0 [shape = 's32[1]{0}', space=sflag, size = 0x4, scoped, tag = 'scoped memory for tile.18']
  %s0 = inlined_call_operand.vmem [shape: f32[28], index: 0, kind: input, shape index: {}]
  %s1 = inlined_call_operand.vmem [shape: f32[4,28], index: 1, kind: output, shape index: {}]
  // Predicated region
  $region2: #{tile.18} parent=0 // pred_check
    _
  $region3: #{tile.18} parent=0 // pred_check_branch
    %3 = sbr.rel (0) target = $region5
  $region4: #{tile.18} parent=0 // pred_region
    _
  $region5: #{tile.18} parent=0 // pred_fallthru
    _
  %v4 = vld [vmem:[%s0] ss:$0 sm:$0xff]
  %5 = vst [vmem:[%s1] sm:$0xf] %v4

// kernel: tile.13
$region0: #{tile.13}
  #allocation0 [shape = 's32[1]{0}', space=sflag, size = 0x4, scoped, tag = 'scoped memory for tile.13']
  %s0 = inlined_call_operand.vmem [shape: f32[4], index: 0, kind: input, shape index: {}]
  %s1 = inlined_call_operand.vmem [shape: f32[2,4], index: 1, kind: output, shape index: {}]
  // Predicated region
  $region2: #{tile.13} parent=0 // pred_check
    _
  $region3: #{tile.13} parent=0 // pred_check_branch
    %3 = sbr.rel (0) target = $region5
  $region4: #{tile.13} parent=0 // pred_region
    _
  $region5: #{tile.13} parent=0 // pred_fallthru
    _
  %v4 = vld [vmem:[%s0] ss:$0 sm:$0xff]
  %5 = vst [vmem:[%s1] sm:$0x3] %v4

// kernel: tile.0
$region0: #{tile.0}
  %s0 = inlined_call_operand.vmem [shape: f32[2,4], index: 0, kind: input, shape index: {}]
  %s1 = inlined_call_operand.vmem [shape: f32[8,1], index: 1, kind: output, shape index: {}]
  $region1: #{tile.0} parent=0
    #allocation0 [shape = 'u8[4096]{0}', space=vmem, size = 0x1000, scoped, tag = 'scoped mem for input reshape']
    %s3 = sshllo.u32 0, 2
    %v4 = vld [vmem:[%s0] sm:%s3]
    %5 = vst [vmem:[#allocation0] sm:%s3] %v4
    %v6 = vld [vmem:[#allocation0] sm:$0x3]
    %vm7 = vcmask 7168
    %8 = vst.msk [vmem:[%s1] ss:$4 sm:$0x3] %vm7, %v6
    %v9 = vld [vmem:[#allocation0] sm:$0x3]
    %10 = vrot.lane.b32.xlu0 %v9, 127
    %v11 = vpop.permute.xlu0 %10
    %vm12 = vcmask 7168
    %s13 = scalar_lea.vmem %s1, 1
    %14 = vst.msk [vmem:[%s13] ss:$4 sm:$0x3] %vm12, %v11
    %v15 = vld [vmem:[#allocation0] sm:$0x3]
    %16 = vrot.lane.b32.xlu0 %v15, 126
    %v17 = vpop.permute.xlu0 %16
    %vm18 = vcmask 7168
    %s19 = scalar_lea.vmem %s1, 2
    %20 = vst.msk [vmem:[%s19] ss:$4 sm:$0x3] %vm18, %v17
    %v21 = vld [vmem:[#allocation0] sm:$0x3]
    %22 = vrot.lane.b32.xlu0 %v21, 125
    %v23 = vpop.permute.xlu0 %22
    %vm24 = vcmask 7168
    %s25 = scalar_lea.vmem %s1, 3
    %26 = vst.msk [vmem:[%s25] ss:$4 sm:$0x3] %vm24, %v23

// kernel: tile.1
$region0: #{tile.1}
  %s0 = inlined_call_operand.vmem [shape: f32[4,28], index: 0, kind: input, shape index: {}]
  %s1 = inlined_call_operand.vmem [shape: f32[112,1], index: 1, kind: output, shape index: {}]
  $region1: #{tile.1} parent=0
    #allocation0 [shape = 'u8[4096]{0}', space=vmem, size = 0x1000, scoped, tag = 'scoped mem for input reshape']
    %s3 = sshllo.u32 0, 4
    %v4 = vld [vmem:[%s0] sm:%s3]
    %5 = vst [vmem:[#allocation0] sm:%s3] %v4
    %v6 = vld [vmem:[#allocation0] sm:$0xf]
    %vm7 = vcmask 7168
    %8 = vst.msk [vmem:[%s1] ss:$28 sm:$0xf] %vm7, %v6
    %v9 = vld.sshfl [vmem:[#allocation0] sm:$0xff pattern:$0x11111230]
    %10 = vrot.lane.b32.xlu0 %v9, 127
    %v11 = vpop.permute.xlu0 %10
    %vm12 = vcmask 7168
    %s13 = scalar_lea.vmem %s1, 1
    %14 = vst.msk [vmem:[%s13] ss:$84 sm:$0x3] %vm12, %v11
    %s15 = scalar_lea.vmem %s1, 113
    %16 = vst.msk [vmem:[%s15] ss:$-28 sm:$0xc] %vm12, %v11
    %v17 = vld.sshfl [vmem:[#allocation0] sm:$0xff pattern:$0x11111230]
    %18 = vrot.lane.b32.xlu0 %v17, 126
    %v19 = vpop.permute.xlu0 %18
    %vm20 = vcmask 7168
    %s21 = scalar_lea.vmem %s1, 2
    %22 = vst.msk [vmem:[%s21] ss:$84 sm:$0x3] %vm20, %v19
    %s23 = scalar_lea.vmem %s1, 114
    %24 = vst.msk [vmem:[%s23] ss:$-28 sm:$0xc] %vm20, %v19
    %v25 = vld.sshfl [vmem:[#allocation0] sm:$0xff pattern:$0x11111230]
    %26 = vrot.lane.b32.xlu0 %v25, 125
    %v27 = vpop.permute.xlu0 %26
    %vm28 = vcmask 7168
    %s29 = scalar_lea.vmem %s1, 3
    %30 = vst.msk [vmem:[%s29] ss:$84 sm:$0x3] %vm28, %v27
    %s31 = scalar_lea.vmem %s1, 115
    %32 = vst.msk [vmem:[%s31] ss:$-28 sm:$0xc] %vm28, %v27
    %v33 = vld.sshfl [vmem:[#allocation0] sm:$0xff pattern:$0x22222301]
    %34 = vrot.lane.b32.xlu0 %v33, 124
    %v35 = vpop.permute.xlu0 %34
    %vm36 = vcmask 7168
    %s37 = scalar_lea.vmem %s1, 32
    %38 = vst.msk [vmem:[%s37] ss:$-28 sm:$0x3] %vm36, %v35
    %s39 = scalar_lea.vmem %s1, 144
    %40 = vst.msk [vmem:[%s39] ss:$-28 sm:$0xc] %vm36, %v35
    %v41 = vld.sshfl [vmem:[#allocation0] sm:$0xff pattern:$0x22222301]
    %42 = vrot.lane.b32.xlu0 %v41, 123
    %v43 = vpop.permute.xlu0 %42
    %vm44 = vcmask 7168
    %s45 = scalar_lea.vmem %s1, 33
    %46 = vst.msk [vmem:[%s45] ss:$-28 sm:$0x3] %vm44, %v43
    %s47 = scalar_lea.vmem %s1, 145
    %48 = vst.msk [vmem:[%s47] ss:$-28 sm:$0xc] %vm44, %v43
    %v49 = vld.sshfl [vmem:[#allocation0] sm:$0xff pattern:$0x22222301]
    %50 = vrot.lane.b32.xlu0 %v49, 122
    %v51 = vpop.permute.xlu0 %50
    %vm52 = vcmask 7168
    %s53 = scalar_lea.vmem %s1, 34
    %54 = vst.msk [vmem:[%s53] ss:$-28 sm:$0x3] %vm52, %v51
    %s55 = scalar_lea.vmem %s1, 146
    %56 = vst.msk [vmem:[%s55] ss:$-28 sm:$0xc] %vm52, %v51
    %v57 = vld.sshfl [vmem:[#allocation0] sm:$0xff pattern:$0x22222301]
    %58 = vrot.lane.b32.xlu0 %v57, 121
    %v59 = vpop.permute.xlu0 %58
    %vm60 = vcmask 7168
    %s61 = scalar_lea.vmem %s1, 35
    %62 = vst.msk [vmem:[%s61] ss:$-28 sm:$0x3] %vm60, %v59
    %s63 = scalar_lea.vmem %s1, 147
    %64 = vst.msk [vmem:[%s63] ss:$-28 sm:$0xc] %vm60, %v59
    %v65 = vld.sshfl [vmem:[#allocation0] sm:$0xff pattern:$0x33333012]
    %66 = vrot.lane.b32.xlu0 %v65, 120
    %v67 = vpop.permute.xlu0 %66
    %vm68 = vcmask 7168
    %s69 = scalar_lea.vmem %s1, 64
    %70 = vst.msk [vmem:[%s69] ss:$-28 sm:$0x7] %vm68, %v67
    %s71 = scalar_lea.vmem %s1, 89
    %72 = vst.msk [vmem:[%s71] sm:$0x8] %vm68, %v67
    %v73 = vld.sshfl [vmem:[#allocation0] sm:$0xff pattern:$0x33333012]
    %74 = vrot.lane.b32.xlu0 %v73, 119
    %v75 = vpop.permute.xlu0 %74
    %vm76 = vcmask 7168
    %s77 = scalar_lea.vmem %s1, 65
    %78 = vst.msk [vmem:[%s77] ss:$-28 sm:$0x7] %vm76, %v75
    %s79 = scalar_lea.vmem %s1, 90
    %80 = vst.msk [vmem:[%s79] sm:$0x8] %vm76, %v75
    %v81 = vld.sshfl [vmem:[#allocation0] sm:$0xff pattern:$0x33333012]
    %82 = vrot.lane.b32.xlu0 %v81, 118
    %v83 = vpop.permute.xlu0 %82
    %vm84 = vcmask 7168
    %s85 = scalar_lea.vmem %s1, 66
    %86 = vst.msk [vmem:[%s85] ss:$-28 sm:$0x7] %vm84, %v83
    %s87 = scalar_lea.vmem %s1, 91
    %88 = vst.msk [vmem:[%s87] sm:$0x8] %vm84, %v83
    %v89 = vld.sshfl [vmem:[#allocation0] sm:$0xff pattern:$0x33333012]
    %90 = vrot.lane.b32.xlu0 %v89, 117
    %v91 = vpop.permute.xlu0 %90
    %vm92 = vcmask 7168
    %s93 = scalar_lea.vmem %s1, 67
    %94 = vst.msk [vmem:[%s93] ss:$-28 sm:$0x7] %vm92, %v91
    %s95 = scalar_lea.vmem %s1, 92
    %96 = vst.msk [vmem:[%s95] sm:$0x8] %vm92, %v91
    %s97 = scalar_lea.vmem [#allocation0], 3
    %v98 = vld [vmem:[%s97] ss:$-1 sm:$0xf]
    %99 = vrot.lane.b32.xlu0 %v98, 116
    %v100 = vpop.permute.xlu0 %99
    %vm101 = vcmask 7168
    %s102 = scalar_lea.vmem %s1, 96
    %103 = vst.msk [vmem:[%s102] ss:$-28 sm:$0xf] %vm101, %v100
    %s104 = scalar_lea.vmem [#allocation0], 3
    %v105 = vld [vmem:[%s104] ss:$-1 sm:$0xf]
    %106 = vrot.lane.b32.xlu0 %v105, 115
    %v107 = vpop.permute.xlu0 %106
    %vm108 = vcmask 7168
    %s109 = scalar_lea.vmem %s1, 97
    %110 = vst.msk [vmem:[%s109] ss:$-28 sm:$0xf] %vm108, %v107
    %s111 = scalar_lea.vmem [#allocation0], 3
    %v112 = vld [vmem:[%s111] ss:$-1 sm:$0xf]
    %113 = vrot.lane.b32.xlu0 %v112, 114
    %v114 = vpop.permute.xlu0 %113
    %vm115 = vcmask 7168
    %s116 = scalar_lea.vmem %s1, 98
    %117 = vst.msk [vmem:[%s116] ss:$-28 sm:$0xf] %vm115, %v114
    %s118 = scalar_lea.vmem [#allocation0], 3
    %v119 = vld [vmem:[%s118] ss:$-1 sm:$0xf]
    %120 = vrot.lane.b32.xlu0 %v119, 113
    %v121 = vpop.permute.xlu0 %120
    %vm122 = vcmask 7168
    %s123 = scalar_lea.vmem %s1, 99
    %124 = vst.msk [vmem:[%s123] ss:$-28 sm:$0xf] %vm122, %v121
    %s125 = scalar_lea.vmem [#allocation0], 3
    %v126 = vld [vmem:[%s125] ss:$-1 sm:$0xf]
    %127 = vrot.lane.b32.xlu0 %v126, 112
    %v128 = vpop.permute.xlu0 %127
    %vm129 = vcmask 7168
    %s130 = scalar_lea.vmem %s1, 100
    %131 = vst.msk [vmem:[%s130] ss:$-28 sm:$0xf] %vm129, %v128
    %s132 = scalar_lea.vmem [#allocation0], 3
    %v133 = vld [vmem:[%s132] ss:$-1 sm:$0xf]
    %134 = vrot.lane.b32.xlu0 %v133, 111
    %v135 = vpop.permute.xlu0 %134
    %vm136 = vcmask 7168
    %s137 = scalar_lea.vmem %s1, 101
    %138 = vst.msk [vmem:[%s137] ss:$-28 sm:$0xf] %vm136, %v135
    %s139 = scalar_lea.vmem [#allocation0], 3
    %v140 = vld [vmem:[%s139] ss:$-1 sm:$0xf]
    %141 = vrot.lane.b32.xlu0 %v140, 110
    %v142 = vpop.permute.xlu0 %141
    %vm143 = vcmask 7168
    %s144 = scalar_lea.vmem %s1, 102
    %145 = vst.msk [vmem:[%s144] ss:$-28 sm:$0xf] %vm143, %v142
    %s146 = scalar_lea.vmem [#allocation0], 3
    %v147 = vld [vmem:[%s146] ss:$-1 sm:$0xf]
    %148 = vrot.lane.b32.xlu0 %v147, 109
    %v149 = vpop.permute.xlu0 %148
    %vm150 = vcmask 7168
    %s151 = scalar_lea.vmem %s1, 103
    %152 = vst.msk [vmem:[%s151] ss:$-28 sm:$0xf] %vm150, %v149
    %s153 = scalar_lea.vmem [#allocation0], 3
    %v154 = vld [vmem:[%s153] ss:$-1 sm:$0xf]
    %155 = vrot.lane.b32.xlu0 %v154, 108
    %v156 = vpop.permute.xlu0 %155
    %vm157 = vcmask 7168
    %s158 = scalar_lea.vmem %s1, 104
    %159 = vst.msk [vmem:[%s158] ss:$-28 sm:$0xf] %vm157, %v156
    %s160 = scalar_lea.vmem [#allocation0], 3
    %v161 = vld [vmem:[%s160] ss:$-1 sm:$0xf]
    %162 = vrot.lane.b32.xlu0 %v161, 107
    %v163 = vpop.permute.xlu0 %162
    %vm164 = vcmask 7168
    %s165 = scalar_lea.vmem %s1, 105
    %166 = vst.msk [vmem:[%s165] ss:$-28 sm:$0xf] %vm164, %v163
    %s167 = scalar_lea.vmem [#allocation0], 3
    %v168 = vld [vmem:[%s167] ss:$-1 sm:$0xf]
    %169 = vrot.lane.b32.xlu0 %v168, 106
    %v170 = vpop.permute.xlu0 %169
    %vm171 = vcmask 7168
    %s172 = scalar_lea.vmem %s1, 106
    %173 = vst.msk [vmem:[%s172] ss:$-28 sm:$0xf] %vm171, %v170
    %s174 = scalar_lea.vmem [#allocation0], 3
    %v175 = vld [vmem:[%s174] ss:$-1 sm:$0xf]
    %176 = vrot.lane.b32.xlu0 %v175, 105
    %v177 = vpop.permute.xlu0 %176
    %vm178 = vcmask 7168
    %s179 = scalar_lea.vmem %s1, 107
    %180 = vst.msk [vmem:[%s179] ss:$-28 sm:$0xf] %vm178, %v177
    %s181 = scalar_lea.vmem [#allocation0], 3
    %v182 = vld [vmem:[%s181] ss:$-1 sm:$0xf]
    %183 = vrot.lane.b32.xlu0 %v182, 104
    %v184 = vpop.permute.xlu0 %183
    %vm185 = vcmask 7168
    %s186 = scalar_lea.vmem %s1, 108
    %187 = vst.msk [vmem:[%s186] ss:$-28 sm:$0xf] %vm185, %v184
    %s188 = scalar_lea.vmem [#allocation0], 3
    %v189 = vld [vmem:[%s188] ss:$-1 sm:$0xf]
    %190 = vrot.lane.b32.xlu0 %v189, 103
    %v191 = vpop.permute.xlu0 %190
    %vm192 = vcmask 7168
    %s193 = scalar_lea.vmem %s1, 109
    %194 = vst.msk [vmem:[%s193] ss:$-28 sm:$0xf] %vm192, %v191
    %s195 = scalar_lea.vmem [#allocation0], 3
    %v196 = vld [vmem:[%s195] ss:$-1 sm:$0xf]
    %197 = vrot.lane.b32.xlu0 %v196, 102
    %v198 = vpop.permute.xlu0 %197
    %vm199 = vcmask 7168
    %s200 = scalar_lea.vmem %s1, 110
    %201 = vst.msk [vmem:[%s200] ss:$-28 sm:$0xf] %vm199, %v198
    %s202 = scalar_lea.vmem [#allocation0], 3
    %v203 = vld [vmem:[%s202] ss:$-1 sm:$0xf]
    %204 = vrot.lane.b32.xlu0 %v203, 101
    %v205 = vpop.permute.xlu0 %204
    %vm206 = vcmask 7168
    %s207 = scalar_lea.vmem %s1, 111
    %208 = vst.msk [vmem:[%s207] ss:$-28 sm:$0xf] %vm206, %v205

// kernel: model_forward.1
$region0: #{model_forward.1}
  #allocation0 [shape = 'u32[]', space=smem, size = 0x4, offset = 0x4, fixed_abs, tag = 'smem constant byte address 0x4 - core index']
  #allocation1 [shape = 'u32[144,128]{1,0:T(1,128)}', space=vmem, size = 0x12000, scoped, tag = 'internal scratch']
  %s0 = inlined_call_operand.vmem [shape: f32[6,28], index: 0, kind: input, shape index: {}]
  %s1 = inlined_call_operand.vmem [shape: f32[8,6], index: 1, kind: input, shape index: {}]
  %s2 = inlined_call_operand.vmem [shape: f32[8,1], index: 2, kind: input, shape index: {}]
  %s3 = inlined_call_operand.vmem [shape: f32[112,8], index: 3, kind: input, shape index: {}]
  %s4 = inlined_call_operand.vmem [shape: f32[112,1], index: 4, kind: input, shape index: {}]
  %s5 = inlined_call_operand.vmem [shape: f32[112,28], index: 5, kind: output, shape index: {}]
  %s6 = sld [smem:[#allocation0]]
  $region64: #{model_forward.1} parent=0
    _
  %s8 = ssub.s32 1, %s6
  %s9 = scalar_select 0, %s8, %s6
  $region1: #{model_forward.1} parent=0
    #allocation2 [shape = 'u8[229376]{0}', space=vmem, size = 0x38000, scoped, tag = 'output window, operand 0, single buffered']
    // Predicated region
    $region2: #{model_forward.1} parent=1 // pred_check
      _
    $region3: #{model_forward.1} parent=1 // pred_check_branch
      %11 = sbr.rel (0) target = $region5
    $region4: #{model_forward.1} parent=1 // pred_region
      _
    $region5: #{model_forward.1} parent=1 // pred_fallthru
      _
    // Predicated region
    $region6: #{model_forward.1} parent=1 // pred_check
      _
    $region7: #{model_forward.1} parent=1 // pred_check_branch
      %13 = sbr.rel (0) target = $region9
    $region8: #{model_forward.1} parent=1 // pred_region
      _
    $region9: #{model_forward.1} parent=1 // pred_fallthru
      _
    // Predicated region
    $region10: #{model_forward.1} parent=1 // pred_check
      _
    $region11: #{model_forward.1} parent=1 // pred_check_branch
      %15 = sbr.rel (0) target = $region13
    $region12: #{model_forward.1} parent=1 // pred_region
      _
    $region13: #{model_forward.1} parent=1 // pred_fallthru
      _
    // Predicated region
    $region14: #{model_forward.1} parent=1 // pred_check
      _
    $region15: #{model_forward.1} parent=1 // pred_check_branch
      %17 = sbr.rel (0) target = $region17
    $region16: #{model_forward.1} parent=1 // pred_region
      _
    $region17: #{model_forward.1} parent=1 // pred_fallthru
      _
    // Predicated region
    $region18: #{model_forward.1} parent=1 // pred_check
      _
    $region19: #{model_forward.1} parent=1 // pred_check_branch
      %19 = sbr.rel (0) target = $region21
    $region20: #{model_forward.1} parent=1 // pred_region
      _
    $region21: #{model_forward.1} parent=1 // pred_fallthru
      _
    %v20 = vld [vmem:[%s1] sm:$0xff]
    %v21 = vld [vmem:[%s0] sm:$0x3f]
    %v22 = vld [vmem:[%s0 + $0x8] sm:$0x3f]
    %v23 = vld [vmem:[%s0 + $0x10] sm:$0x3f]
    %v24 = vld [vmem:[%s0 + $0x18] sm:$0x3f]
    %v25 = vld [vmem:[%s2] sm:$0xff]
    %27 = vset.pattern.permute.xlu0 0
    %28 = vperm.xlu0 %27, %v25
    %v29 = vpop.permute.xlu0 %28
    %vm31 = vcmask 48128
    %v33 = vsel %vm31, %v20, 0
    %vm35 = vcmask 1045504
    %v37 = vsel %vm35, %v21, 0
    %v40 = vsel %vm35, %v22, 0
    %v43 = vsel %vm35, %v23, 0
    %v46 = vsel %vm35, %v24, 0
    %v48 = vand.u32 %v40, 4294901760
    %49 = vmatprep.subr.mxu0 %v48
    %v50 = vand.u32 %v37, 4294901760
    %51 = vmatpush1.msra.mxu0 %v50
    %52 = vmatprep.subr.mxu0 0.0
    %53 = vmatpush1.msra.mxu0 0.0
    %54 = vmatprep.subr.mxu0 0.0
    %55 = vmatpush1.msra.mxu0 0.0
    %56 = vmatprep.subr.mxu0 0.0
    %57 = vmatpush1.msra.mxu0 0.0
    %58 = vmatprep.subr.mxu0 0.0
    %59 = vmatpush1.msra.mxu0 0.0
    %60 = vmatprep.subr.mxu0 0.0
    %61 = vmatpush1.msra.mxu0 0.0
    %62 = vmatprep.subr.mxu0 0.0
    %63 = vmatpush1.msra.mxu0 0.0
    %64 = vmatprep.subr.mxu0 0.0
    %65 = vmatpush1.msra.mxu0 0.0
    %66 = vmatprep.subr.mxu0 0.0
    %67 = vmatpush1.msra.mxu0 0.0
    %68 = vmatprep.subr.mxu0 0.0
    %69 = vmatpush1.msra.mxu0 0.0
    %70 = vmatprep.subr.mxu0 0.0
    %71 = vmatpush1.msra.mxu0 0.0
    %72 = vmatprep.subr.mxu0 0.0
    %73 = vmatpush1.msra.mxu0 0.0
    %74 = vmatprep.subr.mxu0 0.0
    %75 = vmatpush1.msra.mxu0 0.0
    %76 = vmatprep.subr.mxu0 0.0
    %77 = vmatpush1.msra.mxu0 0.0
    %78 = vmatprep.subr.mxu0 0.0
    %79 = vmatpush1.msra.mxu0 0.0
    %80 = vmatprep.subr.mxu0 0.0
    %81 = vmatpush1.msra.mxu0 0.0
    %82 = vmatprep.subr.mxu0 0.0
    %83 = vmatpush1.msra.mxu0 0.0
    %84 = vmatprep.subr.mxu0 0.0
    %85 = vmatpush1.msra.mxu0 0.0
    %86 = vmatprep.subr.mxu0 0.0
    %87 = vmatpush1.msra.mxu0 0.0
    %88 = vmatprep.subr.mxu0 0.0
    %89 = vmatpush1.msra.mxu0 0.0
    %90 = vmatprep.subr.mxu0 0.0
    %91 = vmatpush1.msra.mxu0 0.0
    %92 = vmatprep.subr.mxu0 0.0
    %93 = vmatpush1.msra.mxu0 0.0
    %94 = vmatprep.subr.mxu0 0.0
    %95 = vmatpush1.msra.mxu0 0.0
    %96 = vmatprep.subr.mxu0 0.0
    %97 = vmatpush1.msra.mxu0 0.0
    %98 = vmatprep.subr.mxu0 0.0
    %99 = vmatpush1.msra.mxu0 0.0
    %100 = vmatprep.subr.mxu0 0.0
    %101 = vmatpush1.msra.mxu0 0.0
    %102 = vmatprep.subr.mxu0 0.0
    %103 = vmatpush1.msra.mxu0 0.0
    %104 = vmatprep.subr.mxu0 0.0
    %105 = vmatpush1.msra.mxu0 0.0
    %106 = vmatprep.subr.mxu0 0.0
    %107 = vmatpush1.msra.mxu0 0.0
    %108 = vmatprep.subr.mxu0 0.0
    %109 = vmatpush1.msra.mxu0 0.0
    %110 = vmatprep.subr.mxu0 0.0
    %111 = vmatpush1.msra.mxu0 0.0
    %112 = vmatprep.subr.mxu0 0.0
    %113 = vmatpush1.msra.mxu0 0.0
    %114 = vmatprep.mubr.f32.mxu0 0.0
    %v115 = vand.u32 %v33, 4294901760
    %v116 = vsub.f32 %v33, %v115
    %v117 = vand.u32 %v116, 4294901760
    %v118 = vsub.f32 %v116, %v117
    %v119 = vand.u32 %v118, 4294901760
    %120 = vmatmul.mubr.f32.gmra.mrb[0].mxu0 %v119
    %v121 = vpop.f32.mrb[0].mxu0
    %v122 = vadd.f32 %v29, %v121
    %v123 = vpop.f32.mrb[0].mxu0
    %v124 = vadd.f32 %v29, %v123
    %125 = vdwg.mxu0
    %v126 = vand.u32 %v40, 4294901760
    %v127 = vsub.f32 %v40, %v126
    %v128 = vand.u32 %v127, 4294901760
    %v129 = vsub.f32 %v127, %v128
    %v130 = vand.u32 %v129, 4294901760
    %131 = vmatprep.subr.mxu0 %v130
    %v132 = vand.u32 %v37, 4294901760
    %v133 = vsub.f32 %v37, %v132
    %v134 = vand.u32 %v133, 4294901760
    %v135 = vsub.f32 %v133, %v134
    %v136 = vand.u32 %v135, 4294901760
    %137 = vmatpush1.msra.mxu0 %v136
    %138 = vmatprep.subr.mxu0 0.0
    %139 = vmatpush1.msra.mxu0 0.0
    %140 = vmatprep.subr.mxu0 0.0
    %141 = vmatpush1.msra.mxu0 0.0
    %142 = vmatprep.subr.mxu0 0.0
    %143 = vmatpush1.msra.mxu0 0.0
    %144 = vmatprep.subr.mxu0 0.0
    %145 = vmatpush1.msra.mxu0 0.0
    %146 = vmatprep.subr.mxu0 0.0
    %147 = vmatpush1.msra.mxu0 0.0
    %148 = vmatprep.subr.mxu0 0.0
    %149 = vmatpush1.msra.mxu0 0.0
    %150 = vmatprep.subr.mxu0 0.0
    %151 = vmatpush1.msra.mxu0 0.0
    %152 = vmatprep.subr.mxu0 0.0
    %153 = vmatpush1.msra.mxu0 0.0
    %154 = vmatprep.subr.mxu0 0.0
    %155 = vmatpush1.msra.mxu0 0.0
    %156 = vmatprep.subr.mxu0 0.0
    %157 = vmatpush1.msra.mxu0 0.0
    %158 = vmatprep.subr.mxu0 0.0
    %159 = vmatpush1.msra.mxu0 0.0
    %160 = vmatprep.subr.mxu0 0.0
    %161 = vmatpush1.msra.mxu0 0.0
    %162 = vmatprep.subr.mxu0 0.0
    %163 = vmatpush1.msra.mxu0 0.0
    %164 = vmatprep.subr.mxu0 0.0
    %165 = vmatpush1.msra.mxu0 0.0
    %166 = vmatprep.subr.mxu0 0.0
    %167 = vmatpush1.msra.mxu0 0.0
    %168 = vmatprep.subr.mxu0 0.0
    %169 = vmatpush1.msra.mxu0 0.0
    %170 = vmatprep.subr.mxu0 0.0
    %171 = vmatpush1.msra.mxu0 0.0
    %172 = vmatprep.subr.mxu0 0.0
    %173 = vmatpush1.msra.mxu0 0.0
    %174 = vmatprep.subr.mxu0 0.0
    %175 = vmatpush1.msra.mxu0 0.0
    %176 = vmatprep.subr.mxu0 0.0
    %177 = vmatpush1.msra.mxu0 0.0
    %178 = vmatprep.subr.mxu0 0.0
    %179 = vmatpush1.msra.mxu0 0.0
    %180 = vmatprep.subr.mxu0 0.0
    %181 = vmatpush1.msra.mxu0 0.0
    %182 = vmatprep.subr.mxu0 0.0
    %183 = vmatpush1.msra.mxu0 0.0
    %184 = vmatprep.subr.mxu0 0.0
    %185 = vmatpush1.msra.mxu0 0.0
    %186 = vmatprep.subr.mxu0 0.0
    %187 = vmatpush1.msra.mxu0 0.0
    %188 = vmatprep.subr.mxu0 0.0
    %189 = vmatpush1.msra.mxu0 0.0
    %190 = vmatprep.subr.mxu0 0.0
    %191 = vmatpush1.msra.mxu0 0.0
    %192 = vmatprep.subr.mxu0 0.0
    %193 = vmatpush1.msra.mxu0 0.0
    %194 = vmatprep.subr.mxu0 0.0
    %195 = vmatpush1.msra.mxu0 0.0
    %196 = vmatprep.subr.mxu0 0.0
    %197 = vmatpush1.msra.mxu0 0.0
    %198 = vmatprep.subr.mxu0 0.0
    %199 = vmatpush1.msra.mxu0 0.0
    %200 = vmatprep.mubr.f32.mxu0 0.0
    %v201 = vand.u32 %v33, 4294901760
    %202 = vmatmul.mubr.f32.gmra.mrb[0].mxu0 %v201
    %v203 = vpop.f32.mrb[0].mxu0
    %v204 = vadd.f32 %v122, %v203
    %v205 = vpop.f32.mrb[0].mxu0
    %v206 = vadd.f32 %v124, %v205
    %207 = vdwg.mxu0
    %v208 = vand.u32 %v40, 4294901760
    %v209 = vsub.f32 %v40, %v208
    %210 = vmatprep.subr.mxu0 %v209
    %v211 = vand.u32 %v37, 4294901760
    %v212 = vsub.f32 %v37, %v211
    %213 = vmatpush1.msra.mxu0 %v212
    %214 = vmatprep.subr.mxu0 0.0
    %215 = vmatpush1.msra.mxu0 0.0
    %216 = vmatprep.subr.mxu0 0.0
    %217 = vmatpush1.msra.mxu0 0.0
    %218 = vmatprep.subr.mxu0 0.0
    %219 = vmatpush1.msra.mxu0 0.0
    %220 = vmatprep.subr.mxu0 0.0
    %221 = vmatpush1.msra.mxu0 0.0
    %222 = vmatprep.subr.mxu0 0.0
    %223 = vmatpush1.msra.mxu0 0.0
    %224 = vmatprep.subr.mxu0 0.0
    %225 = vmatpush1.msra.mxu0 0.0
    %226 = vmatprep.subr.mxu0 0.0
    %227 = vmatpush1.msra.mxu0 0.0
    %228 = vmatprep.subr.mxu0 0.0
    %229 = vmatpush1.msra.mxu0 0.0
    %230 = vmatprep.subr.mxu0 0.0
    %231 = vmatpush1.msra.mxu0 0.0
    %232 = vmatprep.subr.mxu0 0.0
    %233 = vmatpush1.msra.mxu0 0.0
    %234 = vmatprep.subr.mxu0 0.0
    %235 = vmatpush1.msra.mxu0 0.0
    %236 = vmatprep.subr.mxu0 0.0
    %237 = vmatpush1.msra.mxu0 0.0
    %238 = vmatprep.subr.mxu0 0.0
    %239 = vmatpush1.msra.mxu0 0.0
    %240 = vmatprep.subr.mxu0 0.0
    %241 = vmatpush1.msra.mxu0 0.0
    %242 = vmatprep.subr.mxu0 0.0
    %243 = vmatpush1.msra.mxu0 0.0
    %244 = vmatprep.subr.mxu0 0.0
    %245 = vmatpush1.msra.mxu0 0.0
    %246 = vmatprep.subr.mxu0 0.0
    %247 = vmatpush1.msra.mxu0 0.0
    %248 = vmatprep.subr.mxu0 0.0
    %249 = vmatpush1.msra.mxu0 0.0
    %250 = vmatprep.subr.mxu0 0.0
    %251 = vmatpush1.msra.mxu0 0.0
    %252 = vmatprep.subr.mxu0 0.0
    %253 = vmatpush1.msra.mxu0 0.0
    %254 = vmatprep.subr.mxu0 0.0
    %255 = vmatpush1.msra.mxu0 0.0
    %256 = vmatprep.subr.mxu0 0.0
    %257 = vmatpush1.msra.mxu0 0.0
    %258 = vmatprep.subr.mxu0 0.0
    %259 = vmatpush1.msra.mxu0 0.0
    %260 = vmatprep.subr.mxu0 0.0
    %261 = vmatpush1.msra.mxu0 0.0
    %262 = vmatprep.subr.mxu0 0.0
    %263 = vmatpush1.msra.mxu0 0.0
    %264 = vmatprep.subr.mxu0 0.0
    %265 = vmatpush1.msra.mxu0 0.0
    %266 = vmatprep.subr.mxu0 0.0
    %267 = vmatpush1.msra.mxu0 0.0
    %268 = vmatprep.subr.mxu0 0.0
    %269 = vmatpush1.msra.mxu0 0.0
    %270 = vmatprep.subr.mxu0 0.0
    %271 = vmatpush1.msra.mxu0 0.0
    %272 = vmatprep.subr.mxu0 0.0
    %273 = vmatpush1.msra.mxu0 0.0
    %274 = vmatprep.subr.mxu0 0.0
    %275 = vmatpush1.msra.mxu0 0.0
    %276 = vmatprep.mubr.f32.mxu0 0.0
    %v277 = vand.u32 %v33, 4294901760
    %v278 = vsub.f32 %v33, %v277
    %279 = vmatmul.mubr.f32.gmra.mrb[0].mxu0 %v278
    %v280 = vpop.f32.mrb[0].mxu0
    %v281 = vadd.f32 %v204, %v280
    %v282 = vpop.f32.mrb[0].mxu0
    %v283 = vadd.f32 %v206, %v282
    %284 = vdwg.mxu0
    %v285 = vand.u32 %v40, 4294901760
    %286 = vmatprep.subr.mxu0 %v285
    %v287 = vand.u32 %v37, 4294901760
    %288 = vmatpush1.msra.mxu0 %v287
    %289 = vmatprep.subr.mxu0 0.0
    %290 = vmatpush1.msra.mxu0 0.0
    %291 = vmatprep.subr.mxu0 0.0
    %292 = vmatpush1.msra.mxu0 0.0
    %293 = vmatprep.subr.mxu0 0.0
    %294 = vmatpush1.msra.mxu0 0.0
    %295 = vmatprep.subr.mxu0 0.0
    %296 = vmatpush1.msra.mxu0 0.0
    %297 = vmatprep.subr.mxu0 0.0
    %298 = vmatpush1.msra.mxu0 0.0
    %299 = vmatprep.subr.mxu0 0.0
    %300 = vmatpush1.msra.mxu0 0.0
    %301 = vmatprep.subr.mxu0 0.0
    %302 = vmatpush1.msra.mxu0 0.0
    %303 = vmatprep.subr.mxu0 0.0
    %304 = vmatpush1.msra.mxu0 0.0
    %305 = vmatprep.subr.mxu0 0.0
    %306 = vmatpush1.msra.mxu0 0.0
    %307 = vmatprep.subr.mxu0 0.0
    %308 = vmatpush1.msra.mxu0 0.0
    %309 = vmatprep.subr.mxu0 0.0
    %310 = vmatpush1.msra.mxu0 0.0
    %311 = vmatprep.subr.mxu0 0.0
    %312 = vmatpush1.msra.mxu0 0.0
    %313 = vmatprep.subr.mxu0 0.0
    %314 = vmatpush1.msra.mxu0 0.0
    %315 = vmatprep.subr.mxu0 0.0
    %316 = vmatpush1.msra.mxu0 0.0
    %317 = vmatprep.subr.mxu0 0.0
    %318 = vmatpush1.msra.mxu0 0.0
    %319 = vmatprep.subr.mxu0 0.0
    %320 = vmatpush1.msra.mxu0 0.0
    %321 = vmatprep.subr.mxu0 0.0
    %322 = vmatpush1.msra.mxu0 0.0
    %323 = vmatprep.subr.mxu0 0.0
    %324 = vmatpush1.msra.mxu0 0.0
    %325 = vmatprep.subr.mxu0 0.0
    %326 = vmatpush1.msra.mxu0 0.0
    %327 = vmatprep.subr.mxu0 0.0
    %328 = vmatpush1.msra.mxu0 0.0
    %329 = vmatprep.subr.mxu0 0.0
    %330 = vmatpush1.msra.mxu0 0.0
    %331 = vmatprep.subr.mxu0 0.0
    %332 = vmatpush1.msra.mxu0 0.0
    %333 = vmatprep.subr.mxu0 0.0
    %334 = vmatpush1.msra.mxu0 0.0
    %335 = vmatprep.subr.mxu0 0.0
    %336 = vmatpush1.msra.mxu0 0.0
    %337 = vmatprep.subr.mxu0 0.0
    %338 = vmatpush1.msra.mxu0 0.0
    %339 = vmatprep.subr.mxu0 0.0
    %340 = vmatpush1.msra.mxu0 0.0
    %341 = vmatprep.subr.mxu0 0.0
    %342 = vmatpush1.msra.mxu0 0.0
    %343 = vmatprep.subr.mxu0 0.0
    %344 = vmatpush1.msra.mxu0 0.0
    %345 = vmatprep.subr.mxu0 0.0
    %346 = vmatpush1.msra.mxu0 0.0
    %347 = vmatprep.subr.mxu0 0.0
    %348 = vmatpush1.msra.mxu0 0.0
    %349 = vmatprep.subr.mxu0 0.0
    %350 = vmatpush1.msra.mxu0 0.0
    %351 = vmatprep.mubr.f32.mxu0 0.0
    %v352 = vand.u32 %v33, 4294901760
    %v353 = vsub.f32 %v33, %v352
    %v354 = vand.u32 %v353, 4294901760
    %355 = vmatmul.mubr.f32.gmra.mrb[0].mxu0 %v354
    %v356 = vpop.f32.mrb[0].mxu0
    %v357 = vadd.f32 %v281, %v356
    %v358 = vpop.f32.mrb[0].mxu0
    %v359 = vadd.f32 %v283, %v358
    %360 = vdwg.mxu0
    %v361 = vand.u32 %v40, 4294901760
    %v362 = vsub.f32 %v40, %v361
    %v363 = vand.u32 %v362, 4294901760
    %364 = vmatprep.subr.mxu0 %v363
    %v365 = vand.u32 %v37, 4294901760
    %v366 = vsub.f32 %v37, %v365
    %v367 = vand.u32 %v366, 4294901760
    %368 = vmatpush1.msra.mxu0 %v367
    %369 = vmatprep.subr.mxu0 0.0
    %370 = vmatpush1.msra.mxu0 0.0
    %371 = vmatprep.subr.mxu0 0.0
    %372 = vmatpush1.msra.mxu0 0.0
    %373 = vmatprep.subr.mxu0 0.0
    %374 = vmatpush1.msra.mxu0 0.0
    %375 = vmatprep.subr.mxu0 0.0
    %376 = vmatpush1.msra.mxu0 0.0
    %377 = vmatprep.subr.mxu0 0.0
    %378 = vmatpush1.msra.mxu0 0.0
    %379 = vmatprep.subr.mxu0 0.0
    %380 = vmatpush1.msra.mxu0 0.0
    %381 = vmatprep.subr.mxu0 0.0
    %382 = vmatpush1.msra.mxu0 0.0
    %383 = vmatprep.subr.mxu0 0.0
    %384 = vmatpush1.msra.mxu0 0.0
    %385 = vmatprep.subr.mxu0 0.0
    %386 = vmatpush1.msra.mxu0 0.0
    %387 = vmatprep.subr.mxu0 0.0
    %388 = vmatpush1.msra.mxu0 0.0
    %389 = vmatprep.subr.mxu0 0.0
    %390 = vmatpush1.msra.mxu0 0.0
    %391 = vmatprep.subr.mxu0 0.0
    %392 = vmatpush1.msra.mxu0 0.0
    %393 = vmatprep.subr.mxu0 0.0
    %394 = vmatpush1.msra.mxu0 0.0
    %395 = vmatprep.subr.mxu0 0.0
    %396 = vmatpush1.msra.mxu0 0.0
    %397 = vmatprep.subr.mxu0 0.0
    %398 = vmatpush1.msra.mxu0 0.0
    %399 = vmatprep.subr.mxu0 0.0
    %400 = vmatpush1.msra.mxu0 0.0
    %401 = vmatprep.subr.mxu0 0.0
    %402 = vmatpush1.msra.mxu0 0.0
    %403 = vmatprep.subr.mxu0 0.0
    %404 = vmatpush1.msra.mxu0 0.0
    %405 = vmatprep.subr.mxu0 0.0
    %406 = vmatpush1.msra.mxu0 0.0
    %407 = vmatprep.subr.mxu0 0.0
    %408 = vmatpush1.msra.mxu0 0.0
    %409 = vmatprep.subr.mxu0 0.0
    %410 = vmatpush1.msra.mxu0 0.0
    %411 = vmatprep.subr.mxu0 0.0
    %412 = vmatpush1.msra.mxu0 0.0
    %413 = vmatprep.subr.mxu0 0.0
    %414 = vmatpush1.msra.mxu0 0.0
    %415 = vmatprep.subr.mxu0 0.0
    %416 = vmatpush1.msra.mxu0 0.0
    %417 = vmatprep.subr.mxu0 0.0
    %418 = vmatpush1.msra.mxu0 0.0
    %419 = vmatprep.subr.mxu0 0.0
    %420 = vmatpush1.msra.mxu0 0.0
    %421 = vmatprep.subr.mxu0 0.0
    %422 = vmatpush1.msra.mxu0 0.0
    %423 = vmatprep.subr.mxu0 0.0
    %424 = vmatpush1.msra.mxu0 0.0
    %425 = vmatprep.subr.mxu0 0.0
    %426 = vmatpush1.msra.mxu0 0.0
    %427 = vmatprep.subr.mxu0 0.0
    %428 = vmatpush1.msra.mxu0 0.0
    %429 = vmatprep.subr.mxu0 0.0
    %430 = vmatpush1.msra.mxu0 0.0
    %431 = vmatprep.mubr.f32.mxu0 0.0
    %v432 = vand.u32 %v33, 4294901760
    %433 = vmatmul.mubr.f32.gmra.mrb[0].mxu0 %v432
    %v434 = vpop.f32.mrb[0].mxu0
    %v435 = vadd.f32 %v357, %v434
    %v436 = vpop.f32.mrb[0].mxu0
    %v437 = vadd.f32 %v359, %v436
    %438 = vdwg.mxu0
    %v439 = vand.u32 %v40, 4294901760
    %440 = vmatprep.subr.mxu0 %v439
    %v441 = vand.u32 %v37, 4294901760
    %442 = vmatpush1.msra.mxu0 %v441
    %443 = vmatprep.subr.mxu0 0.0
    %444 = vmatpush1.msra.mxu0 0.0
    %445 = vmatprep.subr.mxu0 0.0
    %446 = vmatpush1.msra.mxu0 0.0
    %447 = vmatprep.subr.mxu0 0.0
    %448 = vmatpush1.msra.mxu0 0.0
    %449 = vmatprep.subr.mxu0 0.0
    %450 = vmatpush1.msra.mxu0 0.0
    %451 = vmatprep.subr.mxu0 0.0
    %452 = vmatpush1.msra.mxu0 0.0
    %453 = vmatprep.subr.mxu0 0.0
    %454 = vmatpush1.msra.mxu0 0.0
    %455 = vmatprep.subr.mxu0 0.0
    %456 = vmatpush1.msra.mxu0 0.0
    %457 = vmatprep.subr.mxu0 0.0
    %458 = vmatpush1.msra.mxu0 0.0
    %459 = vmatprep.subr.mxu0 0.0
    %460 = vmatpush1.msra.mxu0 0.0
    %461 = vmatprep.subr.mxu0 0.0
    %462 = vmatpush1.msra.mxu0 0.0
    %463 = vmatprep.subr.mxu0 0.0
    %464 = vmatpush1.msra.mxu0 0.0
    %465 = vmatprep.subr.mxu0 0.0
    %466 = vmatpush1.msra.mxu0 0.0
    %467 = vmatprep.subr.mxu0 0.0
    %468 = vmatpush1.msra.mxu0 0.0
    %469 = vmatprep.subr.mxu0 0.0
    %470 = vmatpush1.msra.mxu0 0.0
    %471 = vmatprep.subr.mxu0 0.0
    %472 = vmatpush1.msra.mxu0 0.0
    %473 = vmatprep.subr.mxu0 0.0
    %474 = vmatpush1.msra.mxu0 0.0
    %475 = vmatprep.subr.mxu0 0.0
    %476 = vmatpush1.msra.mxu0 0.0
    %477 = vmatprep.subr.mxu0 0.0
    %478 = vmatpush1.msra.mxu0 0.0
    %479 = vmatprep.subr.mxu0 0.0
    %480 = vmatpush1.msra.mxu0 0.0
    %481 = vmatprep.subr.mxu0 0.0
    %482 = vmatpush1.msra.mxu0 0.0
    %483 = vmatprep.subr.mxu0 0.0
    %484 = vmatpush1.msra.mxu0 0.0
    %485 = vmatprep.subr.mxu0 0.0
    %486 = vmatpush1.msra.mxu0 0.0
    %487 = vmatprep.subr.mxu0 0.0
    %488 = vmatpush1.msra.mxu0 0.0
    %489 = vmatprep.subr.mxu0 0.0
    %490 = vmatpush1.msra.mxu0 0.0
    %491 = vmatprep.subr.mxu0 0.0
    %492 = vmatpush1.msra.mxu0 0.0
    %493 = vmatprep.subr.mxu0 0.0
    %494 = vmatpush1.msra.mxu0 0.0
    %495 = vmatprep.subr.mxu0 0.0
    %496 = vmatpush1.msra.mxu0 0.0
    %497 = vmatprep.subr.mxu0 0.0
    %498 = vmatpush1.msra.mxu0 0.0
    %499 = vmatprep.subr.mxu0 0.0
    %500 = vmatpush1.msra.mxu0 0.0
    %501 = vmatprep.subr.mxu0 0.0
    %502 = vmatpush1.msra.mxu0 0.0
    %503 = vmatprep.subr.mxu0 0.0
    %504 = vmatpush1.msra.mxu0 0.0
    %505 = vmatprep.mubr.f32.mxu0 0.0
    %v506 = vand.u32 %v33, 4294901760
    %507 = vmatmul.mubr.f32.gmra.mrb[0].mxu0 %v506
    %v508 = vpop.f32.mrb[0].mxu0
    %v509 = vadd.f32 %v435, %v508
    %v510 = vpop.f32.mrb[0].mxu0
    %v511 = vadd.f32 %v437, %v510
    %512 = vdwg.mxu0
    %v513 = vand.u32 %v46, 4294901760
    %514 = vmatprep.subr.mxu0 %v513
    %v515 = vand.u32 %v43, 4294901760
    %516 = vmatpush1.msra.mxu0 %v515
    %517 = vmatprep.subr.mxu0 0.0
    %518 = vmatpush1.msra.mxu0 0.0
    %519 = vmatprep.subr.mxu0 0.0
    %520 = vmatpush1.msra.mxu0 0.0
    %521 = vmatprep.subr.mxu0 0.0
    %522 = vmatpush1.msra.mxu0 0.0
    %523 = vmatprep.subr.mxu0 0.0
    %524 = vmatpush1.msra.mxu0 0.0
    %525 = vmatprep.subr.mxu0 0.0
    %526 = vmatpush1.msra.mxu0 0.0
    %527 = vmatprep.subr.mxu0 0.0
    %528 = vmatpush1.msra.mxu0 0.0
    %529 = vmatprep.subr.mxu0 0.0
    %530 = vmatpush1.msra.mxu0 0.0
    %531 = vmatprep.subr.mxu0 0.0
    %532 = vmatpush1.msra.mxu0 0.0
    %533 = vmatprep.subr.mxu0 0.0
    %534 = vmatpush1.msra.mxu0 0.0
    %535 = vmatprep.subr.mxu0 0.0
    %536 = vmatpush1.msra.mxu0 0.0
    %537 = vmatprep.subr.mxu0 0.0
    %538 = vmatpush1.msra.mxu0 0.0
    %539 = vmatprep.subr.mxu0 0.0
    %540 = vmatpush1.msra.mxu0 0.0
    %541 = vmatprep.subr.mxu0 0.0
    %542 = vmatpush1.msra.mxu0 0.0
    %543 = vmatprep.subr.mxu0 0.0
    %544 = vmatpush1.msra.mxu0 0.0
    %545 = vmatprep.subr.mxu0 0.0
    %546 = vmatpush1.msra.mxu0 0.0
    %547 = vmatprep.subr.mxu0 0.0
    %548 = vmatpush1.msra.mxu0 0.0
    %549 = vmatprep.subr.mxu0 0.0
    %550 = vmatpush1.msra.mxu0 0.0
    %551 = vmatprep.subr.mxu0 0.0
    %552 = vmatpush1.msra.mxu0 0.0
    %553 = vmatprep.subr.mxu0 0.0
    %554 = vmatpush1.msra.mxu0 0.0
    %555 = vmatprep.subr.mxu0 0.0
    %556 = vmatpush1.msra.mxu0 0.0
    %557 = vmatprep.subr.mxu0 0.0
    %558 = vmatpush1.msra.mxu0 0.0
    %559 = vmatprep.subr.mxu0 0.0
    %560 = vmatpush1.msra.mxu0 0.0
    %561 = vmatprep.subr.mxu0 0.0
    %562 = vmatpush1.msra.mxu0 0.0
    %563 = vmatprep.subr.mxu0 0.0
    %564 = vmatpush1.msra.mxu0 0.0
    %565 = vmatprep.subr.mxu0 0.0
    %566 = vmatpush1.msra.mxu0 0.0
    %567 = vmatprep.subr.mxu0 0.0
    %568 = vmatpush1.msra.mxu0 0.0
    %569 = vmatprep.subr.mxu0 0.0
    %570 = vmatpush1.msra.mxu0 0.0
    %571 = vmatprep.subr.mxu0 0.0
    %572 = vmatpush1.msra.mxu0 0.0
    %573 = vmatprep.subr.mxu0 0.0
    %574 = vmatpush1.msra.mxu0 0.0
    %575 = vmatprep.subr.mxu0 0.0
    %576 = vmatpush1.msra.mxu0 0.0
    %577 = vmatprep.subr.mxu0 0.0
    %578 = vmatpush1.msra.mxu0 0.0
    %579 = vmatprep.mubr.f32.mxu0 0.0
    %v580 = vand.u32 %v33, 4294901760
    %v581 = vsub.f32 %v33, %v580
    %v582 = vand.u32 %v581, 4294901760
    %v583 = vsub.f32 %v581, %v582
    %v584 = vand.u32 %v583, 4294901760
    %585 = vmatmul.mubr.f32.gmra.mrb[0].mxu0 %v584
    %v586 = vpop.f32.mrb[0].mxu0
    %v587 = vadd.f32 %v29, %v586
    %v588 = vpop.f32.mrb[0].mxu0
    %v589 = vadd.f32 %v29, %v588
    %590 = vdwg.mxu0
    %v591 = vand.u32 %v46, 4294901760
    %v592 = vsub.f32 %v46, %v591
    %v593 = vand.u32 %v592, 4294901760
    %v594 = vsub.f32 %v592, %v593
    %v595 = vand.u32 %v594, 4294901760
    %596 = vmatprep.subr.mxu0 %v595
    %v597 = vand.u32 %v43, 4294901760
    %v598 = vsub.f32 %v43, %v597
    %v599 = vand.u32 %v598, 4294901760
    %v600 = vsub.f32 %v598, %v599
    %v601 = vand.u32 %v600, 4294901760
    %602 = vmatpush1.msra.mxu0 %v601
    %603 = vmatprep.subr.mxu0 0.0
    %604 = vmatpush1.msra.mxu0 0.0
    %605 = vmatprep.subr.mxu0 0.0
    %606 = vmatpush1.msra.mxu0 0.0
    %607 = vmatprep.subr.mxu0 0.0
    %608 = vmatpush1.msra.mxu0 0.0
    %609 = vmatprep.subr.mxu0 0.0
    %610 = vmatpush1.msra.mxu0 0.0
    %611 = vmatprep.subr.mxu0 0.0
    %612 = vmatpush1.msra.mxu0 0.0
    %613 = vmatprep.subr.mxu0 0.0
    %614 = vmatpush1.msra.mxu0 0.0
    %615 = vmatprep.subr.mxu0 0.0
    %616 = vmatpush1.msra.mxu0 0.0
    %617 = vmatprep.subr.mxu0 0.0
    %618 = vmatpush1.msra.mxu0 0.0
    %619 = vmatprep.subr.mxu0 0.0
    %620 = vmatpush1.msra.mxu0 0.0
    %621 = vmatprep.subr.mxu0 0.0
    %622 = vmatpush1.msra.mxu0 0.0
    %623 = vmatprep.subr.mxu0 0.0
    %624 = vmatpush1.msra.mxu0 0.0
    %625 = vmatprep.subr.mxu0 0.0
    %626 = vmatpush1.msra.mxu0 0.0
    %627 = vmatprep.subr.mxu0 0.0
    %628 = vmatpush1.msra.mxu0 0.0
    %629 = vmatprep.subr.mxu0 0.0
    %630 = vmatpush1.msra.mxu0 0.0
    %631 = vmatprep.subr.mxu0 0.0
    %632 = vmatpush1.msra.mxu0 0.0
    %633 = vmatprep.subr.mxu0 0.0
    %634 = vmatpush1.msra.mxu0 0.0
    %635 = vmatprep.subr.mxu0 0.0
    %636 = vmatpush1.msra.mxu0 0.0
    %637 = vmatprep.subr.mxu0 0.0
    %638 = vmatpush1.msra.mxu0 0.0
    %639 = vmatprep.subr.mxu0 0.0
    %640 = vmatpush1.msra.mxu0 0.0
    %641 = vmatprep.subr.mxu0 0.0
    %642 = vmatpush1.msra.mxu0 0.0
    %643 = vmatprep.subr.mxu0 0.0
    %644 = vmatpush1.msra.mxu0 0.0
    %645 = vmatprep.subr.mxu0 0.0
    %646 = vmatpush1.msra.mxu0 0.0
    %647 = vmatprep.subr.mxu0 0.0
    %648 = vmatpush1.msra.mxu0 0.0
    %649 = vmatprep.subr.mxu0 0.0
    %650 = vmatpush1.msra.mxu0 0.0
    %651 = vmatprep.subr.mxu0 0.0
    %652 = vmatpush1.msra.mxu0 0.0
    %653 = vmatprep.subr.mxu0 0.0
    %654 = vmatpush1.msra.mxu0 0.0
    %655 = vmatprep.subr.mxu0 0.0
    %656 = vmatpush1.msra.mxu0 0.0
    %657 = vmatprep.subr.mxu0 0.0
    %658 = vmatpush1.msra.mxu0 0.0
    %659 = vmatprep.subr.mxu0 0.0
    %660 = vmatpush1.msra.mxu0 0.0
    %661 = vmatprep.subr.mxu0 0.0
    %662 = vmatpush1.msra.mxu0 0.0
    %663 = vmatprep.subr.mxu0 0.0
    %664 = vmatpush1.msra.mxu0 0.0
    %665 = vmatprep.mubr.f32.mxu0 0.0
    %v666 = vand.u32 %v33, 4294901760
    %667 = vmatmul.mubr.f32.gmra.mrb[0].mxu0 %v666
    %v668 = vpop.f32.mrb[0].mxu0
    %v669 = vadd.f32 %v587, %v668
    %v670 = vpop.f32.mrb[0].mxu0
    %v671 = vadd.f32 %v589, %v670
    %672 = vdwg.mxu0
    %v673 = vand.u32 %v46, 4294901760
    %v674 = vsub.f32 %v46, %v673
    %675 = vmatprep.subr.mxu0 %v674
    %v676 = vand.u32 %v43, 4294901760
    %v677 = vsub.f32 %v43, %v676
    %678 = vmatpush1.msra.mxu0 %v677
    %679 = vmatprep.subr.mxu0 0.0
    %680 = vmatpush1.msra.mxu0 0.0
    %681 = vmatprep.subr.mxu0 0.0
    %682 = vmatpush1.msra.mxu0 0.0
    %683 = vmatprep.subr.mxu0 0.0
    %684 = vmatpush1.msra.mxu0 0.0
    %685 = vmatprep.subr.mxu0 0.0
    %686 = vmatpush1.msra.mxu0 0.0
    %687 = vmatprep.subr.mxu0 0.0
    %688 = vmatpush1.msra.mxu0 0.0
    %689 = vmatprep.subr.mxu0 0.0
    %690 = vmatpush1.msra.mxu0 0.0
    %691 = vmatprep.subr.mxu0 0.0
    %692 = vmatpush1.msra.mxu0 0.0
    %693 = vmatprep.subr.mxu0 0.0
    %694 = vmatpush1.msra.mxu0 0.0
    %695 = vmatprep.subr.mxu0 0.0
    %696 = vmatpush1.msra.mxu0 0.0
    %697 = vmatprep.subr.mxu0 0.0
    %698 = vmatpush1.msra.mxu0 0.0
    %699 = vmatprep.subr.mxu0 0.0
    %700 = vmatpush1.msra.mxu0 0.0
    %701 = vmatprep.subr.mxu0 0.0
    %702 = vmatpush1.msra.mxu0 0.0
    %703 = vmatprep.subr.mxu0 0.0
    %704 = vmatpush1.msra.mxu0 0.0
    %705 = vmatprep.subr.mxu0 0.0
    %706 = vmatpush1.msra.mxu0 0.0
    %707 = vmatprep.subr.mxu0 0.0
    %708 = vmatpush1.msra.mxu0 0.0
    %709 = vmatprep.subr.mxu0 0.0
    %710 = vmatpush1.msra.mxu0 0.0
    %711 = vmatprep.subr.mxu0 0.0
    %712 = vmatpush1.msra.mxu0 0.0
    %713 = vmatprep.subr.mxu0 0.0
    %714 = vmatpush1.msra.mxu0 0.0
    %715 = vmatprep.subr.mxu0 0.0
    %716 = vmatpush1.msra.mxu0 0.0
    %717 = vmatprep.subr.mxu0 0.0
    %718 = vmatpush1.msra.mxu0 0.0
    %719 = vmatprep.subr.mxu0 0.0
    %720 = vmatpush1.msra.mxu0 0.0
    %721 = vmatprep.subr.mxu0 0.0
    %722 = vmatpush1.msra.mxu0 0.0
    %723 = vmatprep.subr.mxu0 0.0
    %724 = vmatpush1.msra.mxu0 0.0
    %725 = vmatprep.subr.mxu0 0.0
    %726 = vmatpush1.msra.mxu0 0.0
    %727 = vmatprep.subr.mxu0 0.0
    %728 = vmatpush1.msra.mxu0 0.0
    %729 = vmatprep.subr.mxu0 0.0
    %730 = vmatpush1.msra.mxu0 0.0
    %731 = vmatprep.subr.mxu0 0.0
    %732 = vmatpush1.msra.mxu0 0.0
    %733 = vmatprep.subr.mxu0 0.0
    %734 = vmatpush1.msra.mxu0 0.0
    %735 = vmatprep.subr.mxu0 0.0
    %736 = vmatpush1.msra.mxu0 0.0
    %737 = vmatprep.subr.mxu0 0.0
    %738 = vmatpush1.msra.mxu0 0.0
    %739 = vmatprep.subr.mxu0 0.0
    %740 = vmatpush1.msra.mxu0 0.0
    %741 = vmatprep.mubr.f32.mxu0 0.0
    %v742 = vand.u32 %v33, 4294901760
    %v743 = vsub.f32 %v33, %v742
    %744 = vmatmul.mubr.f32.gmra.mrb[0].mxu0 %v743
    %v745 = vpop.f32.mrb[0].mxu0
    %v746 = vadd.f32 %v669, %v745
    %v747 = vpop.f32.mrb[0].mxu0
    %v748 = vadd.f32 %v671, %v747
    %749 = vdwg.mxu0
    %v750 = vand.u32 %v46, 4294901760
    %751 = vmatprep.subr.mxu0 %v750
    %v752 = vand.u32 %v43, 4294901760
    %753 = vmatpush1.msra.mxu0 %v752
    %754 = vmatprep.subr.mxu0 0.0
    %755 = vmatpush1.msra.mxu0 0.0
    %756 = vmatprep.subr.mxu0 0.0
    %757 = vmatpush1.msra.mxu0 0.0
    %758 = vmatprep.subr.mxu0 0.0
    %759 = vmatpush1.msra.mxu0 0.0
    %760 = vmatprep.subr.mxu0 0.0
    %761 = vmatpush1.msra.mxu0 0.0
    %762 = vmatprep.subr.mxu0 0.0
    %763 = vmatpush1.msra.mxu0 0.0
    %764 = vmatprep.subr.mxu0 0.0
    %765 = vmatpush1.msra.mxu0 0.0
    %766 = vmatprep.subr.mxu0 0.0
    %767 = vmatpush1.msra.mxu0 0.0
    %768 = vmatprep.subr.mxu0 0.0
    %769 = vmatpush1.msra.mxu0 0.0
    %770 = vmatprep.subr.mxu0 0.0
    %771 = vmatpush1.msra.mxu0 0.0
    %772 = vmatprep.subr.mxu0 0.0
    %773 = vmatpush1.msra.mxu0 0.0
    %774 = vmatprep.subr.mxu0 0.0
    %775 = vmatpush1.msra.mxu0 0.0
    %776 = vmatprep.subr.mxu0 0.0
    %777 = vmatpush1.msra.mxu0 0.0
    %778 = vmatprep.subr.mxu0 0.0
    %779 = vmatpush1.msra.mxu0 0.0
    %780 = vmatprep.subr.mxu0 0.0
    %781 = vmatpush1.msra.mxu0 0.0
    %782 = vmatprep.subr.mxu0 0.0
    %783 = vmatpush1.msra.mxu0 0.0
    %784 = vmatprep.subr.mxu0 0.0
    %785 = vmatpush1.msra.mxu0 0.0
    %786 = vmatprep.subr.mxu0 0.0
    %787 = vmatpush1.msra.mxu0 0.0
    %788 = vmatprep.subr.mxu0 0.0
    %789 = vmatpush1.msra.mxu0 0.0
    %790 = vmatprep.subr.mxu0 0.0
    %791 = vmatpush1.msra.mxu0 0.0
    %792 = vmatprep.subr.mxu0 0.0
    %793 = vmatpush1.msra.mxu0 0.0
    %794 = vmatprep.subr.mxu0 0.0
    %795 = vmatpush1.msra.mxu0 0.0
    %796 = vmatprep.subr.mxu0 0.0
    %797 = vmatpush1.msra.mxu0 0.0
    %798 = vmatprep.subr.mxu0 0.0
    %799 = vmatpush1.msra.mxu0 0.0
    %800 = vmatprep.subr.mxu0 0.0
    %801 = vmatpush1.msra.mxu0 0.0
    %802 = vmatprep.subr.mxu0 0.0
    %803 = vmatpush1.msra.mxu0 0.0
    %804 = vmatprep.subr.mxu0 0.0
    %805 = vmatpush1.msra.mxu0 0.0
    %806 = vmatprep.subr.mxu0 0.0
    %807 = vmatpush1.msra.mxu0 0.0
    %808 = vmatprep.subr.mxu0 0.0
    %809 = vmatpush1.msra.mxu0 0.0
    %810 = vmatprep.subr.mxu0 0.0
    %811 = vmatpush1.msra.mxu0 0.0
    %812 = vmatprep.subr.mxu0 0.0
    %813 = vmatpush1.msra.mxu0 0.0
    %814 = vmatprep.subr.mxu0 0.0
    %815 = vmatpush1.msra.mxu0 0.0
    %816 = vmatprep.mubr.f32.mxu0 0.0
    %v817 = vand.u32 %v33, 4294901760
    %v818 = vsub.f32 %v33, %v817
    %v819 = vand.u32 %v818, 4294901760
    %820 = vmatmul.mubr.f32.gmra.mrb[0].mxu0 %v819
    %v821 = vpop.f32.mrb[0].mxu0
    %v822 = vadd.f32 %v746, %v821
    %v823 = vpop.f32.mrb[0].mxu0
    %v824 = vadd.f32 %v748, %v823
    %825 = vdwg.mxu0
    %v826 = vand.u32 %v46, 4294901760
    %v827 = vsub.f32 %v46, %v826
    %v828 = vand.u32 %v827, 4294901760
    %829 = vmatprep.subr.mxu0 %v828
    %v830 = vand.u32 %v43, 4294901760
    %v831 = vsub.f32 %v43, %v830
    %v832 = vand.u32 %v831, 4294901760
    %833 = vmatpush1.msra.mxu0 %v832
    %834 = vmatprep.subr.mxu0 0.0
    %835 = vmatpush1.msra.mxu0 0.0
    %836 = vmatprep.subr.mxu0 0.0
    %837 = vmatpush1.msra.mxu0 0.0
    %838 = vmatprep.subr.mxu0 0.0
    %839 = vmatpush1.msra.mxu0 0.0
    %840 = vmatprep.subr.mxu0 0.0
    %841 = vmatpush1.msra.mxu0 0.0
    %842 = vmatprep.subr.mxu0 0.0
    %843 = vmatpush1.msra.mxu0 0.0
    %844 = vmatprep.subr.mxu0 0.0
    %845 = vmatpush1.msra.mxu0 0.0
    %846 = vmatprep.subr.mxu0 0.0
    %847 = vmatpush1.msra.mxu0 0.0
    %848 = vmatprep.subr.mxu0 0.0
    %849 = vmatpush1.msra.mxu0 0.0
    %850 = vmatprep.subr.mxu0 0.0
    %851 = vmatpush1.msra.mxu0 0.0
    %852 = vmatprep.subr.mxu0 0.0
    %853 = vmatpush1.msra.mxu0 0.0
    %854 = vmatprep.subr.mxu0 0.0
    %855 = vmatpush1.msra.mxu0 0.0
    %856 = vmatprep.subr.mxu0 0.0
    %857 = vmatpush1.msra.mxu0 0.0
    %858 = vmatprep.subr.mxu0 0.0
    %859 = vmatpush1.msra.mxu0 0.0
    %860 = vmatprep.subr.mxu0 0.0
    %861 = vmatpush1.msra.mxu0 0.0
    %862 = vmatprep.subr.mxu0 0.0
    %863 = vmatpush1.msra.mxu0 0.0
    %864 = vmatprep.subr.mxu0 0.0
    %865 = vmatpush1.msra.mxu0 0.0
    %866 = vmatprep.subr.mxu0 0.0
    %867 = vmatpush1.msra.mxu0 0.0
    %868 = vmatprep.subr.mxu0 0.0
    %869 = vmatpush1.msra.mxu0 0.0
    %870 = vmatprep.subr.mxu0 0.0
    %871 = vmatpush1.msra.mxu0 0.0
    %872 = vmatprep.subr.mxu0 0.0
    %873 = vmatpush1.msra.mxu0 0.0
    %874 = vmatprep.subr.mxu0 0.0
    %875 = vmatpush1.msra.mxu0 0.0
    %876 = vmatprep.subr.mxu0 0.0
    %877 = vmatpush1.msra.mxu0 0.0
    %878 = vmatprep.subr.mxu0 0.0
    %879 = vmatpush1.msra.mxu0 0.0
    %880 = vmatprep.subr.mxu0 0.0
    %881 = vmatpush1.msra.mxu0 0.0
    %882 = vmatprep.subr.mxu0 0.0
    %883 = vmatpush1.msra.mxu0 0.0
    %884 = vmatprep.subr.mxu0 0.0
    %885 = vmatpush1.msra.mxu0 0.0
    %886 = vmatprep.subr.mxu0 0.0
    %887 = vmatpush1.msra.mxu0 0.0
    %888 = vmatprep.subr.mxu0 0.0
    %889 = vmatpush1.msra.mxu0 0.0
    %890 = vmatprep.subr.mxu0 0.0
    %891 = vmatpush1.msra.mxu0 0.0
    %892 = vmatprep.subr.mxu0 0.0
    %893 = vmatpush1.msra.mxu0 0.0
    %894 = vmatprep.subr.mxu0 0.0
    %895 = vmatpush1.msra.mxu0 0.0
    %896 = vmatprep.mubr.f32.mxu0 0.0
    %v897 = vand.u32 %v33, 4294901760
    %898 = vmatmul.mubr.f32.gmra.mrb[0].mxu0 %v897
    %v899 = vpop.f32.mrb[0].mxu0
    %v900 = vadd.f32 %v822, %v899
    %v901 = vpop.f32.mrb[0].mxu0
    %v902 = vadd.f32 %v824, %v901
    %903 = vdwg.mxu0
    %v904 = vand.u32 %v46, 4294901760
    %905 = vmatprep.subr.mxu0 %v904
    %v906 = vand.u32 %v43, 4294901760
    %907 = vmatpush1.msra.mxu0 %v906
    %908 = vmatprep.subr.mxu0 0.0
    %909 = vmatpush1.msra.mxu0 0.0
    %910 = vmatprep.subr.mxu0 0.0
    %911 = vmatpush1.msra.mxu0 0.0
    %912 = vmatprep.subr.mxu0 0.0
    %913 = vmatpush1.msra.mxu0 0.0
    %914 = vmatprep.subr.mxu0 0.0
    %915 = vmatpush1.msra.mxu0 0.0
    %916 = vmatprep.subr.mxu0 0.0
    %917 = vmatpush1.msra.mxu0 0.0
    %918 = vmatprep.subr.mxu0 0.0
    %919 = vmatpush1.msra.mxu0 0.0
    %920 = vmatprep.subr.mxu0 0.0
    %921 = vmatpush1.msra.mxu0 0.0
    %922 = vmatprep.subr.mxu0 0.0
    %923 = vmatpush1.msra.mxu0 0.0
    %924 = vmatprep.subr.mxu0 0.0
    %925 = vmatpush1.msra.mxu0 0.0
    %926 = vmatprep.subr.mxu0 0.0
    %927 = vmatpush1.msra.mxu0 0.0
    %928 = vmatprep.subr.mxu0 0.0
    %929 = vmatpush1.msra.mxu0 0.0
    %930 = vmatprep.subr.mxu0 0.0
    %931 = vmatpush1.msra.mxu0 0.0
    %932 = vmatprep.subr.mxu0 0.0
    %933 = vmatpush1.msra.mxu0 0.0
    %934 = vmatprep.subr.mxu0 0.0
    %935 = vmatpush1.msra.mxu0 0.0
    %936 = vmatprep.subr.mxu0 0.0
    %937 = vmatpush1.msra.mxu0 0.0
    %938 = vmatprep.subr.mxu0 0.0
    %939 = vmatpush1.msra.mxu0 0.0
    %940 = vmatprep.subr.mxu0 0.0
    %941 = vmatpush1.msra.mxu0 0.0
    %942 = vmatprep.subr.mxu0 0.0
    %943 = vmatpush1.msra.mxu0 0.0
    %944 = vmatprep.subr.mxu0 0.0
    %945 = vmatpush1.msra.mxu0 0.0
    %946 = vmatprep.subr.mxu0 0.0
    %947 = vmatpush1.msra.mxu0 0.0
    %948 = vmatprep.subr.mxu0 0.0
    %949 = vmatpush1.msra.mxu0 0.0
    %950 = vmatprep.subr.mxu0 0.0
    %951 = vmatpush1.msra.mxu0 0.0
    %952 = vmatprep.subr.mxu0 0.0
    %953 = vmatpush1.msra.mxu0 0.0
    %954 = vmatprep.subr.mxu0 0.0
    %955 = vmatpush1.msra.mxu0 0.0
    %956 = vmatprep.subr.mxu0 0.0
    %957 = vmatpush1.msra.mxu0 0.0
    %958 = vmatprep.subr.mxu0 0.0
    %959 = vmatpush1.msra.mxu0 0.0
    %960 = vmatprep.subr.mxu0 0.0
    %961 = vmatpush1.msra.mxu0 0.0
    %962 = vmatprep.subr.mxu0 0.0
    %963 = vmatpush1.msra.mxu0 0.0
    %964 = vmatprep.subr.mxu0 0.0
    %965 = vmatpush1.msra.mxu0 0.0
    %966 = vmatprep.subr.mxu0 0.0
    %967 = vmatpush1.msra.mxu0 0.0
    %968 = vmatprep.subr.mxu0 0.0
    %969 = vmatpush1.msra.mxu0 0.0
    %970 = vmatprep.mubr.f32.mxu0 0.0
    %v971 = vand.u32 %v33, 4294901760
    %972 = vmatmul.mubr.f32.gmra.mrb[0].mxu0 %v971
    %v973 = vpop.f32.mrb[0].mxu0
    %v974 = vadd.f32 %v900, %v973
    %v975 = vpop.f32.mrb[0].mxu0
    %v976 = vadd.f32 %v902, %v975
    %977 = vdwg.mxu0
    %v978 = vmax.f32 %v509, 0.5
    %v979 = vmax.f32 %v511, 0.5
    %v980 = vmax.f32 %v974, 0.5
    %v981 = vmax.f32 %v976, 0.5
    %v982 = vmin.f32 %v978, 10.9
    %v983 = vmin.f32 %v979, 10.9
    %v984 = vmin.f32 %v980, 10.9
    %v985 = vmin.f32 %v981, 10.9
    %v986 = vsub.f32 0.0, %v982
    %v987 = vsub.f32 0.0, %v983
    %v988 = vsub.f32 0.0, %v984
    %v989 = vsub.f32 0.0, %v985
    %v990 = vmul.f32 %v986, 1.442695
    %v991 = vpow.pop %v990
    %v992 = vmul.f32 %v987, 1.442695
    %v993 = vpow.pop %v992
    %v994 = vmul.f32 %v988, 1.442695
    %v995 = vpow.pop %v994
    %v996 = vmul.f32 %v989, 1.442695
    %v997 = vpow.pop %v996
    %v998 = vadd.f32 %v991, 1.0
    %v999 = vadd.f32 %v993, 1.0
    %v1000 = vadd.f32 %v995, 1.0
    %v1001 = vadd.f32 %v997, 1.0
    %v1002 = vrcp.pop %v998
    %v1003 = vrcp.pop %v999
    %v1004 = vrcp.pop %v1000
    %v1005 = vrcp.pop %v1001
    %v1006 = vld [vmem:[%s3] sm:$0xff]
    %v1007 = vld [vmem:[%s3 + $0x8] sm:$0xff]
    %v1008 = vld [vmem:[%s3 + $0x10] sm:$0xff]
    %v1009 = vld [vmem:[%s3 + $0x18] sm:$0xff]
    %v1010 = vld [vmem:[%s3 + $0x20] sm:$0xff]
    %v1011 = vld [vmem:[%s3 + $0x28] sm:$0xff]
    %v1012 = vld [vmem:[%s3 + $0x30] sm:$0xff]
    %v1013 = vld [vmem:[%s3 + $0x38] sm:$0xff]
    %v1014 = vld [vmem:[%s3 + $0x40] sm:$0xff]
    %v1015 = vld [vmem:[%s3 + $0x48] sm:$0xff]
    %v1016 = vld [vmem:[%s3 + $0x50] sm:$0xff]
    %v1017 = vld [vmem:[%s3 + $0x58] sm:$0xff]
    %v1018 = vld [vmem:[%s3 + $0x60] sm:$0xff]
    %v1019 = vld [vmem:[%s3 + $0x68] sm:$0xff]
    %v1020 = vld [vmem:[%s4] sm:$0xff]
    %v1021 = vld [vmem:[%s4 + $0x8] sm:$0xff]
    %v1022 = vld [vmem:[%s4 + $0x10] sm:$0xff]
    %v1023 = vld [vmem:[%s4 + $0x18] sm:$0xff]
    %v1024 = vld [vmem:[%s4 + $0x20] sm:$0xff]
    %v1025 = vld [vmem:[%s4 + $0x28] sm:$0xff]
    %v1026 = vld [vmem:[%s4 + $0x30] sm:$0xff]
    %v1027 = vld [vmem:[%s4 + $0x38] sm:$0xff]
    %v1028 = vld [vmem:[%s4 + $0x40] sm:$0xff]
    %v1029 = vld [vmem:[%s4 + $0x48] sm:$0xff]
    %v1030 = vld [vmem:[%s4 + $0x50] sm:$0xff]
    %v1031 = vld [vmem:[%s4 + $0x58] sm:$0xff]
    %v1032 = vld [vmem:[%s4 + $0x60] sm:$0xff]
    %v1033 = vld [vmem:[%s4 + $0x68] sm:$0xff]
    %1035 = vset.pattern.permute.xlu0 0
    %1036 = vperm.xlu0 %1035, %v1020
    %v1037 = vpop.permute.xlu0 %1036
    %1040 = vset.pattern.permute.xlu0 0
    %1041 = vperm.xlu0 %1040, %v1021
    %v1042 = vpop.permute.xlu0 %1041
    %1045 = vset.pattern.permute.xlu0 0
    %1046 = vperm.xlu0 %1045, %v1022
    %v1047 = vpop.permute.xlu0 %1046
    %1050 = vset.pattern.permute.xlu0 0
    %1051 = vperm.xlu0 %1050, %v1023
    %v1052 = vpop.permute.xlu0 %1051
    %1055 = vset.pattern.permute.xlu0 0
    %1056 = vperm.xlu0 %1055, %v1024
    %v1057 = vpop.permute.xlu0 %1056
    %1060 = vset.pattern.permute.xlu0 0
    %1061 = vperm.xlu0 %1060, %v1025
    %v1062 = vpop.permute.xlu0 %1061
    %1065 = vset.pattern.permute.xlu0 0
    %1066 = vperm.xlu0 %1065, %v1026
    %v1067 = vpop.permute.xlu0 %1066
    %1070 = vset.pattern.permute.xlu0 0
    %1071 = vperm.xlu0 %1070, %v1027
    %v1072 = vpop.permute.xlu0 %1071
    %1075 = vset.pattern.permute.xlu0 0
    %1076 = vperm.xlu0 %1075, %v1028
    %v1077 = vpop.permute.xlu0 %1076
    %1080 = vset.pattern.permute.xlu0 0
    %1081 = vperm.xlu0 %1080, %v1029
    %v1082 = vpop.permute.xlu0 %1081
    %1085 = vset.pattern.permute.xlu0 0
    %1086 = vperm.xlu0 %1085, %v1030
    %v1087 = vpop.permute.xlu0 %1086
    %1090 = vset.pattern.permute.xlu0 0
    %1091 = vperm.xlu0 %1090, %v1031
    %v1092 = vpop.permute.xlu0 %1091
    %1095 = vset.pattern.permute.xlu0 0
    %1096 = vperm.xlu0 %1095, %v1032
    %v1097 = vpop.permute.xlu0 %1096
    %1100 = vset.pattern.permute.xlu0 0
    %1101 = vperm.xlu0 %1100, %v1033
    %v1102 = vpop.permute.xlu0 %1101
    %vm1104 = vcmask 64512
    %v1106 = vsel %vm1104, %v1006, 0
    %v1109 = vsel %vm1104, %v1007, 0
    %v1112 = vsel %vm1104, %v1008, 0
    %v1115 = vsel %vm1104, %v1009, 0
    %v1118 = vsel %vm1104, %v1010, 0
    %v1121 = vsel %vm1104, %v1011, 0
    %v1124 = vsel %vm1104, %v1012, 0
    %v1127 = vsel %vm1104, %v1013, 0
    %v1130 = vsel %vm1104, %v1014, 0
    %v1133 = vsel %vm1104, %v1015, 0
    %v1136 = vsel %vm1104, %v1016, 0
    %v1139 = vsel %vm1104, %v1017, 0
    %v1142 = vsel %vm1104, %v1018, 0
    %v1145 = vsel %vm1104, %v1019, 0
    %v1147 = vand.u32 %v1003, 4294901760
    %1148 = vmatprep.subr.mxu0 %v1147
    %v1149 = vand.u32 %v1002, 4294901760
    %1150 = vmatpush1.msra.mxu0 %v1149
    %1151 = vmatprep.subr.mxu0 0.0
    %1152 = vmatpush1.msra.mxu0 0.0
    %1153 = vmatprep.subr.mxu0 0.0
    %1154 = vmatpush1.msra.mxu0 0.0
    %1155 = vmatprep.subr.mxu0 0.0
    %1156 = vmatpush1.msra.mxu0 0.0
    %1157 = vmatprep.subr.mxu0 0.0
    %1158 = vmatpush1.msra.mxu0 0.0
    %1159 = vmatprep.subr.mxu0 0.0
    %1160 = vmatpush1.msra.mxu0 0.0
    %1161 = vmatprep.subr.mxu0 0.0
    %1162 = vmatpush1.msra.mxu0 0.0
    %1163 = vmatprep.subr.mxu0 0.0
    %1164 = vmatpush1.msra.mxu0 0.0
    %1165 = vmatprep.subr.mxu0 0.0
    %1166 = vmatpush1.msra.mxu0 0.0
    %1167 = vmatprep.subr.mxu0 0.0
    %1168 = vmatpush1.msra.mxu0 0.0
    %1169 = vmatprep.subr.mxu0 0.0
    %1170 = vmatpush1.msra.mxu0 0.0
    %1171 = vmatprep.subr.mxu0 0.0
    %1172 = vmatpush1.msra.mxu0 0.0
    %1173 = vmatprep.subr.mxu0 0.0
    %1174 = vmatpush1.msra.mxu0 0.0
    %1175 = vmatprep.subr.mxu0 0.0
    %1176 = vmatpush1.msra.mxu0 0.0
    %1177 = vmatprep.subr.mxu0 0.0
    %1178 = vmatpush1.msra.mxu0 0.0
    %1179 = vmatprep.subr.mxu0 0.0
    %1180 = vmatpush1.msra.mxu0 0.0
    %1181 = vmatprep.subr.mxu0 0.0
    %1182 = vmatpush1.msra.mxu0 0.0
    %1183 = vmatprep.subr.mxu0 0.0
    %1184 = vmatpush1.msra.mxu0 0.0
    %1185 = vmatprep.subr.mxu0 0.0
    %1186 = vmatpush1.msra.mxu0 0.0
    %1187 = vmatprep.subr.mxu0 0.0
    %1188 = vmatpush1.msra.mxu0 0.0
    %1189 = vmatprep.subr.mxu0 0.0
    %1190 = vmatpush1.msra.mxu0 0.0
    %1191 = vmatprep.subr.mxu0 0.0
    %1192 = vmatpush1.msra.mxu0 0.0
    %1193 = vmatprep.subr.mxu0 0.0
    %1194 = vmatpush1.msra.mxu0 0.0
    %1195 = vmatprep.subr.mxu0 0.0
    %1196 = vmatpush1.msra.mxu0 0.0
    %1197 = vmatprep.subr.mxu0 0.0
    %1198 = vmatpush1.msra.mxu0 0.0
    %1199 = vmatprep.subr.mxu0 0.0
    %1200 = vmatpush1.msra.mxu0 0.0
    %1201 = vmatprep.subr.mxu0 0.0
    %1202 = vmatpush1.msra.mxu0 0.0
    %1203 = vmatprep.subr.mxu0 0.0
    %1204 = vmatpush1.msra.mxu0 0.0
    %1205 = vmatprep.subr.mxu0 0.0
    %1206 = vmatpush1.msra.mxu0 0.0
    %1207 = vmatprep.subr.mxu0 0.0
    %1208 = vmatpush1.msra.mxu0 0.0
    %1209 = vmatprep.subr.mxu0 0.0
    %1210 = vmatpush1.msra.mxu0 0.0
    %1211 = vmatprep.subr.mxu0 0.0
    %1212 = vmatpush1.msra.mxu0 0.0
    %1213 = vmatprep.mubr.f32.mxu0 0.0
    %v1214 = vand.u32 %v1106, 4294901760
    %v1215 = vsub.f32 %v1106, %v1214
    %v1216 = vand.u32 %v1215, 4294901760
    %v1217 = vsub.f32 %v1215, %v1216
    %v1218 = vand.u32 %v1217, 4294901760
    %1219 = vmatmul.mubr.f32.gmra.mrb[0].mxu0 %v1218
    %v1220 = vpop.f32.mrb[0].mxu0
    %v1221 = vadd.f32 %v1037, %v1220
    %v1222 = vpop.f32.mrb[0].mxu0
    %v1223 = vadd.f32 %v1037, %v1222
    %1224 = vmatprep.mubr.f32.mxu0 0.0
    %v1225 = vand.u32 %v1109, 4294901760
    %v1226 = vsub.f32 %v1109, %v1225
    %v1227 = vand.u32 %v1226, 4294901760
    %v1228 = vsub.f32 %v1226, %v1227
    %v1229 = vand.u32 %v1228, 4294901760
    %1230 = vmatmul.mubr.f32.gmra.mrb[0].mxu0 %v1229
    %v1231 = vpop.f32.mrb[0].mxu0
    %v1232 = vadd.f32 %v1042, %v1231
    %v1233 = vpop.f32.mrb[0].mxu0
    %v1234 = vadd.f32 %v1042, %v1233
    %1235 = vmatprep.mubr.f32.mxu0 0.0
    %v1236 = vand.u32 %v1112, 4294901760
    %v1237 = vsub.f32 %v1112, %v1236
    %v1238 = vand.u32 %v1237, 4294901760
    %v1239 = vsub.f32 %v1237, %v1238
    %v1240 = vand.u32 %v1239, 4294901760
    %1241 = vmatmul.mubr.f32.gmra.mrb[0].mxu0 %v1240
    %v1242 = vpop.f32.mrb[0].mxu0
    %v1243 = vadd.f32 %v1047, %v1242
    %v1244 = vpop.f32.mrb[0].mxu0
    %v1245 = vadd.f32 %v1047, %v1244
    %1246 = vmatprep.mubr.f32.mxu0 0.0
    %v1247 = vand.u32 %v1115, 4294901760
    %v1248 = vsub.f32 %v1115, %v1247
    %v1249 = vand.u32 %v1248, 4294901760
    %v1250 = vsub.f32 %v1248, %v1249
    %v1251 = vand.u32 %v1250, 4294901760
    %1252 = vmatmul.mubr.f32.gmra.mrb[0].mxu0 %v1251
    %v1253 = vpop.f32.mrb[0].mxu0
    %v1254 = vadd.f32 %v1052, %v1253
    %v1255 = vpop.f32.mrb[0].mxu0
    %v1256 = vadd.f32 %v1052, %v1255
    %1257 = vmatprep.mubr.f32.mxu0 0.0
    %v1258 = vand.u32 %v1118, 4294901760
    %v1259 = vsub.f32 %v1118, %v1258
    %v1260 = vand.u32 %v1259, 4294901760
    %v1261 = vsub.f32 %v1259, %v1260
    %v1262 = vand.u32 %v1261, 4294901760
    %1263 = vmatmul.mubr.f32.gmra.mrb[0].mxu0 %v1262
    %v1264 = vpop.f32.mrb[0].mxu0
    %v1265 = vadd.f32 %v1057, %v1264
    %v1266 = vpop.f32.mrb[0].mxu0
    %v1267 = vadd.f32 %v1057, %v1266
    %1268 = vmatprep.mubr.f32.mxu0 0.0
    %v1269 = vand.u32 %v1121, 4294901760
    %v1270 = vsub.f32 %v1121, %v1269
    %v1271 = vand.u32 %v1270, 4294901760
    %v1272 = vsub.f32 %v1270, %v1271
    %v1273 = vand.u32 %v1272, 4294901760
    %1274 = vmatmul.mubr.f32.gmra.mrb[0].mxu0 %v1273
    %v1275 = vpop.f32.mrb[0].mxu0
    %v1276 = vadd.f32 %v1062, %v1275
    %v1277 = vpop.f32.mrb[0].mxu0
    %v1278 = vadd.f32 %v1062, %v1277
    %1279 = vmatprep.mubr.f32.mxu0 0.0
    %v1280 = vand.u32 %v1124, 4294901760
    %v1281 = vsub.f32 %v1124, %v1280
    %v1282 = vand.u32 %v1281, 4294901760
    %v1283 = vsub.f32 %v1281, %v1282
    %v1284 = vand.u32 %v1283, 4294901760
    %1285 = vmatmul.mubr.f32.gmra.mrb[0].mxu0 %v1284
    %v1286 = vpop.f32.mrb[0].mxu0
    %v1287 = vadd.f32 %v1067, %v1286
    %v1288 = vpop.f32.mrb[0].mxu0
    %v1289 = vadd.f32 %v1067, %v1288
    %1290 = vmatprep.mubr.f32.mxu0 0.0
    %v1291 = vand.u32 %v1127, 4294901760
    %v1292 = vsub.f32 %v1127, %v1291
    %v1293 = vand.u32 %v1292, 4294901760
    %v1294 = vsub.f32 %v1292, %v1293
    %v1295 = vand.u32 %v1294, 4294901760
    %1296 = vmatmul.mubr.f32.gmra.mrb[0].mxu0 %v1295
    %v1297 = vpop.f32.mrb[0].mxu0
    %v1298 = vadd.f32 %v1072, %v1297
    %v1299 = vpop.f32.mrb[0].mxu0
    %v1300 = vadd.f32 %v1072, %v1299
    %1301 = vmatprep.mubr.f32.mxu0 0.0
    %v1302 = vand.u32 %v1130, 4294901760
    %v1303 = vsub.f32 %v1130, %v1302
    %v1304 = vand.u32 %v1303, 4294901760
    %v1305 = vsub.f32 %v1303, %v1304
    %v1306 = vand.u32 %v1305, 4294901760
    %1307 = vmatmul.mubr.f32.gmra.mrb[0].mxu0 %v1306
    %v1308 = vpop.f32.mrb[0].mxu0
    %v1309 = vadd.f32 %v1077, %v1308
    %v1310 = vpop.f32.mrb[0].mxu0
    %v1311 = vadd.f32 %v1077, %v1310
    %1312 = vmatprep.mubr.f32.mxu0 0.0
    %v1313 = vand.u32 %v1133, 4294901760
    %v1314 = vsub.f32 %v1133, %v1313
    %v1315 = vand.u32 %v1314, 4294901760
    %v1316 = vsub.f32 %v1314, %v1315
    %v1317 = vand.u32 %v1316, 4294901760
    %1318 = vmatmul.mubr.f32.gmra.mrb[0].mxu0 %v1317
    %v1319 = vpop.f32.mrb[0].mxu0
    %v1320 = vadd.f32 %v1082, %v1319
    %v1321 = vpop.f32.mrb[0].mxu0
    %v1322 = vadd.f32 %v1082, %v1321
    %1323 = vmatprep.mubr.f32.mxu0 0.0
    %v1324 = vand.u32 %v1136, 4294901760
    %v1325 = vsub.f32 %v1136, %v1324
    %v1326 = vand.u32 %v1325, 4294901760
    %v1327 = vsub.f32 %v1325, %v1326
    %v1328 = vand.u32 %v1327, 4294901760
    %1329 = vmatmul.mubr.f32.gmra.mrb[0].mxu0 %v1328
    %v1330 = vpop.f32.mrb[0].mxu0
    %v1331 = vadd.f32 %v1087, %v1330
    %v1332 = vpop.f32.mrb[0].mxu0
    %v1333 = vadd.f32 %v1087, %v1332
    %1334 = vmatprep.mubr.f32.mxu0 0.0
    %v1335 = vand.u32 %v1139, 4294901760
    %v1336 = vsub.f32 %v1139, %v1335
    %v1337 = vand.u32 %v1336, 4294901760
    %v1338 = vsub.f32 %v1336, %v1337
    %v1339 = vand.u32 %v1338, 4294901760
    %1340 = vmatmul.mubr.f32.gmra.mrb[0].mxu0 %v1339
    %v1341 = vpop.f32.mrb[0].mxu0
    %v1342 = vadd.f32 %v1092, %v1341
    %v1343 = vpop.f32.mrb[0].mxu0
    %v1344 = vadd.f32 %v1092, %v1343
    %1345 = vmatprep.mubr.f32.mxu0 0.0
    %v1346 = vand.u32 %v1142, 4294901760
    %v1347 = vsub.f32 %v1142, %v1346
    %v1348 = vand.u32 %v1347, 4294901760
    %v1349 = vsub.f32 %v1347, %v1348
    %v1350 = vand.u32 %v1349, 4294901760
    %1351 = vmatmul.mubr.f32.gmra.mrb[0].mxu0 %v1350
    %v1352 = vpop.f32.mrb[0].mxu0
    %v1353 = vadd.f32 %v1097, %v1352
    %v1354 = vpop.f32.mrb[0].mxu0
    %v1355 = vadd.f32 %v1097, %v1354
    %1356 = vmatprep.mubr.f32.mxu0 0.0
    %v1357 = vand.u32 %v1145, 4294901760
    %v1358 = vsub.f32 %v1145, %v1357
    %v1359 = vand.u32 %v1358, 4294901760
    %v1360 = vsub.f32 %v1358, %v1359
    %v1361 = vand.u32 %v1360, 4294901760
    %1362 = vmatmul.mubr.f32.gmra.mrb[0].mxu0 %v1361
    %v1363 = vpop.f32.mrb[0].mxu0
    %v1364 = vadd.f32 %v1102, %v1363
    %v1365 = vpop.f32.mrb[0].mxu0
    %v1366 = vadd.f32 %v1102, %v1365
    %1367 = vdwg.mxu0
    %v1368 = vand.u32 %v1003, 4294901760
    %v1369 = vsub.f32 %v1003, %v1368
    %v1370 = vand.u32 %v1369, 4294901760
    %v1371 = vsub.f32 %v1369, %v1370
    %v1372 = vand.u32 %v1371, 4294901760
    %1373 = vmatprep.subr.mxu0 %v1372
    %v1374 = vand.u32 %v1002, 4294901760
    %v1375 = vsub.f32 %v1002, %v1374
    %v1376 = vand.u32 %v1375, 4294901760
    %v1377 = vsub.f32 %v1375, %v1376
    %v1378 = vand.u32 %v1377, 4294901760
    %1379 = vmatpush1.msra.mxu0 %v1378
    %1380 = vmatprep.subr.mxu0 0.0
    %1381 = vmatpush1.msra.mxu0 0.0
    %1382 = vmatprep.subr.mxu0 0.0
    %1383 = vmatpush1.msra.mxu0 0.0
    %1384 = vmatprep.subr.mxu0 0.0
    %1385 = vmatpush1.msra.mxu0 0.0
    %1386 = vmatprep.subr.mxu0 0.0
    %1387 = vmatpush1.msra.mxu0 0.0
    %1388 = vmatprep.subr.mxu0 0.0
    %1389 = vmatpush1.msra.mxu0 0.0
    %1390 = vmatprep.subr.mxu0 0.0
    %1391 = vmatpush1.msra.mxu0 0.0
    %1392 = vmatprep.subr.mxu0 0.0
    %1393 = vmatpush1.msra.mxu0 0.0
    %1394 = vmatprep.subr.mxu0 0.0
    %1395 = vmatpush1.msra.mxu0 0.0
    %1396 = vmatprep.subr.mxu0 0.0
    %1397 = vmatpush1.msra.mxu0 0.0
    %1398 = vmatprep.subr.mxu0 0.0
    %1399 = vmatpush1.msra.mxu0 0.0
    %1400 = vmatprep.subr.mxu0 0.0
    %1401 = vmatpush1.msra.mxu0 0.0
    %1402 = vmatprep.subr.mxu0 0.0
    %1403 = vmatpush1.msra.mxu0 0.0
    %1404 = vmatprep.subr.mxu0 0.0
    %1405 = vmatpush1.msra.mxu0 0.0
    %1406 = vmatprep.subr.mxu0 0.0
    %1407 = vmatpush1.msra.mxu0 0.0
    %1408 = vmatprep.subr.mxu0 0.0
    %1409 = vmatpush1.msra.mxu0 0.0
    %1410 = vmatprep.subr.mxu0 0.0
    %1411 = vmatpush1.msra.mxu0 0.0
    %1412 = vmatprep.subr.mxu0 0.0
    %1413 = vmatpush1.msra.mxu0 0.0
    %1414 = vmatprep.subr.mxu0 0.0
    %1415 = vmatpush1.msra.mxu0 0.0
    %1416 = vmatprep.subr.mxu0 0.0
    %1417 = vmatpush1.msra.mxu0 0.0
    %1418 = vmatprep.subr.mxu0 0.0
    %1419 = vmatpush1.msra.mxu0 0.0
    %1420 = vmatprep.subr.mxu0 0.0
    %1421 = vmatpush1.msra.mxu0 0.0
    %1422 = vmatprep.subr.mxu0 0.0
    %1423 = vmatpush1.msra.mxu0 0.0
    %1424 = vmatprep.subr.mxu0 0.0
    %1425 = vmatpush1.msra.mxu0 0.0
    %1426 = vmatprep.subr.mxu0 0.0
    %1427 = vmatpush1.msra.mxu0 0.0
    %1428 = vmatprep.subr.mxu0 0.0
    %1429 = vmatpush1.msra.mxu0 0.0
    %1430 = vmatprep.subr.mxu0 0.0
    %1431 = vmatpush1.msra.mxu0 0.0
    %1432 = vmatprep.subr.mxu0 0.0
    %1433 = vmatpush1.msra.mxu0 0.0
    %1434 = vmatprep.subr.mxu0 0.0
    %1435 = vmatpush1.msra.mxu0 0.0
    %1436 = vmatprep.subr.mxu0 0.0
    %1437 = vmatpush1.msra.mxu0 0.0
    %1438 = vmatprep.subr.mxu0 0.0
    %1439 = vmatpush1.msra.mxu0 0.0
    %1440 = vmatprep.subr.mxu0 0.0
    %1441 = vmatpush1.msra.mxu0 0.0
    %1442 = vmatprep.mubr.f32.mxu0 0.0
    %v1443 = vand.u32 %v1106, 4294901760
    %1444 = vmatmul.mubr.f32.gmra.mrb[0].mxu0 %v1443
    %v1445 = vpop.f32.mrb[0].mxu0
    %v1446 = vadd.f32 %v1221, %v1445
    %v1447 = vpop.f32.mrb[0].mxu0
    %v1448 = vadd.f32 %v1223, %v1447
    %1449 = vmatprep.mubr.f32.mxu0 0.0
    %v1450 = vand.u32 %v1109, 4294901760
    %1451 = vmatmul.mubr.f32.gmra.mrb[0].mxu0 %v1450
    %v1452 = vpop.f32.mrb[0].mxu0
    %v1453 = vadd.f32 %v1232, %v1452
    %v1454 = vpop.f32.mrb[0].mxu0
    %v1455 = vadd.f32 %v1234, %v1454
    %1456 = vmatprep.mubr.f32.mxu0 0.0
    %v1457 = vand.u32 %v1112, 4294901760
    %1458 = vmatmul.mubr.f32.gmra.mrb[0].mxu0 %v1457
    %v1459 = vpop.f32.mrb[0].mxu0
    %v1460 = vadd.f32 %v1243, %v1459
    %v1461 = vpop.f32.mrb[0].mxu0
    %v1462 = vadd.f32 %v1245, %v1461
    %1463 = vmatprep.mubr.f32.mxu0 0.0
    %v1464 = vand.u32 %v1115, 4294901760
    %1465 = vmatmul.mubr.f32.gmra.mrb[0].mxu0 %v1464
    %v1466 = vpop.f32.mrb[0].mxu0
    %v1467 = vadd.f32 %v1254, %v1466
    %v1468 = vpop.f32.mrb[0].mxu0
    %v1469 = vadd.f32 %v1256, %v1468
    %1470 = vmatprep.mubr.f32.mxu0 0.0
    %v1471 = vand.u32 %v1118, 4294901760
    %1472 = vmatmul.mubr.f32.gmra.mrb[0].mxu0 %v1471
    %v1473 = vpop.f32.mrb[0].mxu0
    %v1474 = vadd.f32 %v1265, %v1473
    %v1475 = vpop.f32.mrb[0].mxu0
    %v1476 = vadd.f32 %v1267, %v1475
    %1477 = vmatprep.mubr.f32.mxu0 0.0
    %v1478 = vand.u32 %v1121, 4294901760
    %1479 = vmatmul.mubr.f32.gmra.mrb[0].mxu0 %v1478
    %v1480 = vpop.f32.mrb[0].mxu0
    %v1481 = vadd.f32 %v1276, %v1480
    %v1482 = vpop.f32.mrb[0].mxu0
    %v1483 = vadd.f32 %v1278, %v1482
    %1484 = vmatprep.mubr.f32.mxu0 0.0
    %v1485 = vand.u32 %v1124, 4294901760
    %1486 = vmatmul.mubr.f32.gmra.mrb[0].mxu0 %v1485
    %v1487 = vpop.f32.mrb[0].mxu0
    %v1488 = vadd.f32 %v1287, %v1487
    %v1489 = vpop.f32.mrb[0].mxu0
    %v1490 = vadd.f32 %v1289, %v1489
    %1491 = vmatprep.mubr.f32.mxu0 0.0
    %v1492 = vand.u32 %v1127, 4294901760
    %1493 = vmatmul.mubr.f32.gmra.mrb[0].mxu0 %v1492
    %v1494 = vpop.f32.mrb[0].mxu0
    %v1495 = vadd.f32 %v1298, %v1494
    %v1496 = vpop.f32.mrb[0].mxu0
    %v1497 = vadd.f32 %v1300, %v1496
    %1498 = vmatprep.mubr.f32.mxu0 0.0
    %v1499 = vand.u32 %v1130, 4294901760
    %1500 = vmatmul.mubr.f32.gmra.mrb[0].mxu0 %v1499
    %v1501 = vpop.f32.mrb[0].mxu0
    %v1502 = vadd.f32 %v1309, %v1501
    %v1503 = vpop.f32.mrb[0].mxu0
    %v1504 = vadd.f32 %v1311, %v1503
    %1505 = vmatprep.mubr.f32.mxu0 0.0
    %v1506 = vand.u32 %v1133, 4294901760
    %1507 = vmatmul.mubr.f32.gmra.mrb[0].mxu0 %v1506
    %v1508 = vpop.f32.mrb[0].mxu0
    %v1509 = vadd.f32 %v1320, %v1508
    %v1510 = vpop.f32.mrb[0].mxu0
    %v1511 = vadd.f32 %v1322, %v1510
    %1512 = vmatprep.mubr.f32.mxu0 0.0
    %v1513 = vand.u32 %v1136, 4294901760
    %1514 = vmatmul.mubr.f32.gmra.mrb[0].mxu0 %v1513
    %v1515 = vpop.f32.mrb[0].mxu0
    %v1516 = vadd.f32 %v1331, %v1515
    %v1517 = vpop.f32.mrb[0].mxu0
    %v1518 = vadd.f32 %v1333, %v1517
    %1519 = vmatprep.mubr.f32.mxu0 0.0
    %v1520 = vand.u32 %v1139, 4294901760
    %1521 = vmatmul.mubr.f32.gmra.mrb[0].mxu0 %v1520
    %v1522 = vpop.f32.mrb[0].mxu0
    %v1523 = vadd.f32 %v1342, %v1522
    %v1524 = vpop.f32.mrb[0].mxu0
    %v1525 = vadd.f32 %v1344, %v1524
    %1526 = vmatprep.mubr.f32.mxu0 0.0
    %v1527 = vand.u32 %v1142, 4294901760
    %1528 = vmatmul.mubr.f32.gmra.mrb[0].mxu0 %v1527
    %v1529 = vpop.f32.mrb[0].mxu0
    %v1530 = vadd.f32 %v1353, %v1529
    %v1531 = vpop.f32.mrb[0].mxu0
    %v1532 = vadd.f32 %v1355, %v1531
    %1533 = vmatprep.mubr.f32.mxu0 0.0
    %v1534 = vand.u32 %v1145, 4294901760
    %1535 = vmatmul.mubr.f32.gmra.mrb[0].mxu0 %v1534
    %v1536 = vpop.f32.mrb[0].mxu0
    %v1537 = vadd.f32 %v1364, %v1536
    %v1538 = vpop.f32.mrb[0].mxu0
    %v1539 = vadd.f32 %v1366, %v1538
    %1540 = vdwg.mxu0
    %v1541 = vand.u32 %v1003, 4294901760
    %v1542 = vsub.f32 %v1003, %v1541
    %1543 = vmatprep.subr.mxu0 %v1542
    %v1544 = vand.u32 %v1002, 4294901760
    %v1545 = vsub.f32 %v1002, %v1544
    %1546 = vmatpush1.msra.mxu0 %v1545
    %1547 = vmatprep.subr.mxu0 0.0
    %1548 = vmatpush1.msra.mxu0 0.0
    %1549 = vmatprep.subr.mxu0 0.0
    %1550 = vmatpush1.msra.mxu0 0.0
    %1551 = vmatprep.subr.mxu0 0.0
    %1552 = vmatpush1.msra.mxu0 0.0
    %1553 = vmatprep.subr.mxu0 0.0
    %1554 = vmatpush1.msra.mxu0 0.0
    %1555 = vmatprep.subr.mxu0 0.0
    %1556 = vmatpush1.msra.mxu0 0.0
    %1557 = vmatprep.subr.mxu0 0.0
    %1558 = vmatpush1.msra.mxu0 0.0
    %1559 = vmatprep.subr.mxu0 0.0
    %1560 = vmatpush1.msra.mxu0 0.0
    %1561 = vmatprep.subr.mxu0 0.0
    %1562 = vmatpush1.msra.mxu0 0.0
    %1563 = vmatprep.subr.mxu0 0.0
    %1564 = vmatpush1.msra.mxu0 0.0
    %1565 = vmatprep.subr.mxu0 0.0
    %1566 = vmatpush1.msra.mxu0 0.0
    %1567 = vmatprep.subr.mxu0 0.0
    %1568 = vmatpush1.msra.mxu0 0.0
    %1569 = vmatprep.subr.mxu0 0.0
    %1570 = vmatpush1.msra.mxu0 0.0
    %1571 = vmatprep.subr.mxu0 0.0
    %1572 = vmatpush1.msra.mxu0 0.0
    %1573 = vmatprep.subr.mxu0 0.0
    %1574 = vmatpush1.msra.mxu0 0.0
    %1575 = vmatprep.subr.mxu0 0.0
    %1576 = vmatpush1.msra.mxu0 0.0
    %1577 = vmatprep.subr.mxu0 0.0
    %1578 = vmatpush1.msra.mxu0 0.0
    %1579 = vmatprep.subr.mxu0 0.0
    %1580 = vmatpush1.msra.mxu0 0.0
    %1581 = vmatprep.subr.mxu0 0.0
    %1582 = vmatpush1.msra.mxu0 0.0
    %1583 = vmatprep.subr.mxu0 0.0
    %1584 = vmatpush1.msra.mxu0 0.0
    %1585 = vmatprep.subr.mxu0 0.0
    %1586 = vmatpush1.msra.mxu0 0.0
    %1587 = vmatprep.subr.mxu0 0.0
    %1588 = vmatpush1.msra.mxu0 0.0
    %1589 = vmatprep.subr.mxu0 0.0
    %1590 = vmatpush1.msra.mxu0 0.0
    %1591 = vmatprep.subr.mxu0 0.0
    %1592 = vmatpush1.msra.mxu0 0.0
    %1593 = vmatprep.subr.mxu0 0.0
    %1594 = vmatpush1.msra.mxu0 0.0
    %1595 = vmatprep.subr.mxu0 0.0
    %1596 = vmatpush1.msra.mxu0 0.0
    %1597 = vmatprep.subr.mxu0 0.0
    %1598 = vmatpush1.msra.mxu0 0.0
    %1599 = vmatprep.subr.mxu0 0.0
    %1600 = vmatpush1.msra.mxu0 0.0
    %1601 = vmatprep.subr.mxu0 0.0
    %1602 = vmatpush1.msra.mxu0 0.0
    %1603 = vmatprep.subr.mxu0 0.0
    %1604 = vmatpush1.msra.mxu0 0.0
    %1605 = vmatprep.subr.mxu0 0.0
    %1606 = vmatpush1.msra.mxu0 0.0
    %1607 = vmatprep.subr.mxu0 0.0
    %1608 = vmatpush1.msra.mxu0 0.0
    %1609 = vmatprep.mubr.f32.mxu0 0.0
    %v1610 = vand.u32 %v1106, 4294901760
    %v1611 = vsub.f32 %v1106, %v1610
    %1612 = vmatmul.mubr.f32.gmra.mrb[0].mxu0 %v1611
    %v1613 = vpop.f32.mrb[0].mxu0
    %v1614 = vadd.f32 %v1446, %v1613
    %v1615 = vpop.f32.mrb[0].mxu0
    %v1616 = vadd.f32 %v1448, %v1615
    %1617 = vmatprep.mubr.f32.mxu0 0.0
    %v1618 = vand.u32 %v1109, 4294901760
    %v1619 = vsub.f32 %v1109, %v1618
    %1620 = vmatmul.mubr.f32.gmra.mrb[0].mxu0 %v1619
    %v1621 = vpop.f32.mrb[0].mxu0
    %v1622 = vadd.f32 %v1453, %v1621
    %v1623 = vpop.f32.mrb[0].mxu0
    %v1624 = vadd.f32 %v1455, %v1623
    %1625 = vmatprep.mubr.f32.mxu0 0.0
    %v1626 = vand.u32 %v1112, 4294901760
    %v1627 = vsub.f32 %v1112, %v1626
    %1628 = vmatmul.mubr.f32.gmra.mrb[0].mxu0 %v1627
    %v1629 = vpop.f32.mrb[0].mxu0
    %v1630 = vadd.f32 %v1460, %v1629
    %v1631 = vpop.f32.mrb[0].mxu0
    %v1632 = vadd.f32 %v1462, %v1631
    %1633 = vmatprep.mubr.f32.mxu0 0.0
    %v1634 = vand.u32 %v1115, 4294901760
    %v1635 = vsub.f32 %v1115, %v1634
    %1636 = vmatmul.mubr.f32.gmra.mrb[0].mxu0 %v1635
    %v1637 = vpop.f32.mrb[0].mxu0
    %v1638 = vadd.f32 %v1467, %v1637
    %v1639 = vpop.f32.mrb[0].mxu0
    %v1640 = vadd.f32 %v1469, %v1639
    %1641 = vmatprep.mubr.f32.mxu0 0.0
    %v1642 = vand.u32 %v1118, 4294901760
    %v1643 = vsub.f32 %v1118, %v1642
    %1644 = vmatmul.mubr.f32.gmra.mrb[0].mxu0 %v1643
    %v1645 = vpop.f32.mrb[0].mxu0
    %v1646 = vadd.f32 %v1474, %v1645
    %v1647 = vpop.f32.mrb[0].mxu0
    %v1648 = vadd.f32 %v1476, %v1647
    %1649 = vmatprep.mubr.f32.mxu0 0.0
    %v1650 = vand.u32 %v1121, 4294901760
    %v1651 = vsub.f32 %v1121, %v1650
    %1652 = vmatmul.mubr.f32.gmra.mrb[0].mxu0 %v1651
    %v1653 = vpop.f32.mrb[0].mxu0
    %v1654 = vadd.f32 %v1481, %v1653
    %v1655 = vpop.f32.mrb[0].mxu0
    %v1656 = vadd.f32 %v1483, %v1655
    %1657 = vmatprep.mubr.f32.mxu0 0.0
    %v1658 = vand.u32 %v1124, 4294901760
    %v1659 = vsub.f32 %v1124, %v1658
    %1660 = vmatmul.mubr.f32.gmra.mrb[0].mxu0 %v1659
    %v1661 = vpop.f32.mrb[0].mxu0
    %v1662 = vadd.f32 %v1488, %v1661
    %v1663 = vpop.f32.mrb[0].mxu0
    %v1664 = vadd.f32 %v1490, %v1663
    %1665 = vmatprep.mubr.f32.mxu0 0.0
    %v1666 = vand.u32 %v1127, 4294901760
    %v1667 = vsub.f32 %v1127, %v1666
    %1668 = vmatmul.mubr.f32.gmra.mrb[0].mxu0 %v1667
    %v1669 = vpop.f32.mrb[0].mxu0
    %v1670 = vadd.f32 %v1495, %v1669
    %v1671 = vpop.f32.mrb[0].mxu0
    %v1672 = vadd.f32 %v1497, %v1671
    %1673 = vmatprep.mubr.f32.mxu0 0.0
    %v1674 = vand.u32 %v1130, 4294901760
    %v1675 = vsub.f32 %v1130, %v1674
    %1676 = vmatmul.mubr.f32.gmra.mrb[0].mxu0 %v1675
    %v1677 = vpop.f32.mrb[0].mxu0
    %v1678 = vadd.f32 %v1502, %v1677
    %v1679 = vpop.f32.mrb[0].mxu0
    %v1680 = vadd.f32 %v1504, %v1679
    %1681 = vmatprep.mubr.f32.mxu0 0.0
    %v1682 = vand.u32 %v1133, 4294901760
    %v1683 = vsub.f32 %v1133, %v1682
    %1684 = vmatmul.mubr.f32.gmra.mrb[0].mxu0 %v1683
    %v1685 = vpop.f32.mrb[0].mxu0
    %v1686 = vadd.f32 %v1509, %v1685
    %v1687 = vpop.f32.mrb[0].mxu0
    %v1688 = vadd.f32 %v1511, %v1687
    %1689 = vmatprep.mubr.f32.mxu0 0.0
    %v1690 = vand.u32 %v1136, 4294901760
    %v1691 = vsub.f32 %v1136, %v1690
    %1692 = vmatmul.mubr.f32.gmra.mrb[0].mxu0 %v1691
    %v1693 = vpop.f32.mrb[0].mxu0
    %v1694 = vadd.f32 %v1516, %v1693
    %v1695 = vpop.f32.mrb[0].mxu0
    %v1696 = vadd.f32 %v1518, %v1695
    %1697 = vmatprep.mubr.f32.mxu0 0.0
    %v1698 = vand.u32 %v1139, 4294901760
    %v1699 = vsub.f32 %v1139, %v1698
    %1700 = vmatmul.mubr.f32.gmra.mrb[0].mxu0 %v1699
    %v1701 = vpop.f32.mrb[0].mxu0
    %v1702 = vadd.f32 %v1523, %v1701
    %v1703 = vpop.f32.mrb[0].mxu0
    %v1704 = vadd.f32 %v1525, %v1703
    %1705 = vmatprep.mubr.f32.mxu0 0.0
    %v1706 = vand.u32 %v1142, 4294901760
    %v1707 = vsub.f32 %v1142, %v1706
    %1708 = vmatmul.mubr.f32.gmra.mrb[0].mxu0 %v1707
    %v1709 = vpop.f32.mrb[0].mxu0
    %v1710 = vadd.f32 %v1530, %v1709
    %v1711 = vpop.f32.mrb[0].mxu0
    %v1712 = vadd.f32 %v1532, %v1711
    %1713 = vmatprep.mubr.f32.mxu0 0.0
    %v1714 = vand.u32 %v1145, 4294901760
    %v1715 = vsub.f32 %v1145, %v1714
    %1716 = vmatmul.mubr.f32.gmra.mrb[0].mxu0 %v1715
    %v1717 = vpop.f32.mrb[0].mxu0
    %v1718 = vadd.f32 %v1537, %v1717
    %v1719 = vpop.f32.mrb[0].mxu0
    %v1720 = vadd.f32 %v1539, %v1719
    %1721 = vdwg.mxu0
    %v1722 = vand.u32 %v1003, 4294901760
    %1723 = vmatprep.subr.mxu0 %v1722
    %v1724 = vand.u32 %v1002, 4294901760
    %1725 = vmatpush1.msra.mxu0 %v1724
    %1726 = vmatprep.subr.mxu0 0.0
    %1727 = vmatpush1.msra.mxu0 0.0
    %1728 = vmatprep.subr.mxu0 0.0
    %1729 = vmatpush1.msra.mxu0 0.0
    %1730 = vmatprep.subr.mxu0 0.0
    %1731 = vmatpush1.msra.mxu0 0.0
    %1732 = vmatprep.subr.mxu0 0.0
    %1733 = vmatpush1.msra.mxu0 0.0
    %1734 = vmatprep.subr.mxu0 0.0
    %1735 = vmatpush1.msra.mxu0 0.0
    %1736 = vmatprep.subr.mxu0 0.0
    %1737 = vmatpush1.msra.mxu0 0.0
    %1738 = vmatprep.subr.mxu0 0.0
    %1739 = vmatpush1.msra.mxu0 0.0
    %1740 = vmatprep.subr.mxu0 0.0
    %1741 = vmatpush1.msra.mxu0 0.0
    %1742 = vmatprep.subr.mxu0 0.0
    %1743 = vmatpush1.msra.mxu0 0.0
    %1744 = vmatprep.subr.mxu0 0.0
    %1745 = vmatpush1.msra.mxu0 0.0
    %1746 = vmatprep.subr.mxu0 0.0
    %1747 = vmatpush1.msra.mxu0 0.0
    %1748 = vmatprep.subr.mxu0 0.0
    %1749 = vmatpush1.msra.mxu0 0.0
    %1750 = vmatprep.subr.mxu0 0.0
    %1751 = vmatpush1.msra.mxu0 0.0
    %1752 = vmatprep.subr.mxu0 0.0
    %1753 = vmatpush1.msra.mxu0 0.0
    %1754 = vmatprep.subr.mxu0 0.0
    %1755 = vmatpush1.msra.mxu0 0.0
    %1756 = vmatprep.subr.mxu0 0.0
    %1757 = vmatpush1.msra.mxu0 0.0
    %1758 = vmatprep.subr.mxu0 0.0
    %1759 = vmatpush1.msra.mxu0 0.0
    %1760 = vmatprep.subr.mxu0 0.0
    %1761 = vmatpush1.msra.mxu0 0.0
    %1762 = vmatprep.subr.mxu0 0.0
    %1763 = vmatpush1.msra.mxu0 0.0
    %1764 = vmatprep.subr.mxu0 0.0
    %1765 = vmatpush1.msra.mxu0 0.0
    %1766 = vmatprep.subr.mxu0 0.0
    %1767 = vmatpush1.msra.mxu0 0.0
    %1768 = vmatprep.subr.mxu0 0.0
    %1769 = vmatpush1.msra.mxu0 0.0
    %1770 = vmatprep.subr.mxu0 0.0
    %1771 = vmatpush1.msra.mxu0 0.0
    %1772 = vmatprep.subr.mxu0 0.0
    %1773 = vmatpush1.msra.mxu0 0.0
    %1774 = vmatprep.subr.mxu0 0.0
    %1775 = vmatpush1.msra.mxu0 0.0
    %1776 = vmatprep.subr.mxu0 0.0
    %1777 = vmatpush1.msra.mxu0 0.0
    %1778 = vmatprep.subr.mxu0 0.0
    %1779 = vmatpush1.msra.mxu0 0.0
    %1780 = vmatprep.subr.mxu0 0.0
    %1781 = vmatpush1.msra.mxu0 0.0
    %1782 = vmatprep.subr.mxu0 0.0
    %1783 = vmatpush1.msra.mxu0 0.0
    %1784 = vmatprep.subr.mxu0 0.0
    %1785 = vmatpush1.msra.mxu0 0.0
    %1786 = vmatprep.subr.mxu0 0.0
    %1787 = vmatpush1.msra.mxu0 0.0
    %1788 = vmatprep.mubr.f32.mxu0 0.0
    %v1789 = vand.u32 %v1106, 4294901760
    %v1790 = vsub.f32 %v1106, %v1789
    %v1791 = vand.u32 %v1790, 4294901760
    %1792 = vmatmul.mubr.f32.gmra.mrb[0].mxu0 %v1791
    %v1793 = vpop.f32.mrb[0].mxu0
    %v1794 = vadd.f32 %v1614, %v1793
    %v1795 = vpop.f32.mrb[0].mxu0
    %v1796 = vadd.f32 %v1616, %v1795
    %1797 = vmatprep.mubr.f32.mxu0 0.0
    %v1798 = vand.u32 %v1109, 4294901760
    %v1799 = vsub.f32 %v1109, %v1798
    %v1800 = vand.u32 %v1799, 4294901760
    %1801 = vmatmul.mubr.f32.gmra.mrb[0].mxu0 %v1800
    %v1802 = vpop.f32.mrb[0].mxu0
    %v1803 = vadd.f32 %v1622, %v1802
    %v1804 = vpop.f32.mrb[0].mxu0
    %v1805 = vadd.f32 %v1624, %v1804
    %1806 = vmatprep.mubr.f32.mxu0 0.0
    %v1807 = vand.u32 %v1112, 4294901760
    %v1808 = vsub.f32 %v1112, %v1807
    %v1809 = vand.u32 %v1808, 4294901760
    %1810 = vmatmul.mubr.f32.gmra.mrb[0].mxu0 %v1809
    %v1811 = vpop.f32.mrb[0].mxu0
    %v1812 = vadd.f32 %v1630, %v1811
    %v1813 = vpop.f32.mrb[0].mxu0
    %v1814 = vadd.f32 %v1632, %v1813
    %1815 = vmatprep.mubr.f32.mxu0 0.0
    %v1816 = vand.u32 %v1115, 4294901760
    %v1817 = vsub.f32 %v1115, %v1816
    %v1818 = vand.u32 %v1817, 4294901760
    %1819 = vmatmul.mubr.f32.gmra.mrb[0].mxu0 %v1818
    %v1820 = vpop.f32.mrb[0].mxu0
    %v1821 = vadd.f32 %v1638, %v1820
    %v1822 = vpop.f32.mrb[0].mxu0
    %v1823 = vadd.f32 %v1640, %v1822
    %1824 = vmatprep.mubr.f32.mxu0 0.0
    %v1825 = vand.u32 %v1118, 4294901760
    %v1826 = vsub.f32 %v1118, %v1825
    %v1827 = vand.u32 %v1826, 4294901760
    %1828 = vmatmul.mubr.f32.gmra.mrb[0].mxu0 %v1827
    %v1829 = vpop.f32.mrb[0].mxu0
    %v1830 = vadd.f32 %v1646, %v1829
    %v1831 = vpop.f32.mrb[0].mxu0
    %v1832 = vadd.f32 %v1648, %v1831
    %1833 = vmatprep.mubr.f32.mxu0 0.0
    %v1834 = vand.u32 %v1121, 4294901760
    %v1835 = vsub.f32 %v1121, %v1834
    %v1836 = vand.u32 %v1835, 4294901760
    %1837 = vmatmul.mubr.f32.gmra.mrb[0].mxu0 %v1836
    %v1838 = vpop.f32.mrb[0].mxu0
    %v1839 = vadd.f32 %v1654, %v1838
    %v1840 = vpop.f32.mrb[0].mxu0
    %v1841 = vadd.f32 %v1656, %v1840
    %1842 = vmatprep.mubr.f32.mxu0 0.0
    %v1843 = vand.u32 %v1124, 4294901760
    %v1844 = vsub.f32 %v1124, %v1843
    %v1845 = vand.u32 %v1844, 4294901760
    %1846 = vmatmul.mubr.f32.gmra.mrb[0].mxu0 %v1845
    %v1847 = vpop.f32.mrb[0].mxu0
    %v1848 = vadd.f32 %v1662, %v1847
    %v1849 = vpop.f32.mrb[0].mxu0
    %v1850 = vadd.f32 %v1664, %v1849
    %1851 = vmatprep.mubr.f32.mxu0 0.0
    %v1852 = vand.u32 %v1127, 4294901760
    %v1853 = vsub.f32 %v1127, %v1852
    %v1854 = vand.u32 %v1853, 4294901760
    %1855 = vmatmul.mubr.f32.gmra.mrb[0].mxu0 %v1854
    %v1856 = vpop.f32.mrb[0].mxu0
    %v1857 = vadd.f32 %v1670, %v1856
    %v1858 = vpop.f32.mrb[0].mxu0
    %v1859 = vadd.f32 %v1672, %v1858
    %1860 = vmatprep.mubr.f32.mxu0 0.0
    %v1861 = vand.u32 %v1130, 4294901760
    %v1862 = vsub.f32 %v1130, %v1861
    %v1863 = vand.u32 %v1862, 4294901760
    %1864 = vmatmul.mubr.f32.gmra.mrb[0].mxu0 %v1863
    %v1865 = vpop.f32.mrb[0].mxu0
    %v1866 = vadd.f32 %v1678, %v1865
    %v1867 = vpop.f32.mrb[0].mxu0
    %v1868 = vadd.f32 %v1680, %v1867
    %1869 = vmatprep.mubr.f32.mxu0 0.0
    %v1870 = vand.u32 %v1133, 4294901760
    %v1871 = vsub.f32 %v1133, %v1870
    %v1872 = vand.u32 %v1871, 4294901760
    %1873 = vmatmul.mubr.f32.gmra.mrb[0].mxu0 %v1872
    %v1874 = vpop.f32.mrb[0].mxu0
    %v1875 = vadd.f32 %v1686, %v1874
    %v1876 = vpop.f32.mrb[0].mxu0
    %v1877 = vadd.f32 %v1688, %v1876
    %1878 = vmatprep.mubr.f32.mxu0 0.0
    %v1879 = vand.u32 %v1136, 4294901760
    %v1880 = vsub.f32 %v1136, %v1879
    %v1881 = vand.u32 %v1880, 4294901760
    %1882 = vmatmul.mubr.f32.gmra.mrb[0].mxu0 %v1881
    %v1883 = vpop.f32.mrb[0].mxu0
    %v1884 = vadd.f32 %v1694, %v1883
    %v1885 = vpop.f32.mrb[0].mxu0
    %v1886 = vadd.f32 %v1696, %v1885
    %1887 = vmatprep.mubr.f32.mxu0 0.0
    %v1888 = vand.u32 %v1139, 4294901760
    %v1889 = vsub.f32 %v1139, %v1888
    %v1890 = vand.u32 %v1889, 4294901760
    %1891 = vmatmul.mubr.f32.gmra.mrb[0].mxu0 %v1890
    %v1892 = vpop.f32.mrb[0].mxu0
    %v1893 = vadd.f32 %v1702, %v1892
    %v1894 = vpop.f32.mrb[0].mxu0
    %v1895 = vadd.f32 %v1704, %v1894
    %1896 = vmatprep.mubr.f32.mxu0 0.0
    %v1897 = vand.u32 %v1142, 4294901760
    %v1898 = vsub.f32 %v1142, %v1897
    %v1899 = vand.u32 %v1898, 4294901760
    %1900 = vmatmul.mubr.f32.gmra.mrb[0].mxu0 %v1899
    %v1901 = vpop.f32.mrb[0].mxu0
    %v1902 = vadd.f32 %v1710, %v1901
    %v1903 = vpop.f32.mrb[0].mxu0
    %v1904 = vadd.f32 %v1712, %v1903
    %1905 = vmatprep.mubr.f32.mxu0 0.0
    %v1906 = vand.u32 %v1145, 4294901760
    %v1907 = vsub.f32 %v1145, %v1906
    %v1908 = vand.u32 %v1907, 4294901760
    %1909 = vmatmul.mubr.f32.gmra.mrb[0].mxu0 %v1908
    %v1910 = vpop.f32.mrb[0].mxu0
    %v1911 = vadd.f32 %v1718, %v1910
    %v1912 = vpop.f32.mrb[0].mxu0
    %v1913 = vadd.f32 %v1720, %v1912
    %1914 = vdwg.mxu0
    %v1915 = vand.u32 %v1003, 4294901760
    %v1916 = vsub.f32 %v1003, %v1915
    %v1917 = vand.u32 %v1916, 4294901760
    %1918 = vmatprep.subr.mxu0 %v1917
    %v1919 = vand.u32 %v1002, 4294901760
    %v1920 = vsub.f32 %v1002, %v1919
    %v1921 = vand.u32 %v1920, 4294901760
    %1922 = vmatpush1.msra.mxu0 %v1921
    %1923 = vmatprep.subr.mxu0 0.0
    %1924 = vmatpush1.msra.mxu0 0.0
    %1925 = vmatprep.subr.mxu0 0.0
    %1926 = vmatpush1.msra.mxu0 0.0
    %1927 = vmatprep.subr.mxu0 0.0
    %1928 = vmatpush1.msra.mxu0 0.0
    %1929 = vmatprep.subr.mxu0 0.0
    %1930 = vmatpush1.msra.mxu0 0.0
    %1931 = vmatprep.subr.mxu0 0.0
    %1932 = vmatpush1.msra.mxu0 0.0
    %1933 = vmatprep.subr.mxu0 0.0
    %1934 = vmatpush1.msra.mxu0 0.0
    %1935 = vmatprep.subr.mxu0 0.0
    %1936 = vmatpush1.msra.mxu0 0.0
    %1937 = vmatprep.subr.mxu0 0.0
    %1938 = vmatpush1.msra.mxu0 0.0
    %1939 = vmatprep.subr.mxu0 0.0
    %1940 = vmatpush1.msra.mxu0 0.0
    %1941 = vmatprep.subr.mxu0 0.0
    %1942 = vmatpush1.msra.mxu0 0.0
    %1943 = vmatprep.subr.mxu0 0.0
    %1944 = vmatpush1.msra.mxu0 0.0
    %1945 = vmatprep.subr.mxu0 0.0
    %1946 = vmatpush1.msra.mxu0 0.0
    %1947 = vmatprep.subr.mxu0 0.0
    %1948 = vmatpush1.msra.mxu0 0.0
    %1949 = vmatprep.subr.mxu0 0.0
    %1950 = vmatpush1.msra.mxu0 0.0
    %1951 = vmatprep.subr.mxu0 0.0
    %1952 = vmatpush1.msra.mxu0 0.0
    %1953 = vmatprep.subr.mxu0 0.0
    %1954 = vmatpush1.msra.mxu0 0.0
    %1955 = vmatprep.subr.mxu0 0.0
    %1956 = vmatpush1.msra.mxu0 0.0
    %1957 = vmatprep.subr.mxu0 0.0
    %1958 = vmatpush1.msra.mxu0 0.0
    %1959 = vmatprep.subr.mxu0 0.0
    %1960 = vmatpush1.msra.mxu0 0.0
    %1961 = vmatprep.subr.mxu0 0.0
    %1962 = vmatpush1.msra.mxu0 0.0
    %1963 = vmatprep.subr.mxu0 0.0
    %1964 = vmatpush1.msra.mxu0 0.0
    %1965 = vmatprep.subr.mxu0 0.0
    %1966 = vmatpush1.msra.mxu0 0.0
    %1967 = vmatprep.subr.mxu0 0.0
    %1968 = vmatpush1.msra.mxu0 0.0
    %1969 = vmatprep.subr.mxu0 0.0
    %1970 = vmatpush1.msra.mxu0 0.0
    %1971 = vmatprep.subr.mxu0 0.0
    %1972 = vmatpush1.msra.mxu0 0.0
    %1973 = vmatprep.subr.mxu0 0.0
    %1974 = vmatpush1.msra.mxu0 0.0
    %1975 = vmatprep.subr.mxu0 0.0
    %1976 = vmatpush1.msra.mxu0 0.0
    %1977 = vmatprep.subr.mxu0 0.0
    %1978 = vmatpush1.msra.mxu0 0.0
    %1979 = vmatprep.subr.mxu0 0.0
    %1980 = vmatpush1.msra.mxu0 0.0
    %1981 = vmatprep.subr.mxu0 0.0
    %1982 = vmatpush1.msra.mxu0 0.0
    %1983 = vmatprep.subr.mxu0 0.0
    %1984 = vmatpush1.msra.mxu0 0.0
    %1985 = vmatprep.mubr.f32.mxu0 0.0
    %v1986 = vand.u32 %v1106, 4294901760
    %1987 = vmatmul.mubr.f32.gmra.mrb[0].mxu0 %v1986
    %v1988 = vpop.f32.mrb[0].mxu0
    %v1989 = vadd.f32 %v1794, %v1988
    %v1990 = vpop.f32.mrb[0].mxu0
    %v1991 = vadd.f32 %v1796, %v1990
    %1992 = vmatprep.mubr.f32.mxu0 0.0
    %v1993 = vand.u32 %v1109, 4294901760
    %1994 = vmatmul.mubr.f32.gmra.mrb[0].mxu0 %v1993
    %v1995 = vpop.f32.mrb[0].mxu0
    %v1996 = vadd.f32 %v1803, %v1995
    %v1997 = vpop.f32.mrb[0].mxu0
    %v1998 = vadd.f32 %v1805, %v1997
    %1999 = vmatprep.mubr.f32.mxu0 0.0
    %v2000 = vand.u32 %v1112, 4294901760
    %2001 = vmatmul.mubr.f32.gmra.mrb[0].mxu0 %v2000
    %v2002 = vpop.f32.mrb[0].mxu0
    %v2003 = vadd.f32 %v1812, %v2002
    %v2004 = vpop.f32.mrb[0].mxu0
    %v2005 = vadd.f32 %v1814, %v2004
    %2006 = vmatprep.mubr.f32.mxu0 0.0
    %v2007 = vand.u32 %v1115, 4294901760
    %2008 = vmatmul.mubr.f32.gmra.mrb[0].mxu0 %v2007
    %v2009 = vpop.f32.mrb[0].mxu0
    %v2010 = vadd.f32 %v1821, %v2009
    %v2011 = vpop.f32.mrb[0].mxu0
    %v2012 = vadd.f32 %v1823, %v2011
    %2013 = vmatprep.mubr.f32.mxu0 0.0
    %v2014 = vand.u32 %v1118, 4294901760
    %2015 = vmatmul.mubr.f32.gmra.mrb[0].mxu0 %v2014
    %v2016 = vpop.f32.mrb[0].mxu0
    %v2017 = vadd.f32 %v1830, %v2016
    %v2018 = vpop.f32.mrb[0].mxu0
    %v2019 = vadd.f32 %v1832, %v2018
    %2020 = vmatprep.mubr.f32.mxu0 0.0
    %v2021 = vand.u32 %v1121, 4294901760
    %2022 = vmatmul.mubr.f32.gmra.mrb[0].mxu0 %v2021
    %v2023 = vpop.f32.mrb[0].mxu0
    %v2024 = vadd.f32 %v1839, %v2023
    %v2025 = vpop.f32.mrb[0].mxu0
    %v2026 = vadd.f32 %v1841, %v2025
    %2027 = vmatprep.mubr.f32.mxu0 0.0
    %v2028 = vand.u32 %v1124, 4294901760
    %2029 = vmatmul.mubr.f32.gmra.mrb[0].mxu0 %v2028
    %v2030 = vpop.f32.mrb[0].mxu0
    %v2031 = vadd.f32 %v1848, %v2030
    %v2032 = vpop.f32.mrb[0].mxu0
    %v2033 = vadd.f32 %v1850, %v2032
    %2034 = vmatprep.mubr.f32.mxu0 0.0
    %v2035 = vand.u32 %v1127, 4294901760
    %2036 = vmatmul.mubr.f32.gmra.mrb[0].mxu0 %v2035
    %v2037 = vpop.f32.mrb[0].mxu0
    %v2038 = vadd.f32 %v1857, %v2037
    %v2039 = vpop.f32.mrb[0].mxu0
    %v2040 = vadd.f32 %v1859, %v2039
    %2041 = vmatprep.mubr.f32.mxu0 0.0
    %v2042 = vand.u32 %v1130, 4294901760
    %2043 = vmatmul.mubr.f32.gmra.mrb[0].mxu0 %v2042
    %v2044 = vpop.f32.mrb[0].mxu0
    %v2045 = vadd.f32 %v1866, %v2044
    %v2046 = vpop.f32.mrb[0].mxu0
    %v2047 = vadd.f32 %v1868, %v2046
    %2048 = vmatprep.mubr.f32.mxu0 0.0
    %v2049 = vand.u32 %v1133, 4294901760
    %2050 = vmatmul.mubr.f32.gmra.mrb[0].mxu0 %v2049
    %v2051 = vpop.f32.mrb[0].mxu0
    %v2052 = vadd.f32 %v1875, %v2051
    %v2053 = vpop.f32.mrb[0].mxu0
    %v2054 = vadd.f32 %v1877, %v2053
    %2055 = vmatprep.mubr.f32.mxu0 0.0
    %v2056 = vand.u32 %v1136, 4294901760
    %2057 = vmatmul.mubr.f32.gmra.mrb[0].mxu0 %v2056
    %v2058 = vpop.f32.mrb[0].mxu0
    %v2059 = vadd.f32 %v1884, %v2058
    %v2060 = vpop.f32.mrb[0].mxu0
    %v2061 = vadd.f32 %v1886, %v2060
    %2062 = vmatprep.mubr.f32.mxu0 0.0
    %v2063 = vand.u32 %v1139, 4294901760
    %2064 = vmatmul.mubr.f32.gmra.mrb[0].mxu0 %v2063
    %v2065 = vpop.f32.mrb[0].mxu0
    %v2066 = vadd.f32 %v1893, %v2065
    %v2067 = vpop.f32.mrb[0].mxu0
    %v2068 = vadd.f32 %v1895, %v2067
    %2069 = vmatprep.mubr.f32.mxu0 0.0
    %v2070 = vand.u32 %v1142, 4294901760
    %2071 = vmatmul.mubr.f32.gmra.mrb[0].mxu0 %v2070
    %v2072 = vpop.f32.mrb[0].mxu0
    %v2073 = vadd.f32 %v1902, %v2072
    %v2074 = vpop.f32.mrb[0].mxu0
    %v2075 = vadd.f32 %v1904, %v2074
    %2076 = vmatprep.mubr.f32.mxu0 0.0
    %v2077 = vand.u32 %v1145, 4294901760
    %2078 = vmatmul.mubr.f32.gmra.mrb[0].mxu0 %v2077
    %v2079 = vpop.f32.mrb[0].mxu0
    %v2080 = vadd.f32 %v1911, %v2079
    %v2081 = vpop.f32.mrb[0].mxu0
    %v2082 = vadd.f32 %v1913, %v2081
    %2083 = vdwg.mxu0
    %v2084 = vand.u32 %v1003, 4294901760
    %2085 = vmatprep.subr.mxu0 %v2084
    %v2086 = vand.u32 %v1002, 4294901760
    %2087 = vmatpush1.msra.mxu0 %v2086
    %2088 = vmatprep.subr.mxu0 0.0
    %2089 = vmatpush1.msra.mxu0 0.0
    %2090 = vmatprep.subr.mxu0 0.0
    %2091 = vmatpush1.msra.mxu0 0.0
    %2092 = vmatprep.subr.mxu0 0.0
    %2093 = vmatpush1.msra.mxu0 0.0
    %2094 = vmatprep.subr.mxu0 0.0
    %2095 = vmatpush1.msra.mxu0 0.0
    %2096 = vmatprep.subr.mxu0 0.0
    %2097 = vmatpush1.msra.mxu0 0.0
    %2098 = vmatprep.subr.mxu0 0.0
    %2099 = vmatpush1.msra.mxu0 0.0
    %2100 = vmatprep.subr.mxu0 0.0
    %2101 = vmatpush1.msra.mxu0 0.0
    %2102 = vmatprep.subr.mxu0 0.0
    %2103 = vmatpush1.msra.mxu0 0.0
    %2104 = vmatprep.subr.mxu0 0.0
    %2105 = vmatpush1.msra.mxu0 0.0
    %2106 = vmatprep.subr.mxu0 0.0
    %2107 = vmatpush1.msra.mxu0 0.0
    %2108 = vmatprep.subr.mxu0 0.0
    %2109 = vmatpush1.msra.mxu0 0.0
    %2110 = vmatprep.subr.mxu0 0.0
    %2111 = vmatpush1.msra.mxu0 0.0
    %2112 = vmatprep.subr.mxu0 0.0
    %2113 = vmatpush1.msra.mxu0 0.0
    %2114 = vmatprep.subr.mxu0 0.0
    %2115 = vmatpush1.msra.mxu0 0.0
    %2116 = vmatprep.subr.mxu0 0.0
    %2117 = vmatpush1.msra.mxu0 0.0
    %2118 = vmatprep.subr.mxu0 0.0
    %2119 = vmatpush1.msra.mxu0 0.0
    %2120 = vmatprep.subr.mxu0 0.0
    %2121 = vmatpush1.msra.mxu0 0.0
    %2122 = vmatprep.subr.mxu0 0.0
    %2123 = vmatpush1.msra.mxu0 0.0
    %2124 = vmatprep.subr.mxu0 0.0
    %2125 = vmatpush1.msra.mxu0 0.0
    %2126 = vmatprep.subr.mxu0 0.0
    %2127 = vmatpush1.msra.mxu0 0.0
    %2128 = vmatprep.subr.mxu0 0.0
    %2129 = vmatpush1.msra.mxu0 0.0
    %2130 = vmatprep.subr.mxu0 0.0
    %2131 = vmatpush1.msra.mxu0 0.0
    %2132 = vmatprep.subr.mxu0 0.0
    %2133 = vmatpush1.msra.mxu0 0.0
    %2134 = vmatprep.subr.mxu0 0.0
    %2135 = vmatpush1.msra.mxu0 0.0
    %2136 = vmatprep.subr.mxu0 0.0
    %2137 = vmatpush1.msra.mxu0 0.0
    %2138 = vmatprep.subr.mxu0 0.0
    %2139 = vmatpush1.msra.mxu0 0.0
    %2140 = vmatprep.subr.mxu0 0.0
    %2141 = vmatpush1.msra.mxu0 0.0
    %2142 = vmatprep.subr.mxu0 0.0
    %2143 = vmatpush1.msra.mxu0 0.0
    %2144 = vmatprep.subr.mxu0 0.0
    %2145 = vmatpush1.msra.mxu0 0.0
    %2146 = vmatprep.subr.mxu0 0.0
    %2147 = vmatpush1.msra.mxu0 0.0
    %2148 = vmatprep.subr.mxu0 0.0
    %2149 = vmatpush1.msra.mxu0 0.0
    %2150 = vmatprep.mubr.f32.mxu0 0.0
    %v2151 = vand.u32 %v1106, 4294901760
    %2152 = vmatmul.mubr.f32.gmra.mrb[0].mxu0 %v2151
    %v2153 = vpop.f32.mrb[0].mxu0
    %v2154 = vadd.f32 %v1989, %v2153
    %v2155 = vpop.f32.mrb[0].mxu0
    %v2156 = vadd.f32 %v1991, %v2155
    %2157 = vmatprep.mubr.f32.mxu0 0.0
    %v2158 = vand.u32 %v1109, 4294901760
    %2159 = vmatmul.mubr.f32.gmra.mrb[0].mxu0 %v2158
    %v2160 = vpop.f32.mrb[0].mxu0
    %v2161 = vadd.f32 %v1996, %v2160
    %v2162 = vpop.f32.mrb[0].mxu0
    %v2163 = vadd.f32 %v1998, %v2162
    %2164 = vmatprep.mubr.f32.mxu0 0.0
    %v2165 = vand.u32 %v1112, 4294901760
    %2166 = vmatmul.mubr.f32.gmra.mrb[0].mxu0 %v2165
    %v2167 = vpop.f32.mrb[0].mxu0
    %v2168 = vadd.f32 %v2003, %v2167
    %v2169 = vpop.f32.mrb[0].mxu0
    %v2170 = vadd.f32 %v2005, %v2169
    %2171 = vmatprep.mubr.f32.mxu0 0.0
    %v2172 = vand.u32 %v1115, 4294901760
    %2173 = vmatmul.mubr.f32.gmra.mrb[0].mxu0 %v2172
    %v2174 = vpop.f32.mrb[0].mxu0
    %v2175 = vadd.f32 %v2010, %v2174
    %v2176 = vpop.f32.mrb[0].mxu0
    %v2177 = vadd.f32 %v2012, %v2176
    %2178 = vmatprep.mubr.f32.mxu0 0.0
    %v2179 = vand.u32 %v1118, 4294901760
    %2180 = vmatmul.mubr.f32.gmra.mrb[0].mxu0 %v2179
    %v2181 = vpop.f32.mrb[0].mxu0
    %v2182 = vadd.f32 %v2017, %v2181
    %v2183 = vpop.f32.mrb[0].mxu0
    %v2184 = vadd.f32 %v2019, %v2183
    %2185 = vmatprep.mubr.f32.mxu0 0.0
    %v2186 = vand.u32 %v1121, 4294901760
    %2187 = vmatmul.mubr.f32.gmra.mrb[0].mxu0 %v2186
    %v2188 = vpop.f32.mrb[0].mxu0
    %v2189 = vadd.f32 %v2024, %v2188
    %v2190 = vpop.f32.mrb[0].mxu0
    %v2191 = vadd.f32 %v2026, %v2190
    %2192 = vmatprep.mubr.f32.mxu0 0.0
    %v2193 = vand.u32 %v1124, 4294901760
    %2194 = vmatmul.mubr.f32.gmra.mrb[0].mxu0 %v2193
    %v2195 = vpop.f32.mrb[0].mxu0
    %v2196 = vadd.f32 %v2031, %v2195
    %v2197 = vpop.f32.mrb[0].mxu0
    %v2198 = vadd.f32 %v2033, %v2197
    %2199 = vmatprep.mubr.f32.mxu0 0.0
    %v2200 = vand.u32 %v1127, 4294901760
    %2201 = vmatmul.mubr.f32.gmra.mrb[0].mxu0 %v2200
    %v2202 = vpop.f32.mrb[0].mxu0
    %v2203 = vadd.f32 %v2038, %v2202
    %v2204 = vpop.f32.mrb[0].mxu0
    %v2205 = vadd.f32 %v2040, %v2204
    %2206 = vmatprep.mubr.f32.mxu0 0.0
    %v2207 = vand.u32 %v1130, 4294901760
    %2208 = vmatmul.mubr.f32.gmra.mrb[0].mxu0 %v2207
    %v2209 = vpop.f32.mrb[0].mxu0
    %v2210 = vadd.f32 %v2045, %v2209
    %v2211 = vpop.f32.mrb[0].mxu0
    %v2212 = vadd.f32 %v2047, %v2211
    %2213 = vmatprep.mubr.f32.mxu0 0.0
    %v2214 = vand.u32 %v1133, 4294901760
    %2215 = vmatmul.mubr.f32.gmra.mrb[0].mxu0 %v2214
    %v2216 = vpop.f32.mrb[0].mxu0
    %v2217 = vadd.f32 %v2052, %v2216
    %v2218 = vpop.f32.mrb[0].mxu0
    %v2219 = vadd.f32 %v2054, %v2218
    %2220 = vmatprep.mubr.f32.mxu0 0.0
    %v2221 = vand.u32 %v1136, 4294901760
    %2222 = vmatmul.mubr.f32.gmra.mrb[0].mxu0 %v2221
    %v2223 = vpop.f32.mrb[0].mxu0
    %v2224 = vadd.f32 %v2059, %v2223
    %v2225 = vpop.f32.mrb[0].mxu0
    %v2226 = vadd.f32 %v2061, %v2225
    %2227 = vmatprep.mubr.f32.mxu0 0.0
    %v2228 = vand.u32 %v1139, 4294901760
    %2229 = vmatmul.mubr.f32.gmra.mrb[0].mxu0 %v2228
    %v2230 = vpop.f32.mrb[0].mxu0
    %v2231 = vadd.f32 %v2066, %v2230
    %v2232 = vpop.f32.mrb[0].mxu0
    %v2233 = vadd.f32 %v2068, %v2232
    %2234 = vmatprep.mubr.f32.mxu0 0.0
    %v2235 = vand.u32 %v1142, 4294901760
    %2236 = vmatmul.mubr.f32.gmra.mrb[0].mxu0 %v2235
    %v2237 = vpop.f32.mrb[0].mxu0
    %v2238 = vadd.f32 %v2073, %v2237
    %v2239 = vpop.f32.mrb[0].mxu0
    %v2240 = vadd.f32 %v2075, %v2239
    %2241 = vmatprep.mubr.f32.mxu0 0.0
    %v2242 = vand.u32 %v1145, 4294901760
    %2243 = vmatmul.mubr.f32.gmra.mrb[0].mxu0 %v2242
    %v2244 = vpop.f32.mrb[0].mxu0
    %v2245 = vadd.f32 %v2080, %v2244
    %v2246 = vpop.f32.mrb[0].mxu0
    %v2247 = vadd.f32 %v2082, %v2246
    %2248 = vdwg.mxu0
    %v2249 = vand.u32 %v1005, 4294901760
    %2250 = vmatprep.subr.mxu0 %v2249
    %v2251 = vand.u32 %v1004, 4294901760
    %2252 = vmatpush1.msra.mxu0 %v2251
    %2253 = vmatprep.subr.mxu0 0.0
    %2254 = vmatpush1.msra.mxu0 0.0
    %2255 = vmatprep.subr.mxu0 0.0
    %2256 = vmatpush1.msra.mxu0 0.0
    %2257 = vmatprep.subr.mxu0 0.0
    %2258 = vmatpush1.msra.mxu0 0.0
    %2259 = vmatprep.subr.mxu0 0.0
    %2260 = vmatpush1.msra.mxu0 0.0
    %2261 = vmatprep.subr.mxu0 0.0
    %2262 = vmatpush1.msra.mxu0 0.0
    %2263 = vmatprep.subr.mxu0 0.0
    %2264 = vmatpush1.msra.mxu0 0.0
    %2265 = vmatprep.subr.mxu0 0.0
    %2266 = vmatpush1.msra.mxu0 0.0
    %2267 = vmatprep.subr.mxu0 0.0
    %2268 = vmatpush1.msra.mxu0 0.0
    %2269 = vmatprep.subr.mxu0 0.0
    %2270 = vmatpush1.msra.mxu0 0.0
    %2271 = vmatprep.subr.mxu0 0.0
    %2272 = vmatpush1.msra.mxu0 0.0
    %2273 = vmatprep.subr.mxu0 0.0
    %2274 = vmatpush1.msra.mxu0 0.0
    %2275 = vmatprep.subr.mxu0 0.0
    %2276 = vmatpush1.msra.mxu0 0.0
    %2277 = vmatprep.subr.mxu0 0.0
    %2278 = vmatpush1.msra.mxu0 0.0
    %2279 = vmatprep.subr.mxu0 0.0
    %2280 = vmatpush1.msra.mxu0 0.0
    %2281 = vmatprep.subr.mxu0 0.0
    %2282 = vmatpush1.msra.mxu0 0.0
    %2283 = vmatprep.subr.mxu0 0.0
    %2284 = vmatpush1.msra.mxu0 0.0
    %2285 = vmatprep.subr.mxu0 0.0
    %2286 = vmatpush1.msra.mxu0 0.0
    %2287 = vmatprep.subr.mxu0 0.0
    %2288 = vmatpush1.msra.mxu0 0.0
    %2289 = vmatprep.subr.mxu0 0.0
    %2290 = vmatpush1.msra.mxu0 0.0
    %2291 = vmatprep.subr.mxu0 0.0
    %2292 = vmatpush1.msra.mxu0 0.0
    %2293 = vmatprep.subr.mxu0 0.0
    %2294 = vmatpush1.msra.mxu0 0.0
    %2295 = vmatprep.subr.mxu0 0.0
    %2296 = vmatpush1.msra.mxu0 0.0
    %2297 = vmatprep.subr.mxu0 0.0
    %2298 = vmatpush1.msra.mxu0 0.0
    %2299 = vmatprep.subr.mxu0 0.0
    %2300 = vmatpush1.msra.mxu0 0.0
    %2301 = vmatprep.subr.mxu0 0.0
    %2302 = vmatpush1.msra.mxu0 0.0
    %2303 = vmatprep.subr.mxu0 0.0
    %2304 = vmatpush1.msra.mxu0 0.0
    %2305 = vmatprep.subr.mxu0 0.0
    %2306 = vmatpush1.msra.mxu0 0.0
    %2307 = vmatprep.subr.mxu0 0.0
    %2308 = vmatpush1.msra.mxu0 0.0
    %2309 = vmatprep.subr.mxu0 0.0
    %2310 = vmatpush1.msra.mxu0 0.0
    %2311 = vmatprep.subr.mxu0 0.0
    %2312 = vmatpush1.msra.mxu0 0.0
    %2313 = vmatprep.subr.mxu0 0.0
    %2314 = vmatpush1.msra.mxu0 0.0
    %2315 = vmatprep.mubr.f32.mxu0 0.0
    %v2316 = vand.u32 %v1106, 4294901760
    %v2317 = vsub.f32 %v1106, %v2316
    %v2318 = vand.u32 %v2317, 4294901760
    %v2319 = vsub.f32 %v2317, %v2318
    %v2320 = vand.u32 %v2319, 4294901760
    %2321 = vmatmul.mubr.f32.gmra.mrb[0].mxu0 %v2320
    %v2322 = vpop.f32.mrb[0].mxu0
    %v2323 = vadd.f32 %v1037, %v2322
    %v2324 = vpop.f32.mrb[0].mxu0
    %v2325 = vadd.f32 %v1037, %v2324
    %2326 = vmatprep.mubr.f32.mxu0 0.0
    %v2327 = vand.u32 %v1109, 4294901760
    %v2328 = vsub.f32 %v1109, %v2327
    %v2329 = vand.u32 %v2328, 4294901760
    %v2330 = vsub.f32 %v2328, %v2329
    %v2331 = vand.u32 %v2330, 4294901760
    %2332 = vmatmul.mubr.f32.gmra.mrb[0].mxu0 %v2331
    %v2333 = vpop.f32.mrb[0].mxu0
    %v2334 = vadd.f32 %v1042, %v2333
    %v2335 = vpop.f32.mrb[0].mxu0
    %v2336 = vadd.f32 %v1042, %v2335
    %2337 = vmatprep.mubr.f32.mxu0 0.0
    %v2338 = vand.u32 %v1112, 4294901760
    %v2339 = vsub.f32 %v1112, %v2338
    %v2340 = vand.u32 %v2339, 4294901760
    %v2341 = vsub.f32 %v2339, %v2340
    %v2342 = vand.u32 %v2341, 4294901760
    %2343 = vmatmul.mubr.f32.gmra.mrb[0].mxu0 %v2342
    %v2344 = vpop.f32.mrb[0].mxu0
    %v2345 = vadd.f32 %v1047, %v2344
    %v2346 = vpop.f32.mrb[0].mxu0
    %v2347 = vadd.f32 %v1047, %v2346
    %2348 = vmatprep.mubr.f32.mxu0 0.0
    %v2349 = vand.u32 %v1115, 4294901760
    %v2350 = vsub.f32 %v1115, %v2349
    %v2351 = vand.u32 %v2350, 4294901760
    %v2352 = vsub.f32 %v2350, %v2351
    %v2353 = vand.u32 %v2352, 4294901760
    %2354 = vmatmul.mubr.f32.gmra.mrb[0].mxu0 %v2353
    %v2355 = vpop.f32.mrb[0].mxu0
    %v2356 = vadd.f32 %v1052, %v2355
    %v2357 = vpop.f32.mrb[0].mxu0
    %v2358 = vadd.f32 %v1052, %v2357
    %2359 = vmatprep.mubr.f32.mxu0 0.0
    %v2360 = vand.u32 %v1118, 4294901760
    %v2361 = vsub.f32 %v1118, %v2360
    %v2362 = vand.u32 %v2361, 4294901760
    %v2363 = vsub.f32 %v2361, %v2362
    %v2364 = vand.u32 %v2363, 4294901760
    %2365 = vmatmul.mubr.f32.gmra.mrb[0].mxu0 %v2364
    %v2366 = vpop.f32.mrb[0].mxu0
    %v2367 = vadd.f32 %v1057, %v2366
    %v2368 = vpop.f32.mrb[0].mxu0
    %v2369 = vadd.f32 %v1057, %v2368
    %2370 = vmatprep.mubr.f32.mxu0 0.0
    %v2371 = vand.u32 %v1121, 4294901760
    %v2372 = vsub.f32 %v1121, %v2371
    %v2373 = vand.u32 %v2372, 4294901760
    %v2374 = vsub.f32 %v2372, %v2373
    %v2375 = vand.u32 %v2374, 4294901760
    %2376 = vmatmul.mubr.f32.gmra.mrb[0].mxu0 %v2375
    %v2377 = vpop.f32.mrb[0].mxu0
    %v2378 = vadd.f32 %v1062, %v2377
    %v2379 = vpop.f32.mrb[0].mxu0
    %v2380 = vadd.f32 %v1062, %v2379
    %2381 = vmatprep.mubr.f32.mxu0 0.0
    %v2382 = vand.u32 %v1124, 4294901760
    %v2383 = vsub.f32 %v1124, %v2382
    %v2384 = vand.u32 %v2383, 4294901760
    %v2385 = vsub.f32 %v2383, %v2384
    %v2386 = vand.u32 %v2385, 4294901760
    %2387 = vmatmul.mubr.f32.gmra.mrb[0].mxu0 %v2386
    %v2388 = vpop.f32.mrb[0].mxu0
    %v2389 = vadd.f32 %v1067, %v2388
    %v2390 = vpop.f32.mrb[0].mxu0
    %v2391 = vadd.f32 %v1067, %v2390
    %2392 = vmatprep.mubr.f32.mxu0 0.0
    %v2393 = vand.u32 %v1127, 4294901760
    %v2394 = vsub.f32 %v1127, %v2393
    %v2395 = vand.u32 %v2394, 4294901760
    %v2396 = vsub.f32 %v2394, %v2395
    %v2397 = vand.u32 %v2396, 4294901760
    %2398 = vmatmul.mubr.f32.gmra.mrb[0].mxu0 %v2397
    %v2399 = vpop.f32.mrb[0].mxu0
    %v2400 = vadd.f32 %v1072, %v2399
    %v2401 = vpop.f32.mrb[0].mxu0
    %v2402 = vadd.f32 %v1072, %v2401
    %2403 = vmatprep.mubr.f32.mxu0 0.0
    %v2404 = vand.u32 %v1130, 4294901760
    %v2405 = vsub.f32 %v1130, %v2404
    %v2406 = vand.u32 %v2405, 4294901760
    %v2407 = vsub.f32 %v2405, %v2406
    %v2408 = vand.u32 %v2407, 4294901760
    %2409 = vmatmul.mubr.f32.gmra.mrb[0].mxu0 %v2408
    %v2410 = vpop.f32.mrb[0].mxu0
    %v2411 = vadd.f32 %v1077, %v2410
    %v2412 = vpop.f32.mrb[0].mxu0
    %v2413 = vadd.f32 %v1077, %v2412
    %2414 = vmatprep.mubr.f32.mxu0 0.0
    %v2415 = vand.u32 %v1133, 4294901760
    %v2416 = vsub.f32 %v1133, %v2415
    %v2417 = vand.u32 %v2416, 4294901760
    %v2418 = vsub.f32 %v2416, %v2417
    %v2419 = vand.u32 %v2418, 4294901760
    %2420 = vmatmul.mubr.f32.gmra.mrb[0].mxu0 %v2419
    %v2421 = vpop.f32.mrb[0].mxu0
    %v2422 = vadd.f32 %v1082, %v2421
    %v2423 = vpop.f32.mrb[0].mxu0
    %v2424 = vadd.f32 %v1082, %v2423
    %2425 = vmatprep.mubr.f32.mxu0 0.0
    %v2426 = vand.u32 %v1136, 4294901760
    %v2427 = vsub.f32 %v1136, %v2426
    %v2428 = vand.u32 %v2427, 4294901760
    %v2429 = vsub.f32 %v2427, %v2428
    %v2430 = vand.u32 %v2429, 4294901760
    %2431 = vmatmul.mubr.f32.gmra.mrb[0].mxu0 %v2430
    %v2432 = vpop.f32.mrb[0].mxu0
    %v2433 = vadd.f32 %v1087, %v2432
    %v2434 = vpop.f32.mrb[0].mxu0
    %v2435 = vadd.f32 %v1087, %v2434
    %2436 = vmatprep.mubr.f32.mxu0 0.0
    %v2437 = vand.u32 %v1139, 4294901760
    %v2438 = vsub.f32 %v1139, %v2437
    %v2439 = vand.u32 %v2438, 4294901760
    %v2440 = vsub.f32 %v2438, %v2439
    %v2441 = vand.u32 %v2440, 4294901760
    %2442 = vmatmul.mubr.f32.gmra.mrb[0].mxu0 %v2441
    %v2443 = vpop.f32.mrb[0].mxu0
    %v2444 = vadd.f32 %v1092, %v2443
    %v2445 = vpop.f32.mrb[0].mxu0
    %v2446 = vadd.f32 %v1092, %v2445
    %2447 = vmatprep.mubr.f32.mxu0 0.0
    %v2448 = vand.u32 %v1142, 4294901760
    %v2449 = vsub.f32 %v1142, %v2448
    %v2450 = vand.u32 %v2449, 4294901760
    %v2451 = vsub.f32 %v2449, %v2450
    %v2452 = vand.u32 %v2451, 4294901760
    %2453 = vmatmul.mubr.f32.gmra.mrb[0].mxu0 %v2452
    %v2454 = vpop.f32.mrb[0].mxu0
    %v2455 = vadd.f32 %v1097, %v2454
    %v2456 = vpop.f32.mrb[0].mxu0
    %v2457 = vadd.f32 %v1097, %v2456
    %2458 = vmatprep.mubr.f32.mxu0 0.0
    %v2459 = vand.u32 %v1145, 4294901760
    %v2460 = vsub.f32 %v1145, %v2459
    %v2461 = vand.u32 %v2460, 4294901760
    %v2462 = vsub.f32 %v2460, %v2461
    %v2463 = vand.u32 %v2462, 4294901760
    %2464 = vmatmul.mubr.f32.gmra.mrb[0].mxu0 %v2463
    %v2465 = vpop.f32.mrb[0].mxu0
    %v2466 = vadd.f32 %v1102, %v2465
    %v2467 = vpop.f32.mrb[0].mxu0
    %v2468 = vadd.f32 %v1102, %v2467
    %2469 = vdwg.mxu0
    %v2470 = vand.u32 %v1005, 4294901760
    %v2471 = vsub.f32 %v1005, %v2470
    %v2472 = vand.u32 %v2471, 4294901760
    %v2473 = vsub.f32 %v2471, %v2472
    %v2474 = vand.u32 %v2473, 4294901760
    %2475 = vmatprep.subr.mxu0 %v2474
    %v2476 = vand.u32 %v1004, 4294901760
    %v2477 = vsub.f32 %v1004, %v2476
    %v2478 = vand.u32 %v2477, 4294901760
    %v2479 = vsub.f32 %v2477, %v2478
    %v2480 = vand.u32 %v2479, 4294901760
    %2481 = vmatpush1.msra.mxu0 %v2480
    %2482 = vmatprep.subr.mxu0 0.0
    %2483 = vmatpush1.msra.mxu0 0.0
    %2484 = vmatprep.subr.mxu0 0.0
    %2485 = vmatpush1.msra.mxu0 0.0
    %2486 = vmatprep.subr.mxu0 0.0
    %2487 = vmatpush1.msra.mxu0 0.0
    %2488 = vmatprep.subr.mxu0 0.0
    %2489 = vmatpush1.msra.mxu0 0.0
    %2490 = vmatprep.subr.mxu0 0.0
    %2491 = vmatpush1.msra.mxu0 0.0
    %2492 = vmatprep.subr.mxu0 0.0
    %2493 = vmatpush1.msra.mxu0 0.0
    %2494 = vmatprep.subr.mxu0 0.0
    %2495 = vmatpush1.msra.mxu0 0.0
    %2496 = vmatprep.subr.mxu0 0.0
    %2497 = vmatpush1.msra.mxu0 0.0
    %2498 = vmatprep.subr.mxu0 0.0
    %2499 = vmatpush1.msra.mxu0 0.0
    %2500 = vmatprep.subr.mxu0 0.0
    %2501 = vmatpush1.msra.mxu0 0.0
    %2502 = vmatprep.subr.mxu0 0.0
    %2503 = vmatpush1.msra.mxu0 0.0
    %2504 = vmatprep.subr.mxu0 0.0
    %2505 = vmatpush1.msra.mxu0 0.0
    %2506 = vmatprep.subr.mxu0 0.0
    %2507 = vmatpush1.msra.mxu0 0.0
    %2508 = vmatprep.subr.mxu0 0.0
    %2509 = vmatpush1.msra.mxu0 0.0
    %2510 = vmatprep.subr.mxu0 0.0
    %2511 = vmatpush1.msra.mxu0 0.0
    %2512 = vmatprep.subr.mxu0 0.0
    %2513 = vmatpush1.msra.mxu0 0.0
    %2514 = vmatprep.subr.mxu0 0.0
    %2515 = vmatpush1.msra.mxu0 0.0
    %2516 = vmatprep.subr.mxu0 0.0
    %2517 = vmatpush1.msra.mxu0 0.0
    %2518 = vmatprep.subr.mxu0 0.0
    %2519 = vmatpush1.msra.mxu0 0.0
    %2520 = vmatprep.subr.mxu0 0.0
    %2521 = vmatpush1.msra.mxu0 0.0
    %2522 = vmatprep.subr.mxu0 0.0
    %2523 = vmatpush1.msra.mxu0 0.0
    %2524 = vmatprep.subr.mxu0 0.0
    %2525 = vmatpush1.msra.mxu0 0.0
    %2526 = vmatprep.subr.mxu0 0.0
    %2527 = vmatpush1.msra.mxu0 0.0
    %2528 = vmatprep.subr.mxu0 0.0
    %2529 = vmatpush1.msra.mxu0 0.0
    %2530 = vmatprep.subr.mxu0 0.0
    %2531 = vmatpush1.msra.mxu0 0.0
    %2532 = vmatprep.subr.mxu0 0.0
    %2533 = vmatpush1.msra.mxu0 0.0
    %2534 = vmatprep.subr.mxu0 0.0
    %2535 = vmatpush1.msra.mxu0 0.0
    %2536 = vmatprep.subr.mxu0 0.0
    %2537 = vmatpush1.msra.mxu0 0.0
    %2538 = vmatprep.subr.mxu0 0.0
    %2539 = vmatpush1.msra.mxu0 0.0
    %2540 = vmatprep.subr.mxu0 0.0
    %2541 = vmatpush1.msra.mxu0 0.0
    %2542 = vmatprep.subr.mxu0 0.0
    %2543 = vmatpush1.msra.mxu0 0.0
    %2544 = vmatprep.mubr.f32.mxu0 0.0
    %v2545 = vand.u32 %v1106, 4294901760
    %2546 = vmatmul.mubr.f32.gmra.mrb[0].mxu0 %v2545
    %v2547 = vpop.f32.mrb[0].mxu0
    %v2548 = vadd.f32 %v2323, %v2547
    %v2549 = vpop.f32.mrb[0].mxu0
    %v2550 = vadd.f32 %v2325, %v2549
    %2551 = vmatprep.mubr.f32.mxu0 0.0
    %v2552 = vand.u32 %v1109, 4294901760
    %2553 = vmatmul.mubr.f32.gmra.mrb[0].mxu0 %v2552
    %v2554 = vpop.f32.mrb[0].mxu0
    %v2555 = vadd.f32 %v2334, %v2554
    %v2556 = vpop.f32.mrb[0].mxu0
    %v2557 = vadd.f32 %v2336, %v2556
    %2558 = vmatprep.mubr.f32.mxu0 0.0
    %v2559 = vand.u32 %v1112, 4294901760
    %2560 = vmatmul.mubr.f32.gmra.mrb[0].mxu0 %v2559
    %v2561 = vpop.f32.mrb[0].mxu0
    %v2562 = vadd.f32 %v2345, %v2561
    %v2563 = vpop.f32.mrb[0].mxu0
    %v2564 = vadd.f32 %v2347, %v2563
    %2565 = vmatprep.mubr.f32.mxu0 0.0
    %v2566 = vand.u32 %v1115, 4294901760
    %2567 = vmatmul.mubr.f32.gmra.mrb[0].mxu0 %v2566
    %v2568 = vpop.f32.mrb[0].mxu0
    %v2569 = vadd.f32 %v2356, %v2568
    %v2570 = vpop.f32.mrb[0].mxu0
    %v2571 = vadd.f32 %v2358, %v2570
    %2572 = vmatprep.mubr.f32.mxu0 0.0
    %v2573 = vand.u32 %v1118, 4294901760
    %2574 = vmatmul.mubr.f32.gmra.mrb[0].mxu0 %v2573
    %v2575 = vpop.f32.mrb[0].mxu0
    %v2576 = vadd.f32 %v2367, %v2575
    %v2577 = vpop.f32.mrb[0].mxu0
    %v2578 = vadd.f32 %v2369, %v2577
    %2579 = vmatprep.mubr.f32.mxu0 0.0
    %v2580 = vand.u32 %v1121, 4294901760
    %2581 = vmatmul.mubr.f32.gmra.mrb[0].mxu0 %v2580
    %v2582 = vpop.f32.mrb[0].mxu0
    %v2583 = vadd.f32 %v2378, %v2582
    %v2584 = vpop.f32.mrb[0].mxu0
    %v2585 = vadd.f32 %v2380, %v2584
    %2586 = vmatprep.mubr.f32.mxu0 0.0
    %v2587 = vand.u32 %v1124, 4294901760
    %2588 = vmatmul.mubr.f32.gmra.mrb[0].mxu0 %v2587
    %v2589 = vpop.f32.mrb[0].mxu0
    %v2590 = vadd.f32 %v2389, %v2589
    %v2591 = vpop.f32.mrb[0].mxu0
    %v2592 = vadd.f32 %v2391, %v2591
    %2593 = vmatprep.mubr.f32.mxu0 0.0
    %v2594 = vand.u32 %v1127, 4294901760
    %2595 = vmatmul.mubr.f32.gmra.mrb[0].mxu0 %v2594
    %v2596 = vpop.f32.mrb[0].mxu0
    %v2597 = vadd.f32 %v2400, %v2596
    %v2598 = vpop.f32.mrb[0].mxu0
    %v2599 = vadd.f32 %v2402, %v2598
    %2600 = vmatprep.mubr.f32.mxu0 0.0
    %v2601 = vand.u32 %v1130, 4294901760
    %2602 = vmatmul.mubr.f32.gmra.mrb[0].mxu0 %v2601
    %v2603 = vpop.f32.mrb[0].mxu0
    %v2604 = vadd.f32 %v2411, %v2603
    %v2605 = vpop.f32.mrb[0].mxu0
    %v2606 = vadd.f32 %v2413, %v2605
    %2607 = vmatprep.mubr.f32.mxu0 0.0
    %v2608 = vand.u32 %v1133, 4294901760
    %2609 = vmatmul.mubr.f32.gmra.mrb[0].mxu0 %v2608
    %v2610 = vpop.f32.mrb[0].mxu0
    %v2611 = vadd.f32 %v2422, %v2610
    %v2612 = vpop.f32.mrb[0].mxu0
    %v2613 = vadd.f32 %v2424, %v2612
    %2614 = vmatprep.mubr.f32.mxu0 0.0
    %v2615 = vand.u32 %v1136, 4294901760
    %2616 = vmatmul.mubr.f32.gmra.mrb[0].mxu0 %v2615
    %v2617 = vpop.f32.mrb[0].mxu0
    %v2618 = vadd.f32 %v2433, %v2617
    %v2619 = vpop.f32.mrb[0].mxu0
    %v2620 = vadd.f32 %v2435, %v2619
    %2621 = vmatprep.mubr.f32.mxu0 0.0
    %v2622 = vand.u32 %v1139, 4294901760
    %2623 = vmatmul.mubr.f32.gmra.mrb[0].mxu0 %v2622
    %v2624 = vpop.f32.mrb[0].mxu0
    %v2625 = vadd.f32 %v2444, %v2624
    %v2626 = vpop.f32.mrb[0].mxu0
    %v2627 = vadd.f32 %v2446, %v2626
    %2628 = vmatprep.mubr.f32.mxu0 0.0
    %v2629 = vand.u32 %v1142, 4294901760
    %2630 = vmatmul.mubr.f32.gmra.mrb[0].mxu0 %v2629
    %v2631 = vpop.f32.mrb[0].mxu0
    %v2632 = vadd.f32 %v2455, %v2631
    %v2633 = vpop.f32.mrb[0].mxu0
    %v2634 = vadd.f32 %v2457, %v2633
    %2635 = vmatprep.mubr.f32.mxu0 0.0
    %v2636 = vand.u32 %v1145, 4294901760
    %2637 = vmatmul.mubr.f32.gmra.mrb[0].mxu0 %v2636
    %v2638 = vpop.f32.mrb[0].mxu0
    %v2639 = vadd.f32 %v2466, %v2638
    %v2640 = vpop.f32.mrb[0].mxu0
    %v2641 = vadd.f32 %v2468, %v2640
    %2642 = vdwg.mxu0
    %v2643 = vand.u32 %v1005, 4294901760
    %v2644 = vsub.f32 %v1005, %v2643
    %2645 = vmatprep.subr.mxu0 %v2644
    %v2646 = vand.u32 %v1004, 4294901760
    %v2647 = vsub.f32 %v1004, %v2646
    %2648 = vmatpush1.msra.mxu0 %v2647
    %2649 = vmatprep.subr.mxu0 0.0
    %2650 = vmatpush1.msra.mxu0 0.0
    %2651 = vmatprep.subr.mxu0 0.0
    %2652 = vmatpush1.msra.mxu0 0.0
    %2653 = vmatprep.subr.mxu0 0.0
    %2654 = vmatpush1.msra.mxu0 0.0
    %2655 = vmatprep.subr.mxu0 0.0
    %2656 = vmatpush1.msra.mxu0 0.0
    %2657 = vmatprep.subr.mxu0 0.0
    %2658 = vmatpush1.msra.mxu0 0.0
    %2659 = vmatprep.subr.mxu0 0.0
    %2660 = vmatpush1.msra.mxu0 0.0
    %2661 = vmatprep.subr.mxu0 0.0
    %2662 = vmatpush1.msra.mxu0 0.0
    %2663 = vmatprep.subr.mxu0 0.0
    %2664 = vmatpush1.msra.mxu0 0.0
    %2665 = vmatprep.subr.mxu0 0.0
    %2666 = vmatpush1.msra.mxu0 0.0
    %2667 = vmatprep.subr.mxu0 0.0
    %2668 = vmatpush1.msra.mxu0 0.0
    %2669 = vmatprep.subr.mxu0 0.0
    %2670 = vmatpush1.msra.mxu0 0.0
    %2671 = vmatprep.subr.mxu0 0.0
    %2672 = vmatpush1.msra.mxu0 0.0
    %2673 = vmatprep.subr.mxu0 0.0
    %2674 = vmatpush1.msra.mxu0 0.0
    %2675 = vmatprep.subr.mxu0 0.0
    %2676 = vmatpush1.msra.mxu0 0.0
    %2677 = vmatprep.subr.mxu0 0.0
    %2678 = vmatpush1.msra.mxu0 0.0
    %2679 = vmatprep.subr.mxu0 0.0
    %2680 = vmatpush1.msra.mxu0 0.0
    %2681 = vmatprep.subr.mxu0 0.0
    %2682 = vmatpush1.msra.mxu0 0.0
    %2683 = vmatprep.subr.mxu0 0.0
    %2684 = vmatpush1.msra.mxu0 0.0
    %2685 = vmatprep.subr.mxu0 0.0
    %2686 = vmatpush1.msra.mxu0 0.0
    %2687 = vmatprep.subr.mxu0 0.0
    %2688 = vmatpush1.msra.mxu0 0.0
    %2689 = vmatprep.subr.mxu0 0.0
    %2690 = vmatpush1.msra.mxu0 0.0
    %2691 = vmatprep.subr.mxu0 0.0
    %2692 = vmatpush1.msra.mxu0 0.0
    %2693 = vmatprep.subr.mxu0 0.0
    %2694 = vmatpush1.msra.mxu0 0.0
    %2695 = vmatprep.subr.mxu0 0.0
    %2696 = vmatpush1.msra.mxu0 0.0
    %2697 = vmatprep.subr.mxu0 0.0
    %2698 = vmatpush1.msra.mxu0 0.0
    %2699 = vmatprep.subr.mxu0 0.0
    %2700 = vmatpush1.msra.mxu0 0.0
    %2701 = vmatprep.subr.mxu0 0.0
    %2702 = vmatpush1.msra.mxu0 0.0
    %2703 = vmatprep.subr.mxu0 0.0
    %2704 = vmatpush1.msra.mxu0 0.0
    %2705 = vmatprep.subr.mxu0 0.0
    %2706 = vmatpush1.msra.mxu0 0.0
    %2707 = vmatprep.subr.mxu0 0.0
    %2708 = vmatpush1.msra.mxu0 0.0
    %2709 = vmatprep.subr.mxu0 0.0
    %2710 = vmatpush1.msra.mxu0 0.0
    %2711 = vmatprep.mubr.f32.mxu0 0.0
    %v2712 = vand.u32 %v1106, 4294901760
    %v2713 = vsub.f32 %v1106, %v2712
    %2714 = vmatmul.mubr.f32.gmra.mrb[0].mxu0 %v2713
    %v2715 = vpop.f32.mrb[0].mxu0
    %v2716 = vadd.f32 %v2548, %v2715
    %v2717 = vpop.f32.mrb[0].mxu0
    %v2718 = vadd.f32 %v2550, %v2717
    %2719 = vmatprep.mubr.f32.mxu0 0.0
    %v2720 = vand.u32 %v1109, 4294901760
    %v2721 = vsub.f32 %v1109, %v2720
    %2722 = vmatmul.mubr.f32.gmra.mrb[0].mxu0 %v2721
    %v2723 = vpop.f32.mrb[0].mxu0
    %v2724 = vadd.f32 %v2555, %v2723
    %v2725 = vpop.f32.mrb[0].mxu0
    %v2726 = vadd.f32 %v2557, %v2725
    %2727 = vmatprep.mubr.f32.mxu0 0.0
    %v2728 = vand.u32 %v1112, 4294901760
    %v2729 = vsub.f32 %v1112, %v2728
    %2730 = vmatmul.mubr.f32.gmra.mrb[0].mxu0 %v2729
    %v2731 = vpop.f32.mrb[0].mxu0
    %v2732 = vadd.f32 %v2562, %v2731
    %v2733 = vpop.f32.mrb[0].mxu0
    %v2734 = vadd.f32 %v2564, %v2733
    %2735 = vmatprep.mubr.f32.mxu0 0.0
    %v2736 = vand.u32 %v1115, 4294901760
    %v2737 = vsub.f32 %v1115, %v2736
    %2738 = vmatmul.mubr.f32.gmra.mrb[0].mxu0 %v2737
    %v2739 = vpop.f32.mrb[0].mxu0
    %v2740 = vadd.f32 %v2569, %v2739
    %v2741 = vpop.f32.mrb[0].mxu0
    %v2742 = vadd.f32 %v2571, %v2741
    %2743 = vmatprep.mubr.f32.mxu0 0.0
    %v2744 = vand.u32 %v1118, 4294901760
    %v2745 = vsub.f32 %v1118, %v2744
    %2746 = vmatmul.mubr.f32.gmra.mrb[0].mxu0 %v2745
    %v2747 = vpop.f32.mrb[0].mxu0
    %v2748 = vadd.f32 %v2576, %v2747
    %v2749 = vpop.f32.mrb[0].mxu0
    %v2750 = vadd.f32 %v2578, %v2749
    %2751 = vmatprep.mubr.f32.mxu0 0.0
    %v2752 = vand.u32 %v1121, 4294901760
    %v2753 = vsub.f32 %v1121, %v2752
    %2754 = vmatmul.mubr.f32.gmra.mrb[0].mxu0 %v2753
    %v2755 = vpop.f32.mrb[0].mxu0
    %v2756 = vadd.f32 %v2583, %v2755
    %v2757 = vpop.f32.mrb[0].mxu0
    %v2758 = vadd.f32 %v2585, %v2757
    %2759 = vmatprep.mubr.f32.mxu0 0.0
    %v2760 = vand.u32 %v1124, 4294901760
    %v2761 = vsub.f32 %v1124, %v2760
    %2762 = vmatmul.mubr.f32.gmra.mrb[0].mxu0 %v2761
    %v2763 = vpop.f32.mrb[0].mxu0
    %v2764 = vadd.f32 %v2590, %v2763
    %v2765 = vpop.f32.mrb[0].mxu0
    %v2766 = vadd.f32 %v2592, %v2765
    %2767 = vmatprep.mubr.f32.mxu0 0.0
    %v2768 = vand.u32 %v1127, 4294901760
    %v2769 = vsub.f32 %v1127, %v2768
    %2770 = vmatmul.mubr.f32.gmra.mrb[0].mxu0 %v2769
    %v2771 = vpop.f32.mrb[0].mxu0
    %v2772 = vadd.f32 %v2597, %v2771
    %v2773 = vpop.f32.mrb[0].mxu0
    %v2774 = vadd.f32 %v2599, %v2773
    %2775 = vmatprep.mubr.f32.mxu0 0.0
    %v2776 = vand.u32 %v1130, 4294901760
    %v2777 = vsub.f32 %v1130, %v2776
    %2778 = vmatmul.mubr.f32.gmra.mrb[0].mxu0 %v2777
    %v2779 = vpop.f32.mrb[0].mxu0
    %v2780 = vadd.f32 %v2604, %v2779
    %v2781 = vpop.f32.mrb[0].mxu0
    %v2782 = vadd.f32 %v2606, %v2781
    %2783 = vmatprep.mubr.f32.mxu0 0.0
    %v2784 = vand.u32 %v1133, 4294901760
    %v2785 = vsub.f32 %v1133, %v2784
    %2786 = vmatmul.mubr.f32.gmra.mrb[0].mxu0 %v2785
    %v2787 = vpop.f32.mrb[0].mxu0
    %v2788 = vadd.f32 %v2611, %v2787
    %v2789 = vpop.f32.mrb[0].mxu0
    %v2790 = vadd.f32 %v2613, %v2789
    %2791 = vmatprep.mubr.f32.mxu0 0.0
    %v2792 = vand.u32 %v1136, 4294901760
    %v2793 = vsub.f32 %v1136, %v2792
    %2794 = vmatmul.mubr.f32.gmra.mrb[0].mxu0 %v2793
    %v2795 = vpop.f32.mrb[0].mxu0
    %v2796 = vadd.f32 %v2618, %v2795
    %v2797 = vpop.f32.mrb[0].mxu0
    %v2798 = vadd.f32 %v2620, %v2797
    %2799 = vmatprep.mubr.f32.mxu0 0.0
    %v2800 = vand.u32 %v1139, 4294901760
    %v2801 = vsub.f32 %v1139, %v2800
    %2802 = vmatmul.mubr.f32.gmra.mrb[0].mxu0 %v2801
    %v2803 = vpop.f32.mrb[0].mxu0
    %v2804 = vadd.f32 %v2625, %v2803
    %v2805 = vpop.f32.mrb[0].mxu0
    %v2806 = vadd.f32 %v2627, %v2805
    %2807 = vmatprep.mubr.f32.mxu0 0.0
    %v2808 = vand.u32 %v1142, 4294901760
    %v2809 = vsub.f32 %v1142, %v2808
    %2810 = vmatmul.mubr.f32.gmra.mrb[0].mxu0 %v2809
    %v2811 = vpop.f32.mrb[0].mxu0
    %v2812 = vadd.f32 %v2632, %v2811
    %v2813 = vpop.f32.mrb[0].mxu0
    %v2814 = vadd.f32 %v2634, %v2813
    %2815 = vmatprep.mubr.f32.mxu0 0.0
    %v2816 = vand.u32 %v1145, 4294901760
    %v2817 = vsub.f32 %v1145, %v2816
    %2818 = vmatmul.mubr.f32.gmra.mrb[0].mxu0 %v2817
    %v2819 = vpop.f32.mrb[0].mxu0
    %v2820 = vadd.f32 %v2639, %v2819
    %v2821 = vpop.f32.mrb[0].mxu0
    %v2822 = vadd.f32 %v2641, %v2821
    %2823 = vdwg.mxu0
    %v2824 = vand.u32 %v1005, 4294901760
    %2825 = vmatprep.subr.mxu0 %v2824
    %v2826 = vand.u32 %v1004, 4294901760
    %2827 = vmatpush1.msra.mxu0 %v2826
    %2828 = vmatprep.subr.mxu0 0.0
    %2829 = vmatpush1.msra.mxu0 0.0
    %2830 = vmatprep.subr.mxu0 0.0
    %2831 = vmatpush1.msra.mxu0 0.0
    %2832 = vmatprep.subr.mxu0 0.0
    %2833 = vmatpush1.msra.mxu0 0.0
    %2834 = vmatprep.subr.mxu0 0.0
    %2835 = vmatpush1.msra.mxu0 0.0
    %2836 = vmatprep.subr.mxu0 0.0
    %2837 = vmatpush1.msra.mxu0 0.0
    %2838 = vmatprep.subr.mxu0 0.0
    %2839 = vmatpush1.msra.mxu0 0.0
    %2840 = vmatprep.subr.mxu0 0.0
    %2841 = vmatpush1.msra.mxu0 0.0
    %2842 = vmatprep.subr.mxu0 0.0
    %2843 = vmatpush1.msra.mxu0 0.0
    %2844 = vmatprep.subr.mxu0 0.0
    %2845 = vmatpush1.msra.mxu0 0.0
    %2846 = vmatprep.subr.mxu0 0.0
    %2847 = vmatpush1.msra.mxu0 0.0
    %2848 = vmatprep.subr.mxu0 0.0
    %2849 = vmatpush1.msra.mxu0 0.0
    %2850 = vmatprep.subr.mxu0 0.0
    %2851 = vmatpush1.msra.mxu0 0.0
    %2852 = vmatprep.subr.mxu0 0.0
    %2853 = vmatpush1.msra.mxu0 0.0
    %2854 = vmatprep.subr.mxu0 0.0
    %2855 = vmatpush1.msra.mxu0 0.0
    %2856 = vmatprep.subr.mxu0 0.0
    %2857 = vmatpush1.msra.mxu0 0.0
    %2858 = vmatprep.subr.mxu0 0.0
    %2859 = vmatpush1.msra.mxu0 0.0
    %2860 = vmatprep.subr.mxu0 0.0
    %2861 = vmatpush1.msra.mxu0 0.0
    %2862 = vmatprep.subr.mxu0 0.0
    %2863 = vmatpush1.msra.mxu0 0.0
    %2864 = vmatprep.subr.mxu0 0.0
    %2865 = vmatpush1.msra.mxu0 0.0
    %2866 = vmatprep.subr.mxu0 0.0
    %2867 = vmatpush1.msra.mxu0 0.0
    %2868 = vmatprep.subr.mxu0 0.0
    %2869 = vmatpush1.msra.mxu0 0.0
    %2870 = vmatprep.subr.mxu0 0.0
    %2871 = vmatpush1.msra.mxu0 0.0
    %2872 = vmatprep.subr.mxu0 0.0
    %2873 = vmatpush1.msra.mxu0 0.0
    %2874 = vmatprep.subr.mxu0 0.0
    %2875 = vmatpush1.msra.mxu0 0.0
    %2876 = vmatprep.subr.mxu0 0.0
    %2877 = vmatpush1.msra.mxu0 0.0
    %2878 = vmatprep.subr.mxu0 0.0
    %2879 = vmatpush1.msra.mxu0 0.0
    %2880 = vmatprep.subr.mxu0 0.0
    %2881 = vmatpush1.msra.mxu0 0.0
    %2882 = vmatprep.subr.mxu0 0.0
    %2883 = vmatpush1.msra.mxu0 0.0
    %2884 = vmatprep.subr.mxu0 0.0
    %2885 = vmatpush1.msra.mxu0 0.0
    %2886 = vmatprep.subr.mxu0 0.0
    %2887 = vmatpush1.msra.mxu0 0.0
    %2888 = vmatprep.subr.mxu0 0.0
    %2889 = vmatpush1.msra.mxu0 0.0
    %2890 = vmatprep.mubr.f32.mxu0 0.0
    %v2891 = vand.u32 %v1106, 4294901760
    %v2892 = vsub.f32 %v1106, %v2891
    %v2893 = vand.u32 %v2892, 4294901760
    %2894 = vmatmul.mubr.f32.gmra.mrb[0].mxu0 %v2893
    %v2895 = vpop.f32.mrb[0].mxu0
    %v2896 = vadd.f32 %v2716, %v2895
    %v2897 = vpop.f32.mrb[0].mxu0
    %v2898 = vadd.f32 %v2718, %v2897
    %2899 = vmatprep.mubr.f32.mxu0 0.0
    %v2900 = vand.u32 %v1109, 4294901760
    %v2901 = vsub.f32 %v1109, %v2900
    %v2902 = vand.u32 %v2901, 4294901760
    %2903 = vmatmul.mubr.f32.gmra.mrb[0].mxu0 %v2902
    %v2904 = vpop.f32.mrb[0].mxu0
    %v2905 = vadd.f32 %v2724, %v2904
    %v2906 = vpop.f32.mrb[0].mxu0
    %v2907 = vadd.f32 %v2726, %v2906
    %2908 = vmatprep.mubr.f32.mxu0 0.0
    %v2909 = vand.u32 %v1112, 4294901760
    %v2910 = vsub.f32 %v1112, %v2909
    %v2911 = vand.u32 %v2910, 4294901760
    %2912 = vmatmul.mubr.f32.gmra.mrb[0].mxu0 %v2911
    %v2913 = vpop.f32.mrb[0].mxu0
    %v2914 = vadd.f32 %v2732, %v2913
    %v2915 = vpop.f32.mrb[0].mxu0
    %v2916 = vadd.f32 %v2734, %v2915
    %2917 = vmatprep.mubr.f32.mxu0 0.0
    %v2918 = vand.u32 %v1115, 4294901760
    %v2919 = vsub.f32 %v1115, %v2918
    %v2920 = vand.u32 %v2919, 4294901760
    %2921 = vmatmul.mubr.f32.gmra.mrb[0].mxu0 %v2920
    %v2922 = vpop.f32.mrb[0].mxu0
    %v2923 = vadd.f32 %v2740, %v2922
    %v2924 = vpop.f32.mrb[0].mxu0
    %v2925 = vadd.f32 %v2742, %v2924
    %2926 = vmatprep.mubr.f32.mxu0 0.0
    %v2927 = vand.u32 %v1118, 4294901760
    %v2928 = vsub.f32 %v1118, %v2927
    %v2929 = vand.u32 %v2928, 4294901760
    %2930 = vmatmul.mubr.f32.gmra.mrb[0].mxu0 %v2929
    %v2931 = vpop.f32.mrb[0].mxu0
    %v2932 = vadd.f32 %v2748, %v2931
    %v2933 = vpop.f32.mrb[0].mxu0
    %v2934 = vadd.f32 %v2750, %v2933
    %2935 = vmatprep.mubr.f32.mxu0 0.0
    %v2936 = vand.u32 %v1121, 4294901760
    %v2937 = vsub.f32 %v1121, %v2936
    %v2938 = vand.u32 %v2937, 4294901760
    %2939 = vmatmul.mubr.f32.gmra.mrb[0].mxu0 %v2938
    %v2940 = vpop.f32.mrb[0].mxu0
    %v2941 = vadd.f32 %v2756, %v2940
    %v2942 = vpop.f32.mrb[0].mxu0
    %v2943 = vadd.f32 %v2758, %v2942
    %2944 = vmatprep.mubr.f32.mxu0 0.0
    %v2945 = vand.u32 %v1124, 4294901760
    %v2946 = vsub.f32 %v1124, %v2945
    %v2947 = vand.u32 %v2946, 4294901760
    %2948 = vmatmul.mubr.f32.gmra.mrb[0].mxu0 %v2947
    %v2949 = vpop.f32.mrb[0].mxu0
    %v2950 = vadd.f32 %v2764, %v2949
    %v2951 = vpop.f32.mrb[0].mxu0
    %v2952 = vadd.f32 %v2766, %v2951
    %2953 = vmatprep.mubr.f32.mxu0 0.0
    %v2954 = vand.u32 %v1127, 4294901760
    %v2955 = vsub.f32 %v1127, %v2954
    %v2956 = vand.u32 %v2955, 4294901760
    %2957 = vmatmul.mubr.f32.gmra.mrb[0].mxu0 %v2956
    %v2958 = vpop.f32.mrb[0].mxu0
    %v2959 = vadd.f32 %v2772, %v2958
    %v2960 = vpop.f32.mrb[0].mxu0
    %v2961 = vadd.f32 %v2774, %v2960
    %2962 = vmatprep.mubr.f32.mxu0 0.0
    %v2963 = vand.u32 %v1130, 4294901760
    %v2964 = vsub.f32 %v1130, %v2963
    %v2965 = vand.u32 %v2964, 4294901760
    %2966 = vmatmul.mubr.f32.gmra.mrb[0].mxu0 %v2965
    %v2967 = vpop.f32.mrb[0].mxu0
    %v2968 = vadd.f32 %v2780, %v2967
    %v2969 = vpop.f32.mrb[0].mxu0
    %v2970 = vadd.f32 %v2782, %v2969
    %2971 = vmatprep.mubr.f32.mxu0 0.0
    %v2972 = vand.u32 %v1133, 4294901760
    %v2973 = vsub.f32 %v1133, %v2972
    %v2974 = vand.u32 %v2973, 4294901760
    %2975 = vmatmul.mubr.f32.gmra.mrb[0].mxu0 %v2974
    %v2976 = vpop.f32.mrb[0].mxu0
    %v2977 = vadd.f32 %v2788, %v2976
    %v2978 = vpop.f32.mrb[0].mxu0
    %v2979 = vadd.f32 %v2790, %v2978
    %2980 = vmatprep.mubr.f32.mxu0 0.0
    %v2981 = vand.u32 %v1136, 4294901760
    %v2982 = vsub.f32 %v1136, %v2981
    %v2983 = vand.u32 %v2982, 4294901760
    %2984 = vmatmul.mubr.f32.gmra.mrb[0].mxu0 %v2983
    %v2985 = vpop.f32.mrb[0].mxu0
    %v2986 = vadd.f32 %v2796, %v2985
    %v2987 = vpop.f32.mrb[0].mxu0
    %v2988 = vadd.f32 %v2798, %v2987
    %2989 = vmatprep.mubr.f32.mxu0 0.0
    %v2990 = vand.u32 %v1139, 4294901760
    %v2991 = vsub.f32 %v1139, %v2990
    %v2992 = vand.u32 %v2991, 4294901760
    %2993 = vmatmul.mubr.f32.gmra.mrb[0].mxu0 %v2992
    %v2994 = vpop.f32.mrb[0].mxu0
    %v2995 = vadd.f32 %v2804, %v2994
    %v2996 = vpop.f32.mrb[0].mxu0
    %v2997 = vadd.f32 %v2806, %v2996
    %2998 = vmatprep.mubr.f32.mxu0 0.0
    %v2999 = vand.u32 %v1142, 4294901760
    %v3000 = vsub.f32 %v1142, %v2999
    %v3001 = vand.u32 %v3000, 4294901760
    %3002 = vmatmul.mubr.f32.gmra.mrb[0].mxu0 %v3001
    %v3003 = vpop.f32.mrb[0].mxu0
    %v3004 = vadd.f32 %v2812, %v3003
    %v3005 = vpop.f32.mrb[0].mxu0
    %v3006 = vadd.f32 %v2814, %v3005
    %3007 = vmatprep.mubr.f32.mxu0 0.0
    %v3008 = vand.u32 %v1145, 4294901760
    %v3009 = vsub.f32 %v1145, %v3008
    %v3010 = vand.u32 %v3009, 4294901760
    %3011 = vmatmul.mubr.f32.gmra.mrb[0].mxu0 %v3010
    %v3012 = vpop.f32.mrb[0].mxu0
    %v3013 = vadd.f32 %v2820, %v3012
    %v3014 = vpop.f32.mrb[0].mxu0
    %v3015 = vadd.f32 %v2822, %v3014
    %3016 = vdwg.mxu0
    %v3017 = vand.u32 %v1005, 4294901760
    %v3018 = vsub.f32 %v1005, %v3017
    %v3019 = vand.u32 %v3018, 4294901760
    %3020 = vmatprep.subr.mxu0 %v3019
    %v3021 = vand.u32 %v1004, 4294901760
    %v3022 = vsub.f32 %v1004, %v3021
    %v3023 = vand.u32 %v3022, 4294901760
    %3024 = vmatpush1.msra.mxu0 %v3023
    %3025 = vmatprep.subr.mxu0 0.0
    %3026 = vmatpush1.msra.mxu0 0.0
    %3027 = vmatprep.subr.mxu0 0.0
    %3028 = vmatpush1.msra.mxu0 0.0
    %3029 = vmatprep.subr.mxu0 0.0
    %3030 = vmatpush1.msra.mxu0 0.0
    %3031 = vmatprep.subr.mxu0 0.0
    %3032 = vmatpush1.msra.mxu0 0.0
    %3033 = vmatprep.subr.mxu0 0.0
    %3034 = vmatpush1.msra.mxu0 0.0
    %3035 = vmatprep.subr.mxu0 0.0
    %3036 = vmatpush1.msra.mxu0 0.0
    %3037 = vmatprep.subr.mxu0 0.0
    %3038 = vmatpush1.msra.mxu0 0.0
    %3039 = vmatprep.subr.mxu0 0.0
    %3040 = vmatpush1.msra.mxu0 0.0
    %3041 = vmatprep.subr.mxu0 0.0
    %3042 = vmatpush1.msra.mxu0 0.0
    %3043 = vmatprep.subr.mxu0 0.0
    %3044 = vmatpush1.msra.mxu0 0.0
    %3045 = vmatprep.subr.mxu0 0.0
    %3046 = vmatpush1.msra.mxu0 0.0
    %3047 = vmatprep.subr.mxu0 0.0
    %3048 = vmatpush1.msra.mxu0 0.0
    %3049 = vmatprep.subr.mxu0 0.0
    %3050 = vmatpush1.msra.mxu0 0.0
    %3051 = vmatprep.subr.mxu0 0.0
    %3052 = vmatpush1.msra.mxu0 0.0
    %3053 = vmatprep.subr.mxu0 0.0
    %3054 = vmatpush1.msra.mxu0 0.0
    %3055 = vmatprep.subr.mxu0 0.0
    %3056 = vmatpush1.msra.mxu0 0.0
    %3057 = vmatprep.subr.mxu0 0.0
    %3058 = vmatpush1.msra.mxu0 0.0
    %3059 = vmatprep.subr.mxu0 0.0
    %3060 = vmatpush1.msra.mxu0 0.0
    %3061 = vmatprep.subr.mxu0 0.0
    %3062 = vmatpush1.msra.mxu0 0.0
    %3063 = vmatprep.subr.mxu0 0.0
    %3064 = vmatpush1.msra.mxu0 0.0
    %3065 = vmatprep.subr.mxu0 0.0
    %3066 = vmatpush1.msra.mxu0 0.0
    %3067 = vmatprep.subr.mxu0 0.0
    %3068 = vmatpush1.msra.mxu0 0.0
    %3069 = vmatprep.subr.mxu0 0.0
    %3070 = vmatpush1.msra.mxu0 0.0
    %3071 = vmatprep.subr.mxu0 0.0
    %3072 = vmatpush1.msra.mxu0 0.0
    %3073 = vmatprep.subr.mxu0 0.0
    %3074 = vmatpush1.msra.mxu0 0.0
    %3075 = vmatprep.subr.mxu0 0.0
    %3076 = vmatpush1.msra.mxu0 0.0
    %3077 = vmatprep.subr.mxu0 0.0
    %3078 = vmatpush1.msra.mxu0 0.0
    %3079 = vmatprep.subr.mxu0 0.0
    %3080 = vmatpush1.msra.mxu0 0.0
    %3081 = vmatprep.subr.mxu0 0.0
    %3082 = vmatpush1.msra.mxu0 0.0
    %3083 = vmatprep.subr.mxu0 0.0
    %3084 = vmatpush1.msra.mxu0 0.0
    %3085 = vmatprep.subr.mxu0 0.0
    %3086 = vmatpush1.msra.mxu0 0.0
    %3087 = vmatprep.mubr.f32.mxu0 0.0
    %v3088 = vand.u32 %v1106, 4294901760
    %3089 = vmatmul.mubr.f32.gmra.mrb[0].mxu0 %v3088
    %v3090 = vpop.f32.mrb[0].mxu0
    %v3091 = vadd.f32 %v2896, %v3090
    %v3092 = vpop.f32.mrb[0].mxu0
    %v3093 = vadd.f32 %v2898, %v3092
    %3094 = vmatprep.mubr.f32.mxu0 0.0
    %v3095 = vand.u32 %v1109, 4294901760
    %3096 = vmatmul.mubr.f32.gmra.mrb[0].mxu0 %v3095
    %v3097 = vpop.f32.mrb[0].mxu0
    %v3098 = vadd.f32 %v2905, %v3097
    %v3099 = vpop.f32.mrb[0].mxu0
    %v3100 = vadd.f32 %v2907, %v3099
    %3101 = vmatprep.mubr.f32.mxu0 0.0
    %v3102 = vand.u32 %v1112, 4294901760
    %3103 = vmatmul.mubr.f32.gmra.mrb[0].mxu0 %v3102
    %v3104 = vpop.f32.mrb[0].mxu0
    %v3105 = vadd.f32 %v2914, %v3104
    %v3106 = vpop.f32.mrb[0].mxu0
    %v3107 = vadd.f32 %v2916, %v3106
    %3108 = vmatprep.mubr.f32.mxu0 0.0
    %v3109 = vand.u32 %v1115, 4294901760
    %3110 = vmatmul.mubr.f32.gmra.mrb[0].mxu0 %v3109
    %v3111 = vpop.f32.mrb[0].mxu0
    %v3112 = vadd.f32 %v2923, %v3111
    %v3113 = vpop.f32.mrb[0].mxu0
    %v3114 = vadd.f32 %v2925, %v3113
    %3115 = vmatprep.mubr.f32.mxu0 0.0
    %v3116 = vand.u32 %v1118, 4294901760
    %3117 = vmatmul.mubr.f32.gmra.mrb[0].mxu0 %v3116
    %v3118 = vpop.f32.mrb[0].mxu0
    %v3119 = vadd.f32 %v2932, %v3118
    %v3120 = vpop.f32.mrb[0].mxu0
    %v3121 = vadd.f32 %v2934, %v3120
    %3122 = vmatprep.mubr.f32.mxu0 0.0
    %v3123 = vand.u32 %v1121, 4294901760
    %3124 = vmatmul.mubr.f32.gmra.mrb[0].mxu0 %v3123
    %v3125 = vpop.f32.mrb[0].mxu0
    %v3126 = vadd.f32 %v2941, %v3125
    %v3127 = vpop.f32.mrb[0].mxu0
    %v3128 = vadd.f32 %v2943, %v3127
    %3129 = vmatprep.mubr.f32.mxu0 0.0
    %v3130 = vand.u32 %v1124, 4294901760
    %3131 = vmatmul.mubr.f32.gmra.mrb[0].mxu0 %v3130
    %v3132 = vpop.f32.mrb[0].mxu0
    %v3133 = vadd.f32 %v2950, %v3132
    %v3134 = vpop.f32.mrb[0].mxu0
    %v3135 = vadd.f32 %v2952, %v3134
    %3136 = vmatprep.mubr.f32.mxu0 0.0
    %v3137 = vand.u32 %v1127, 4294901760
    %3138 = vmatmul.mubr.f32.gmra.mrb[0].mxu0 %v3137
    %v3139 = vpop.f32.mrb[0].mxu0
    %v3140 = vadd.f32 %v2959, %v3139
    %v3141 = vpop.f32.mrb[0].mxu0
    %v3142 = vadd.f32 %v2961, %v3141
    %3143 = vmatprep.mubr.f32.mxu0 0.0
    %v3144 = vand.u32 %v1130, 4294901760
    %3145 = vmatmul.mubr.f32.gmra.mrb[0].mxu0 %v3144
    %v3146 = vpop.f32.mrb[0].mxu0
    %v3147 = vadd.f32 %v2968, %v3146
    %v3148 = vpop.f32.mrb[0].mxu0
    %v3149 = vadd.f32 %v2970, %v3148
    %3150 = vmatprep.mubr.f32.mxu0 0.0
    %v3151 = vand.u32 %v1133, 4294901760
    %3152 = vmatmul.mubr.f32.gmra.mrb[0].mxu0 %v3151
    %v3153 = vpop.f32.mrb[0].mxu0
    %v3154 = vadd.f32 %v2977, %v3153
    %v3155 = vpop.f32.mrb[0].mxu0
    %v3156 = vadd.f32 %v2979, %v3155
    %3157 = vmatprep.mubr.f32.mxu0 0.0
    %v3158 = vand.u32 %v1136, 4294901760
    %3159 = vmatmul.mubr.f32.gmra.mrb[0].mxu0 %v3158
    %v3160 = vpop.f32.mrb[0].mxu0
    %v3161 = vadd.f32 %v2986, %v3160
    %v3162 = vpop.f32.mrb[0].mxu0
    %v3163 = vadd.f32 %v2988, %v3162
    %3164 = vmatprep.mubr.f32.mxu0 0.0
    %v3165 = vand.u32 %v1139, 4294901760
    %3166 = vmatmul.mubr.f32.gmra.mrb[0].mxu0 %v3165
    %v3167 = vpop.f32.mrb[0].mxu0
    %v3168 = vadd.f32 %v2995, %v3167
    %v3169 = vpop.f32.mrb[0].mxu0
    %v3170 = vadd.f32 %v2997, %v3169
    %3171 = vmatprep.mubr.f32.mxu0 0.0
    %v3172 = vand.u32 %v1142, 4294901760
    %3173 = vmatmul.mubr.f32.gmra.mrb[0].mxu0 %v3172
    %v3174 = vpop.f32.mrb[0].mxu0
    %v3175 = vadd.f32 %v3004, %v3174
    %v3176 = vpop.f32.mrb[0].mxu0
    %v3177 = vadd.f32 %v3006, %v3176
    %3178 = vmatprep.mubr.f32.mxu0 0.0
    %v3179 = vand.u32 %v1145, 4294901760
    %3180 = vmatmul.mubr.f32.gmra.mrb[0].mxu0 %v3179
    %v3181 = vpop.f32.mrb[0].mxu0
    %v3182 = vadd.f32 %v3013, %v3181
    %v3183 = vpop.f32.mrb[0].mxu0
    %v3184 = vadd.f32 %v3015, %v3183
    %3185 = vdwg.mxu0
    %v3186 = vand.u32 %v1005, 4294901760
    %3187 = vmatprep.subr.mxu0 %v3186
    %v3188 = vand.u32 %v1004, 4294901760
    %3189 = vmatpush1.msra.mxu0 %v3188
    %3190 = vmatprep.subr.mxu0 0.0
    %3191 = vmatpush1.msra.mxu0 0.0
    %3192 = vmatprep.subr.mxu0 0.0
    %3193 = vmatpush1.msra.mxu0 0.0
    %3194 = vmatprep.subr.mxu0 0.0
    %3195 = vmatpush1.msra.mxu0 0.0
    %3196 = vmatprep.subr.mxu0 0.0
    %3197 = vmatpush1.msra.mxu0 0.0
    %3198 = vmatprep.subr.mxu0 0.0
    %3199 = vmatpush1.msra.mxu0 0.0
    %3200 = vmatprep.subr.mxu0 0.0
    %3201 = vmatpush1.msra.mxu0 0.0
    %3202 = vmatprep.subr.mxu0 0.0
    %3203 = vmatpush1.msra.mxu0 0.0
    %3204 = vmatprep.subr.mxu0 0.0
    %3205 = vmatpush1.msra.mxu0 0.0
    %3206 = vmatprep.subr.mxu0 0.0
    %3207 = vmatpush1.msra.mxu0 0.0
    %3208 = vmatprep.subr.mxu0 0.0
    %3209 = vmatpush1.msra.mxu0 0.0
    %3210 = vmatprep.subr.mxu0 0.0
    %3211 = vmatpush1.msra.mxu0 0.0
    %3212 = vmatprep.subr.mxu0 0.0
    %3213 = vmatpush1.msra.mxu0 0.0
    %3214 = vmatprep.subr.mxu0 0.0
    %3215 = vmatpush1.msra.mxu0 0.0
    %3216 = vmatprep.subr.mxu0 0.0
    %3217 = vmatpush1.msra.mxu0 0.0
    %3218 = vmatprep.subr.mxu0 0.0
    %3219 = vmatpush1.msra.mxu0 0.0
    %3220 = vmatprep.subr.mxu0 0.0
    %3221 = vmatpush1.msra.mxu0 0.0
    %3222 = vmatprep.subr.mxu0 0.0
    %3223 = vmatpush1.msra.mxu0 0.0
    %3224 = vmatprep.subr.mxu0 0.0
    %3225 = vmatpush1.msra.mxu0 0.0
    %3226 = vmatprep.subr.mxu0 0.0
    %3227 = vmatpush1.msra.mxu0 0.0
    %3228 = vmatprep.subr.mxu0 0.0
    %3229 = vmatpush1.msra.mxu0 0.0
    %3230 = vmatprep.subr.mxu0 0.0
    %3231 = vmatpush1.msra.mxu0 0.0
    %3232 = vmatprep.subr.mxu0 0.0
    %3233 = vmatpush1.msra.mxu0 0.0
    %3234 = vmatprep.subr.mxu0 0.0
    %3235 = vmatpush1.msra.mxu0 0.0
    %3236 = vmatprep.subr.mxu0 0.0
    %3237 = vmatpush1.msra.mxu0 0.0
    %3238 = vmatprep.subr.mxu0 0.0
    %3239 = vmatpush1.msra.mxu0 0.0
    %3240 = vmatprep.subr.mxu0 0.0
    %3241 = vmatpush1.msra.mxu0 0.0
    %3242 = vmatprep.subr.mxu0 0.0
    %3243 = vmatpush1.msra.mxu0 0.0
    %3244 = vmatprep.subr.mxu0 0.0
    %3245 = vmatpush1.msra.mxu0 0.0
    %3246 = vmatprep.subr.mxu0 0.0
    %3247 = vmatpush1.msra.mxu0 0.0
    %3248 = vmatprep.subr.mxu0 0.0
    %3249 = vmatpush1.msra.mxu0 0.0
    %3250 = vmatprep.subr.mxu0 0.0
    %3251 = vmatpush1.msra.mxu0 0.0
    %3252 = vmatprep.mubr.f32.mxu0 0.0
    %v3253 = vand.u32 %v1106, 4294901760
    %3254 = vmatmul.mubr.f32.gmra.mrb[0].mxu0 %v3253
    %v3255 = vpop.f32.mrb[0].mxu0
    %v3256 = vadd.f32 %v3091, %v3255
    %v3257 = vpop.f32.mrb[0].mxu0
    %v3258 = vadd.f32 %v3093, %v3257
    %3259 = vmatprep.mubr.f32.mxu0 0.0
    %v3260 = vand.u32 %v1109, 4294901760
    %3261 = vmatmul.mubr.f32.gmra.mrb[0].mxu0 %v3260
    %v3262 = vpop.f32.mrb[0].mxu0
    %v3263 = vadd.f32 %v3098, %v3262
    %v3264 = vpop.f32.mrb[0].mxu0
    %v3265 = vadd.f32 %v3100, %v3264
    %3266 = vmatprep.mubr.f32.mxu0 0.0
    %v3267 = vand.u32 %v1112, 4294901760
    %3268 = vmatmul.mubr.f32.gmra.mrb[0].mxu0 %v3267
    %v3269 = vpop.f32.mrb[0].mxu0
    %v3270 = vadd.f32 %v3105, %v3269
    %v3271 = vpop.f32.mrb[0].mxu0
    %v3272 = vadd.f32 %v3107, %v3271
    %3273 = vmatprep.mubr.f32.mxu0 0.0
    %v3274 = vand.u32 %v1115, 4294901760
    %3275 = vmatmul.mubr.f32.gmra.mrb[0].mxu0 %v3274
    %v3276 = vpop.f32.mrb[0].mxu0
    %v3277 = vadd.f32 %v3112, %v3276
    %v3278 = vpop.f32.mrb[0].mxu0
    %v3279 = vadd.f32 %v3114, %v3278
    %3280 = vmatprep.mubr.f32.mxu0 0.0
    %v3281 = vand.u32 %v1118, 4294901760
    %3282 = vmatmul.mubr.f32.gmra.mrb[0].mxu0 %v3281
    %v3283 = vpop.f32.mrb[0].mxu0
    %v3284 = vadd.f32 %v3119, %v3283
    %v3285 = vpop.f32.mrb[0].mxu0
    %v3286 = vadd.f32 %v3121, %v3285
    %3287 = vmatprep.mubr.f32.mxu0 0.0
    %v3288 = vand.u32 %v1121, 4294901760
    %3289 = vmatmul.mubr.f32.gmra.mrb[0].mxu0 %v3288
    %v3290 = vpop.f32.mrb[0].mxu0
    %v3291 = vadd.f32 %v3126, %v3290
    %v3292 = vpop.f32.mrb[0].mxu0
    %v3293 = vadd.f32 %v3128, %v3292
    %3294 = vmatprep.mubr.f32.mxu0 0.0
    %v3295 = vand.u32 %v1124, 4294901760
    %3296 = vmatmul.mubr.f32.gmra.mrb[0].mxu0 %v3295
    %v3297 = vpop.f32.mrb[0].mxu0
    %v3298 = vadd.f32 %v3133, %v3297
    %v3299 = vpop.f32.mrb[0].mxu0
    %v3300 = vadd.f32 %v3135, %v3299
    %3301 = vmatprep.mubr.f32.mxu0 0.0
    %v3302 = vand.u32 %v1127, 4294901760
    %3303 = vmatmul.mubr.f32.gmra.mrb[0].mxu0 %v3302
    %v3304 = vpop.f32.mrb[0].mxu0
    %v3305 = vadd.f32 %v3140, %v3304
    %v3306 = vpop.f32.mrb[0].mxu0
    %v3307 = vadd.f32 %v3142, %v3306
    %3308 = vmatprep.mubr.f32.mxu0 0.0
    %v3309 = vand.u32 %v1130, 4294901760
    %3310 = vmatmul.mubr.f32.gmra.mrb[0].mxu0 %v3309
    %v3311 = vpop.f32.mrb[0].mxu0
    %v3312 = vadd.f32 %v3147, %v3311
    %v3313 = vpop.f32.mrb[0].mxu0
    %v3314 = vadd.f32 %v3149, %v3313
    %3315 = vmatprep.mubr.f32.mxu0 0.0
    %v3316 = vand.u32 %v1133, 4294901760
    %3317 = vmatmul.mubr.f32.gmra.mrb[0].mxu0 %v3316
    %v3318 = vpop.f32.mrb[0].mxu0
    %v3319 = vadd.f32 %v3154, %v3318
    %v3320 = vpop.f32.mrb[0].mxu0
    %v3321 = vadd.f32 %v3156, %v3320
    %3322 = vmatprep.mubr.f32.mxu0 0.0
    %v3323 = vand.u32 %v1136, 4294901760
    %3324 = vmatmul.mubr.f32.gmra.mrb[0].mxu0 %v3323
    %v3325 = vpop.f32.mrb[0].mxu0
    %v3326 = vadd.f32 %v3161, %v3325
    %v3327 = vpop.f32.mrb[0].mxu0
    %v3328 = vadd.f32 %v3163, %v3327
    %3329 = vmatprep.mubr.f32.mxu0 0.0
    %v3330 = vand.u32 %v1139, 4294901760
    %3331 = vmatmul.mubr.f32.gmra.mrb[0].mxu0 %v3330
    %v3332 = vpop.f32.mrb[0].mxu0
    %v3333 = vadd.f32 %v3168, %v3332
    %v3334 = vpop.f32.mrb[0].mxu0
    %v3335 = vadd.f32 %v3170, %v3334
    %3336 = vmatprep.mubr.f32.mxu0 0.0
    %v3337 = vand.u32 %v1142, 4294901760
    %3338 = vmatmul.mubr.f32.gmra.mrb[0].mxu0 %v3337
    %v3339 = vpop.f32.mrb[0].mxu0
    %v3340 = vadd.f32 %v3175, %v3339
    %v3341 = vpop.f32.mrb[0].mxu0
    %v3342 = vadd.f32 %v3177, %v3341
    %3343 = vmatprep.mubr.f32.mxu0 0.0
    %v3344 = vand.u32 %v1145, 4294901760
    %3345 = vmatmul.mubr.f32.gmra.mrb[0].mxu0 %v3344
    %v3346 = vpop.f32.mrb[0].mxu0
    %v3347 = vadd.f32 %v3182, %v3346
    %v3348 = vpop.f32.mrb[0].mxu0
    %v3349 = vadd.f32 %v3184, %v3348
    %3350 = vdwg.mxu0
    %3351 = vst [vmem:[#allocation2] sm:$0xff] %v2154
    %3352 = vst [vmem:[#allocation2 + $0x8] sm:$0xff] %v2156
    %3353 = vst [vmem:[#allocation2 + $0x10] sm:$0xff] %v3256
    %3354 = vst [vmem:[#allocation2 + $0x18] sm:$0xff] %v3258
    %3355 = vst [vmem:[#allocation2 + $0x20] sm:$0xff] %v2161
    %3356 = vst [vmem:[#allocation2 + $0x28] sm:$0xff] %v2163
    %3357 = vst [vmem:[#allocation2 + $0x30] sm:$0xff] %v3263
    %3358 = vst [vmem:[#allocation2 + $0x38] sm:$0xff] %v3265
    %3359 = vst [vmem:[#allocation2 + $0x40] sm:$0xff] %v2168
    %3360 = vst [vmem:[#allocation2 + $0x48] sm:$0xff] %v2170
    %3361 = vst [vmem:[#allocation2 + $0x50] sm:$0xff] %v3270
    %3362 = vst [vmem:[#allocation2 + $0x58] sm:$0xff] %v3272
    %3363 = vst [vmem:[#allocation2 + $0x60] sm:$0xff] %v2175
    %3364 = vst [vmem:[#allocation2 + $0x68] sm:$0xff] %v2177
    %3365 = vst [vmem:[#allocation2 + $0x70] sm:$0xff] %v3277
    %3366 = vst [vmem:[#allocation2 + $0x78] sm:$0xff] %v3279
    %3367 = vst [vmem:[#allocation2 + $0x80] sm:$0xff] %v2182
    %3368 = vst [vmem:[#allocation2 + $0x88] sm:$0xff] %v2184
    %3369 = vst [vmem:[#allocation2 + $0x90] sm:$0xff] %v3284
    %3370 = vst [vmem:[#allocation2 + $0x98] sm:$0xff] %v3286
    %3371 = vst [vmem:[#allocation2 + $0xa0] sm:$0xff] %v2189
    %3372 = vst [vmem:[#allocation2 + $0xa8] sm:$0xff] %v2191
    %3373 = vst [vmem:[#allocation2 + $0xb0] sm:$0xff] %v3291
    %3374 = vst [vmem:[#allocation2 + $0xb8] sm:$0xff] %v3293
    %3375 = vst [vmem:[#allocation2 + $0xc0] sm:$0xff] %v2196
    %3376 = vst [vmem:[#allocation2 + $0xc8] sm:$0xff] %v2198
    %3377 = vst [vmem:[#allocation2 + $0xd0] sm:$0xff] %v3298
    %3378 = vst [vmem:[#allocation2 + $0xd8] sm:$0xff] %v3300
    %3379 = vst [vmem:[#allocation2 + $0xe0] sm:$0xff] %v2203
    %3380 = vst [vmem:[#allocation2 + $0xe8] sm:$0xff] %v2205
    %3381 = vst [vmem:[#allocation2 + $0xf0] sm:$0xff] %v3305
    %3382 = vst [vmem:[#allocation2 + $0xf8] sm:$0xff] %v3307
    %3383 = vst [vmem:[#allocation2 + $0x100] sm:$0xff] %v2210
    %3384 = vst [vmem:[#allocation2 + $0x108] sm:$0xff] %v2212
    %3385 = vst [vmem:[#allocation2 + $0x110] sm:$0xff] %v3312
    %3386 = vst [vmem:[#allocation2 + $0x118] sm:$0xff] %v3314
    %3387 = vst [vmem:[#allocation2 + $0x120] sm:$0xff] %v2217
    %3388 = vst [vmem:[#allocation2 + $0x128] sm:$0xff] %v2219
    %3389 = vst [vmem:[#allocation2 + $0x130] sm:$0xff] %v3319
    %3390 = vst [vmem:[#allocation2 + $0x138] sm:$0xff] %v3321
    %3391 = vst [vmem:[#allocation2 + $0x140] sm:$0xff] %v2224
    %3392 = vst [vmem:[#allocation2 + $0x148] sm:$0xff] %v2226
    %3393 = vst [vmem:[#allocation2 + $0x150] sm:$0xff] %v3326
    %3394 = vst [vmem:[#allocation2 + $0x158] sm:$0xff] %v3328
    %3395 = vst [vmem:[#allocation2 + $0x160] sm:$0xff] %v2231
    %3396 = vst [vmem:[#allocation2 + $0x168] sm:$0xff] %v2233
    %3397 = vst [vmem:[#allocation2 + $0x170] sm:$0xff] %v3333
    %3398 = vst [vmem:[#allocation2 + $0x178] sm:$0xff] %v3335
    %3399 = vst [vmem:[#allocation2 + $0x180] sm:$0xff] %v2238
    %3400 = vst [vmem:[#allocation2 + $0x188] sm:$0xff] %v2240
    %3401 = vst [vmem:[#allocation2 + $0x190] sm:$0xff] %v3340
    %3402 = vst [vmem:[#allocation2 + $0x198] sm:$0xff] %v3342
    %3403 = vst [vmem:[#allocation2 + $0x1a0] sm:$0xff] %v2245
    %3404 = vst [vmem:[#allocation2 + $0x1a8] sm:$0xff] %v2247
    %3405 = vst [vmem:[#allocation2 + $0x1b0] sm:$0xff] %v3347
    %3406 = vst [vmem:[#allocation2 + $0x1b8] sm:$0xff] %v3349
    // Predicated region
    $region22: #{model_forward.1} parent=1 // pred_check
      _
    $region23: #{model_forward.1} parent=1 // pred_check_branch
      %3408 = sbr.rel (0) target = $region25
    $region24: #{model_forward.1} parent=1 // pred_region
      // Predicated region
      $region26: #{model_forward.1} parent=24 // pred_check
        _
      $region27: #{model_forward.1} parent=24 // pred_check_branch
        %3410 = sbr.rel (0) target = $region29
      $region28: #{model_forward.1} parent=24 // pred_region
        // Predicated region
        $region30: #{model_forward.1} parent=28 // pred_check
          _
        $region31: #{model_forward.1} parent=28 // pred_check_branch
          %3412 = sbr.rel (0) target = $region33
        $region32: #{model_forward.1} parent=28 // pred_region
          // Predicated region
          $region45: #{model_forward.1} parent=32 // pred_check
            _
          $region46: #{model_forward.1} parent=32 // pred_check_branch
            %3453 = sbr.rel (0) target = $region48
          $region47: #{model_forward.1} parent=32 // pred_region
            loop: start=0, step=1, limit=1
            $region49: #{model_forward.1} parent=47 // loop_pre_header
              _
            $region50: #{model_forward.1} parent=47 // loop_header
              %s3455 = sphi 0, %s3459
              %p3456 = scmp.ge.s32.totalorder %s3455, 1
              %s3460 = sphi [#allocation2], [#allocation2]
              %s3461 = sphi %s5, %s5
            $region51: #{model_forward.1} parent=47 // loop_header_branch
              %3458 = sbr.rel (%p3456) target = $region55
            $region52: #{model_forward.1} parent=47 // loop_body
              %v3462 = vld [vmem:[%s3460] sm:$0xff]
              %3463 = vst [vmem:[%s3461] sm:$0xff] %v3462
              %v3464 = vld [vmem:[%s3460 + $0x20] sm:$0xff]
              %3465 = vst [vmem:[%s3461 + $0x8] sm:$0xff] %v3464
              %v3466 = vld [vmem:[%s3460 + $0x40] sm:$0xff]
              %3467 = vst [vmem:[%s3461 + $0x10] sm:$0xff] %v3466
              %v3468 = vld [vmem:[%s3460 + $0x60] sm:$0xff]
              %3469 = vst [vmem:[%s3461 + $0x18] sm:$0xff] %v3468
              %v3470 = vld [vmem:[%s3460 + $0x80] sm:$0xff]
              %3471 = vst [vmem:[%s3461 + $0x20] sm:$0xff] %v3470
              %v3472 = vld [vmem:[%s3460 + $0xa0] sm:$0xff]
              %3473 = vst [vmem:[%s3461 + $0x28] sm:$0xff] %v3472
              %v3474 = vld [vmem:[%s3460 + $0xc0] sm:$0xff]
              %3475 = vst [vmem:[%s3461 + $0x30] sm:$0xff] %v3474
              %v3476 = vld [vmem:[%s3460 + $0xe0] sm:$0xff]
              %3477 = vst [vmem:[%s3461 + $0x38] sm:$0xff] %v3476
              %v3478 = vld [vmem:[%s3460 + $0x100] sm:$0xff]
              %3479 = vst [vmem:[%s3461 + $0x40] sm:$0xff] %v3478
              %v3480 = vld [vmem:[%s3460 + $0x120] sm:$0xff]
              %3481 = vst [vmem:[%s3461 + $0x48] sm:$0xff] %v3480
              %v3482 = vld [vmem:[%s3460 + $0x140] sm:$0xff]
              %3483 = vst [vmem:[%s3461 + $0x50] sm:$0xff] %v3482
              %v3484 = vld [vmem:[%s3460 + $0x160] sm:$0xff]
              %3485 = vst [vmem:[%s3461 + $0x58] sm:$0xff] %v3484
              %v3486 = vld [vmem:[%s3460 + $0x180] sm:$0xff]
              %3487 = vst [vmem:[%s3461 + $0x60] sm:$0xff] %v3486
              %v3488 = vld [vmem:[%s3460 + $0x1a0] sm:$0xff]
              %3489 = vst [vmem:[%s3461 + $0x68] sm:$0xff] %v3488
            $region53: #{model_forward.1} parent=47 // loop_footer
              %s3459 = sadd.s32 1, %s3455
            $region54: #{model_forward.1} parent=47 // loop_footer_branch
              %3454 = sbr.rel target = $region50
            $region55: #{model_forward.1} parent=47 // loop_exit
              _
          $region48: #{model_forward.1} parent=32 // pred_fallthru
            _
          // Predicated region
          $region56: #{model_forward.1} parent=32 // pred_check
            _
          $region57: #{model_forward.1} parent=32 // pred_check_branch
            %3491 = sbr.rel target = $region59
          $region58: #{model_forward.1} parent=32 // pred_region
            _
          $region59: #{model_forward.1} parent=32 // pred_fallthru
            _
        $region33: #{model_forward.1} parent=28 // pred_fallthru
          _
        // Predicated region
        $region34: #{model_forward.1} parent=28 // pred_check
          _
        $region35: #{model_forward.1} parent=28 // pred_check_branch
          %3414 = sbr.rel target = $region37
        $region36: #{model_forward.1} parent=28 // pred_region
          loop: start=0, step=1, limit=1
          $region38: #{model_forward.1} parent=36 // loop_pre_header
            _
          $region39: #{model_forward.1} parent=36 // loop_header
            %s3417 = sphi 0, %s3421
            %p3418 = scmp.ge.s32.totalorder %s3417, 1
            %s3422 = sphi [#allocation2], [#allocation2]
            %s3423 = sphi %s5, %s5
          $region40: #{model_forward.1} parent=36 // loop_header_branch
            %3420 = sbr.rel (%p3418) target = $region44
          $region41: #{model_forward.1} parent=36 // loop_body
            %v3424 = vld [vmem:[%s3422] sm:$0xff]
            %3425 = vst [vmem:[%s3423] sm:$0xff] %v3424
            %v3426 = vld [vmem:[%s3422 + $0x20] sm:$0xff]
            %3427 = vst [vmem:[%s3423 + $0x8] sm:$0xff] %v3426
            %v3428 = vld [vmem:[%s3422 + $0x40] sm:$0xff]
            %3429 = vst [vmem:[%s3423 + $0x10] sm:$0xff] %v3428
            %v3430 = vld [vmem:[%s3422 + $0x60] sm:$0xff]
            %3431 = vst [vmem:[%s3423 + $0x18] sm:$0xff] %v3430
            %v3432 = vld [vmem:[%s3422 + $0x80] sm:$0xff]
            %3433 = vst [vmem:[%s3423 + $0x20] sm:$0xff] %v3432
            %v3434 = vld [vmem:[%s3422 + $0xa0] sm:$0xff]
            %3435 = vst [vmem:[%s3423 + $0x28] sm:$0xff] %v3434
            %v3436 = vld [vmem:[%s3422 + $0xc0] sm:$0xff]
            %3437 = vst [vmem:[%s3423 + $0x30] sm:$0xff] %v3436
            %v3438 = vld [vmem:[%s3422 + $0xe0] sm:$0xff]
            %3439 = vst [vmem:[%s3423 + $0x38] sm:$0xff] %v3438
            %v3440 = vld [vmem:[%s3422 + $0x100] sm:$0xff]
            %3441 = vst [vmem:[%s3423 + $0x40] sm:$0xff] %v3440
            %v3442 = vld [vmem:[%s3422 + $0x120] sm:$0xff]
            %3443 = vst [vmem:[%s3423 + $0x48] sm:$0xff] %v3442
            %v3444 = vld [vmem:[%s3422 + $0x140] sm:$0xff]
            %3445 = vst [vmem:[%s3423 + $0x50] sm:$0xff] %v3444
            %v3446 = vld [vmem:[%s3422 + $0x160] sm:$0xff]
            %3447 = vst [vmem:[%s3423 + $0x58] sm:$0xff] %v3446
            %v3448 = vld [vmem:[%s3422 + $0x180] sm:$0xff]
            %3449 = vst [vmem:[%s3423 + $0x60] sm:$0xff] %v3448
            %v3450 = vld [vmem:[%s3422 + $0x1a0] sm:$0xff]
            %3451 = vst [vmem:[%s3423 + $0x68] sm:$0xff] %v3450
          $region42: #{model_forward.1} parent=36 // loop_footer
            %s3421 = sadd.s32 1, %s3417
          $region43: #{model_forward.1} parent=36 // loop_footer_branch
            %3416 = sbr.rel target = $region39
          $region44: #{model_forward.1} parent=36 // loop_exit
            _
        $region37: #{model_forward.1} parent=28 // pred_fallthru
          _
      $region29: #{model_forward.1} parent=24 // pred_fallthru
        _
      %3492 = vnop
    $region25: #{model_forward.1} parent=1 // pred_fallthru
      _
    // Predicated region
    $region60: #{model_forward.1} parent=1 // pred_check
      _
    $region61: #{model_forward.1} parent=1 // pred_check_branch
      %3494 = sbr.rel (0) target = $region63
    $region62: #{model_forward.1} parent=1 // pred_region
      _
    $region63: #{model_forward.1} parent=1 // pred_fallthru
      _

</llo_original>
